<compile_context>
chip_gen: v7x
topology: tpu7x:2x2x1
jax: 0.10.0
libtpu: 0.0.40
codegen_flags: <defaults>
</compile_context>

<pallas_src>
import math

import jax
import jax.numpy as jnp
import numpy as np
from jax.experimental import pallas as pl
from jax.experimental.pallas import tpu as pltpu


# -----------------------------------------------------------------------------
# Kernel: runs the full 2-layer LSTM over all timesteps + FC head + sigmoid.
# -----------------------------------------------------------------------------
def _lstm_fc_kernel(x_ref,       # (B, T)    full input sequence
                    wih0_ref,    # (1, 4H)   layer-0 input weights  (gate order i,f,g,o)
                    whh0_ref,    # (H, 4H)   layer-0 recurrent weights
                    b0_ref,      # (1, 4H)   layer-0 bias (b_ih + b_hh)
                    wih1_ref,    # (H, 4H)   layer-1 input weights
                    whh1_ref,    # (H, 4H)   layer-1 recurrent weights
                    b1_ref,      # (1, 4H)   layer-1 bias
                    wfc_ref,     # (1, H)    FC weight row
                    bfc_ref,     # (1, 1)    FC bias
                    out_ref):    # (B, 1)    sigmoid(logits)
    B, T = x_ref.shape
    H = wfc_ref.shape[1]

    x = x_ref[...]
    wih0 = wih0_ref[...]
    whh0 = whh0_ref[...]
    b0 = b0_ref[...]
    wih1 = wih1_ref[...]
    whh1 = whh1_ref[...]
    b1 = b1_ref[...]
    wfc = wfc_ref[...]
    bfc = bfc_ref[...]

    # Lane mask selecting the g-gate columns [2H, 3H) of a (B, 4H) gate tile.
    # Built once (hoisted); broadcast_in_dim is not CSE'd by JAX.
    lane = jax.lax.broadcasted_iota(jnp.int32, (B, 4 * H), 1)
    is_g = jnp.logical_and(lane >= 2 * H, lane < 3 * H)

    def activate(gates):
        # sigmoid on i/f/o lanes, tanh on g lanes: two full-vreg EUP passes
        # + one VPU select; no per-gate lane slicing for the nonlinearity.
        return jnp.where(is_g, jnp.tanh(gates), jax.nn.sigmoid(gates))

    def split_gates(a):
        return a[:, 0:H], a[:, H:2 * H], a[:, 2 * H:3 * H], a[:, 3 * H:4 * H]

    zeros = jnp.zeros((B, H), jnp.float32)
    h1, c1, h2, c2 = zeros, zeros, zeros, zeros

    # Time loop fully unrolled at trace time (T small & static): no grid-step
    # overhead, static lane slices for x_t.
    for t in range(T):
        x_t = x[:, t:t + 1]                                        # (B, 1)

        # ---- layer 0 (input size 1 -> broadcast multiply, fused 4H gates) ----
        g0 = (x_t * wih0
              + jnp.dot(h1, whh0, preferred_element_type=jnp.float32)
              + b0)                                                # (B, 4H)
        i0, f0, gg0, o0 = split_gates(activate(g0))
        c1 = f0 * c1 + i0 * gg0
        h1 = o0 * jnp.tanh(c1)

        # ---- layer 1 (fused 4H gates) ----------------------------------------
        g1 = (jnp.dot(h1, wih1, preferred_element_type=jnp.float32)
              + jnp.dot(h2, whh1, preferred_element_type=jnp.float32)
              + b1)                                                # (B, 4H)
        i1, f1, gg1, o1 = split_gates(activate(g1))
        c2 = f1 * c2 + i1 * gg1
        h2 = o1 * jnp.tanh(c2)

    # FC head: VPU multiply + lane reduction instead of an N=1 MXU matmul.
    logits = jnp.sum(h2 * wfc, axis=-1, keepdims=True) + bfc       # (B, 1)
    out_ref[...] = jax.nn.sigmoid(logits)


# -----------------------------------------------------------------------------
# Parameter packing (PyTorch layout -> kernel layout, gate order i,f,g,o).
# -----------------------------------------------------------------------------
def pack_params(pt):
    return dict(
        wih0=pt["w_ih_l0"].T,                              # (1, 4H)
        whh0=pt["w_hh_l0"].T,                              # (H, 4H)
        b0=(pt["b_ih_l0"] + pt["b_hh_l0"])[None, :],       # (1, 4H)
        wih1=pt["w_ih_l1"].T,                              # (H, 4H)
        whh1=pt["w_hh_l1"].T,                              # (H, 4H)
        b1=(pt["b_ih_l1"] + pt["b_hh_l1"])[None, :],       # (1, 4H)
        wfc=pt["w_fc"],                                    # (1, H)
        bfc=pt["b_fc"][None, :],                           # (1, 1)
    )


# -----------------------------------------------------------------------------
# Wrapper: x is (B, T, 1) like the PyTorch module (batch_first).
# -----------------------------------------------------------------------------
def nanoporeter_forward(x, pt, hidden_size):
    B, T, _ = x.shape
    p = pack_params(pt)

    x2d = x.astype(jnp.float32)[..., 0]   # (B, T); squeeze only, no transpose

    vmem = pl.BlockSpec(memory_space=pltpu.MemorySpace.VMEM)
    return pl.pallas_call(
        _lstm_fc_kernel,
        out_shape=jax.ShapeDtypeStruct((B, 1), jnp.float32),
        in_specs=[vmem] * 9,
        out_specs=vmem,
    )(x2d, p["wih0"], p["whh0"], p["b0"],
      p["wih1"], p["whh1"], p["b1"], p["wfc"], p["bfc"])


# -----------------------------------------------------------------------------
# Pure-JAX reference (PyTorch semantics) for verification.
# -----------------------------------------------------------------------------
def reference_forward(x, pt, hidden_size):
    H = hidden_size
    xf = x[..., 0].astype(jnp.float32)  # (B, T)
    B, T = xf.shape

    def cell(inp, h, c, w_ih, w_hh, b_ih, b_hh):
        gates = inp @ w_ih.T + h @ w_hh.T + b_ih + b_hh  # (B, 4H)
        i = jax.nn.sigmoid(gates[:, 0 * H:1 * H])
        f = jax.nn.sigmoid(gates[:, 1 * H:2 * H])
        g = jnp.tanh(gates[:, 2 * H:3 * H])
        o = jax.nn.sigmoid(gates[:, 3 * H:4 * H])
        c = f * c + i * g
        h = o * jnp.tanh(c)
        return h, c

    h1 = c1 = h2 = c2 = jnp.zeros((B, H), jnp.float32)
    for t in range(T):
        x_t = xf[:, t:t + 1]  # (B, 1)
        h1, c1 = cell(x_t, h1, c1, pt["w_ih_l0"], pt["w_hh_l0"],
                      pt["b_ih_l0"], pt["b_hh_l0"])
        h2, c2 = cell(h1, h2, c2, pt["w_ih_l1"], pt["w_hh_l1"],
                      pt["b_ih_l1"], pt["b_hh_l1"])
    logits = h2 @ pt["w_fc"].T + pt["b_fc"]
    return jax.nn.sigmoid(logits)


if __name__ == "__main__":
    B, T, H = 2, 16, 32   # batch, signal_length (seq), hidden_size

    key = jax.random.PRNGKey(0)
    keys = jax.random.split(key, 11)
    bound = 1.0 / math.sqrt(H)

    def u(k, shape):
        return jax.random.uniform(k, shape, jnp.float32, minval=-bound, maxval=bound)

    # Deterministic synthetic parameters with nn.LSTM / nn.Linear shapes.
    pt = {
        "w_ih_l0": u(keys[0], (4 * H, 1)),
        "w_hh_l0": u(keys[1], (4 * H, H)),
        "b_ih_l0": u(keys[2], (4 * H,)),
        "b_hh_l0": u(keys[3], (4 * H,)),
        "w_ih_l1": u(keys[4], (4 * H, H)),
        "w_hh_l1": u(keys[5], (4 * H, H)),
        "b_ih_l1": u(keys[6], (4 * H,)),
        "b_hh_l1": u(keys[7], (4 * H,)),
        "w_fc":    u(keys[8], (1, H)),
        "b_fc":    u(keys[9], (1,)),
    }
    x = jax.random.normal(keys[10], (B, T, 1), dtype=jnp.float32)

    out = nanoporeter_forward(x, pt, H)
    out = jax.block_until_ready(out)

    ref = reference_forward(x, pt, H)
    np.testing.assert_allclose(np.asarray(out), np.asarray(ref), rtol=1e-4, atol=1e-5)

    print("KERNEL_OK")
</pallas_src>

<mosaic_0001>
module attributes {stable_mosaic.version = 11 : i64} {
  func.func @_lstm_fc_kernel(%arg0: memref<2x16xf32, #tpu.memory_space<vmem>>, %arg1: memref<1x128xf32, #tpu.memory_space<vmem>>, %arg2: memref<32x128xf32, #tpu.memory_space<vmem>>, %arg3: memref<1x128xf32, #tpu.memory_space<vmem>>, %arg4: memref<32x128xf32, #tpu.memory_space<vmem>>, %arg5: memref<32x128xf32, #tpu.memory_space<vmem>>, %arg6: memref<1x128xf32, #tpu.memory_space<vmem>>, %arg7: memref<1x32xf32, #tpu.memory_space<vmem>>, %arg8: memref<1x1xf32, #tpu.memory_space<vmem>>, %arg9: memref<2x1xf32, #tpu.memory_space<vmem>>) attributes {dimension_semantics = [], scalar_prefetch = 0 : i64, scratch_operands = 0 : i64, tpu.core_type = #tpu.core_type<tc>} {
    %c0 = arith.constant 0 : index
    %c0_0 = arith.constant 0 : index
    %0 = vector.load %arg0[%c0, %c0_0] : memref<2x16xf32, #tpu.memory_space<vmem>>, vector<2x16xf32>
    %c0_1 = arith.constant 0 : index
    %c0_2 = arith.constant 0 : index
    %1 = vector.load %arg1[%c0_1, %c0_2] : memref<1x128xf32, #tpu.memory_space<vmem>>, vector<1x128xf32>
    %c0_3 = arith.constant 0 : index
    %c0_4 = arith.constant 0 : index
    %2 = vector.load %arg2[%c0_3, %c0_4] : memref<32x128xf32, #tpu.memory_space<vmem>>, vector<32x128xf32>
    %c0_5 = arith.constant 0 : index
    %c0_6 = arith.constant 0 : index
    %3 = vector.load %arg3[%c0_5, %c0_6] : memref<1x128xf32, #tpu.memory_space<vmem>>, vector<1x128xf32>
    %c0_7 = arith.constant 0 : index
    %c0_8 = arith.constant 0 : index
    %4 = vector.load %arg4[%c0_7, %c0_8] : memref<32x128xf32, #tpu.memory_space<vmem>>, vector<32x128xf32>
    %c0_9 = arith.constant 0 : index
    %c0_10 = arith.constant 0 : index
    %5 = vector.load %arg5[%c0_9, %c0_10] : memref<32x128xf32, #tpu.memory_space<vmem>>, vector<32x128xf32>
    %c0_11 = arith.constant 0 : index
    %c0_12 = arith.constant 0 : index
    %6 = vector.load %arg6[%c0_11, %c0_12] : memref<1x128xf32, #tpu.memory_space<vmem>>, vector<1x128xf32>
    %c0_13 = arith.constant 0 : index
    %c0_14 = arith.constant 0 : index
    %7 = vector.load %arg7[%c0_13, %c0_14] : memref<1x32xf32, #tpu.memory_space<vmem>>, vector<1x32xf32>
    %c0_15 = arith.constant 0 : index
    %c0_16 = arith.constant 0 : index
    %8 = vector.load %arg8[%c0_15, %c0_16] : memref<1x1xf32, #tpu.memory_space<vmem>>, vector<1x1xf32>
    %9 = tpu.iota {dimensions = array<i32: 1>} : vector<2x128xi32>
    %c64_i32 = arith.constant 64 : i32
    %10 = vector.broadcast %c64_i32 : i32 to vector<2x128xi32>
    %11 = arith.cmpi sge, %9, %10 : vector<2x128xi32>
    %c96_i32 = arith.constant 96 : i32
    %12 = vector.broadcast %c96_i32 : i32 to vector<2x128xi32>
    %13 = arith.cmpi slt, %9, %12 : vector<2x128xi32>
    %14 = arith.andi %11, %13 : vector<2x128xi1>
    %cst = arith.constant 0.000000e+00 : f32
    %15 = vector.broadcast %cst : f32 to vector<2x32xf32>
    %16 = vector.extract_strided_slice %0 {offsets = [0, 0], sizes = [2, 1], strides = [1, 1]} : vector<2x16xf32> to vector<2x1xf32>
    %17 = vector.broadcast %16 : vector<2x1xf32> to vector<2x128xf32>
    %18 = vector.broadcast %1 : vector<1x128xf32> to vector<2x128xf32>
    %19 = arith.mulf %17, %18 : vector<2x128xf32>
    %cst_17 = arith.constant dense<0.000000e+00> : vector<2x128xf32>
    %20 = tpu.matmul %15, %2, %cst_17 {dimension_numbers = #tpu.dot_dimension_numbers<[1], [0], [0], [1], [0, 0, 1, 1], [], []>} : vector<2x32xf32>, vector<32x128xf32>, vector<2x128xf32> -> vector<2x128xf32>
    %21 = arith.addf %19, %20 : vector<2x128xf32>
    %22 = vector.broadcast %3 : vector<1x128xf32> to vector<2x128xf32>
    %23 = arith.addf %21, %22 : vector<2x128xf32>
    %24 = math.tanh %23 : vector<2x128xf32>
    %25 = arith.negf %23 : vector<2x128xf32>
    %26 = math.exp %25 : vector<2x128xf32>
    %cst_18 = arith.constant 1.000000e+00 : f32
    %27 = vector.broadcast %cst_18 : f32 to vector<2x128xf32>
    %28 = arith.addf %27, %26 : vector<2x128xf32>
    %29 = arith.divf %27, %28 : vector<2x128xf32>
    %30 = arith.select %14, %24, %29 : vector<2x128xi1>, vector<2x128xf32>
    %31 = vector.extract_strided_slice %30 {offsets = [0, 0], sizes = [2, 32], strides = [1, 1]} : vector<2x128xf32> to vector<2x32xf32>
    %32 = vector.extract_strided_slice %30 {offsets = [0, 32], sizes = [2, 32], strides = [1, 1]} : vector<2x128xf32> to vector<2x32xf32>
    %33 = vector.extract_strided_slice %30 {offsets = [0, 64], sizes = [2, 32], strides = [1, 1]} : vector<2x128xf32> to vector<2x32xf32>
    %34 = vector.extract_strided_slice %30 {offsets = [0, 96], sizes = [2, 32], strides = [1, 1]} : vector<2x128xf32> to vector<2x32xf32>
    %35 = arith.mulf %32, %15 : vector<2x32xf32>
    %36 = arith.mulf %31, %33 : vector<2x32xf32>
    %37 = arith.addf %35, %36 : vector<2x32xf32>
    %38 = math.tanh %37 : vector<2x32xf32>
    %39 = arith.mulf %34, %38 : vector<2x32xf32>
    %cst_19 = arith.constant dense<0.000000e+00> : vector<2x128xf32>
    %40 = tpu.matmul %39, %4, %cst_19 {dimension_numbers = #tpu.dot_dimension_numbers<[1], [0], [0], [1], [0, 0, 1, 1], [], []>} : vector<2x32xf32>, vector<32x128xf32>, vector<2x128xf32> -> vector<2x128xf32>
    %cst_20 = arith.constant dense<0.000000e+00> : vector<2x128xf32>
    %41 = tpu.matmul %15, %5, %cst_20 {dimension_numbers = #tpu.dot_dimension_numbers<[1], [0], [0], [1], [0, 0, 1, 1], [], []>} : vector<2x32xf32>, vector<32x128xf32>, vector<2x128xf32> -> vector<2x128xf32>
    %42 = arith.addf %40, %41 : vector<2x128xf32>
    %43 = vector.broadcast %6 : vector<1x128xf32> to vector<2x128xf32>
    %44 = arith.addf %42, %43 : vector<2x128xf32>
    %45 = math.tanh %44 : vector<2x128xf32>
    %46 = arith.negf %44 : vector<2x128xf32>
    %47 = math.exp %46 : vector<2x128xf32>
    %cst_21 = arith.constant 1.000000e+00 : f32
    %48 = vector.broadcast %cst_21 : f32 to vector<2x128xf32>
    %49 = arith.addf %48, %47 : vector<2x128xf32>
    %50 = arith.divf %48, %49 : vector<2x128xf32>
    %51 = arith.select %14, %45, %50 : vector<2x128xi1>, vector<2x128xf32>
    %52 = vector.extract_strided_slice %51 {offsets = [0, 0], sizes = [2, 32], strides = [1, 1]} : vector<2x128xf32> to vector<2x32xf32>
    %53 = vector.extract_strided_slice %51 {offsets = [0, 32], sizes = [2, 32], strides = [1, 1]} : vector<2x128xf32> to vector<2x32xf32>
    %54 = vector.extract_strided_slice %51 {offsets = [0, 64], sizes = [2, 32], strides = [1, 1]} : vector<2x128xf32> to vector<2x32xf32>
    %55 = vector.extract_strided_slice %51 {offsets = [0, 96], sizes = [2, 32], strides = [1, 1]} : vector<2x128xf32> to vector<2x32xf32>
    %56 = arith.mulf %53, %15 : vector<2x32xf32>
    %57 = arith.mulf %52, %54 : vector<2x32xf32>
    %58 = arith.addf %56, %57 : vector<2x32xf32>
    %59 = math.tanh %58 : vector<2x32xf32>
    %60 = arith.mulf %55, %59 : vector<2x32xf32>
    %61 = vector.extract_strided_slice %0 {offsets = [0, 1], sizes = [2, 1], strides = [1, 1]} : vector<2x16xf32> to vector<2x1xf32>
    %62 = vector.broadcast %61 : vector<2x1xf32> to vector<2x128xf32>
    %63 = vector.broadcast %1 : vector<1x128xf32> to vector<2x128xf32>
    %64 = arith.mulf %62, %63 : vector<2x128xf32>
    %cst_22 = arith.constant dense<0.000000e+00> : vector<2x128xf32>
    %65 = tpu.matmul %39, %2, %cst_22 {dimension_numbers = #tpu.dot_dimension_numbers<[1], [0], [0], [1], [0, 0, 1, 1], [], []>} : vector<2x32xf32>, vector<32x128xf32>, vector<2x128xf32> -> vector<2x128xf32>
    %66 = arith.addf %64, %65 : vector<2x128xf32>
    %67 = vector.broadcast %3 : vector<1x128xf32> to vector<2x128xf32>
    %68 = arith.addf %66, %67 : vector<2x128xf32>
    %69 = math.tanh %68 : vector<2x128xf32>
    %70 = arith.negf %68 : vector<2x128xf32>
    %71 = math.exp %70 : vector<2x128xf32>
    %cst_23 = arith.constant 1.000000e+00 : f32
    %72 = vector.broadcast %cst_23 : f32 to vector<2x128xf32>
    %73 = arith.addf %72, %71 : vector<2x128xf32>
    %74 = arith.divf %72, %73 : vector<2x128xf32>
    %75 = arith.select %14, %69, %74 : vector<2x128xi1>, vector<2x128xf32>
    %76 = vector.extract_strided_slice %75 {offsets = [0, 0], sizes = [2, 32], strides = [1, 1]} : vector<2x128xf32> to vector<2x32xf32>
    %77 = vector.extract_strided_slice %75 {offsets = [0, 32], sizes = [2, 32], strides = [1, 1]} : vector<2x128xf32> to vector<2x32xf32>
    %78 = vector.extract_strided_slice %75 {offsets = [0, 64], sizes = [2, 32], strides = [1, 1]} : vector<2x128xf32> to vector<2x32xf32>
    %79 = vector.extract_strided_slice %75 {offsets = [0, 96], sizes = [2, 32], strides = [1, 1]} : vector<2x128xf32> to vector<2x32xf32>
    %80 = arith.mulf %77, %37 : vector<2x32xf32>
    %81 = arith.mulf %76, %78 : vector<2x32xf32>
    %82 = arith.addf %80, %81 : vector<2x32xf32>
    %83 = math.tanh %82 : vector<2x32xf32>
    %84 = arith.mulf %79, %83 : vector<2x32xf32>
    %cst_24 = arith.constant dense<0.000000e+00> : vector<2x128xf32>
    %85 = tpu.matmul %84, %4, %cst_24 {dimension_numbers = #tpu.dot_dimension_numbers<[1], [0], [0], [1], [0, 0, 1, 1], [], []>} : vector<2x32xf32>, vector<32x128xf32>, vector<2x128xf32> -> vector<2x128xf32>
    %cst_25 = arith.constant dense<0.000000e+00> : vector<2x128xf32>
    %86 = tpu.matmul %60, %5, %cst_25 {dimension_numbers = #tpu.dot_dimension_numbers<[1], [0], [0], [1], [0, 0, 1, 1], [], []>} : vector<2x32xf32>, vector<32x128xf32>, vector<2x128xf32> -> vector<2x128xf32>
    %87 = arith.addf %85, %86 : vector<2x128xf32>
    %88 = vector.broadcast %6 : vector<1x128xf32> to vector<2x128xf32>
    %89 = arith.addf %87, %88 : vector<2x128xf32>
    %90 = math.tanh %89 : vector<2x128xf32>
    %91 = arith.negf %89 : vector<2x128xf32>
    %92 = math.exp %91 : vector<2x128xf32>
    %cst_26 = arith.constant 1.000000e+00 : f32
    %93 = vector.broadcast %cst_26 : f32 to vector<2x128xf32>
    %94 = arith.addf %93, %92 : vector<2x128xf32>
    %95 = arith.divf %93, %94 : vector<2x128xf32>
    %96 = arith.select %14, %90, %95 : vector<2x128xi1>, vector<2x128xf32>
    %97 = vector.extract_strided_slice %96 {offsets = [0, 0], sizes = [2, 32], strides = [1, 1]} : vector<2x128xf32> to vector<2x32xf32>
    %98 = vector.extract_strided_slice %96 {offsets = [0, 32], sizes = [2, 32], strides = [1, 1]} : vector<2x128xf32> to vector<2x32xf32>
    %99 = vector.extract_strided_slice %96 {offsets = [0, 64], sizes = [2, 32], strides = [1, 1]} : vector<2x128xf32> to vector<2x32xf32>
    %100 = vector.extract_strided_slice %96 {offsets = [0, 96], sizes = [2, 32], strides = [1, 1]} : vector<2x128xf32> to vector<2x32xf32>
    %101 = arith.mulf %98, %58 : vector<2x32xf32>
    %102 = arith.mulf %97, %99 : vector<2x32xf32>
    %103 = arith.addf %101, %102 : vector<2x32xf32>
    %104 = math.tanh %103 : vector<2x32xf32>
    %105 = arith.mulf %100, %104 : vector<2x32xf32>
    %106 = vector.extract_strided_slice %0 {offsets = [0, 2], sizes = [2, 1], strides = [1, 1]} : vector<2x16xf32> to vector<2x1xf32>
    %107 = vector.broadcast %106 : vector<2x1xf32> to vector<2x128xf32>
    %108 = vector.broadcast %1 : vector<1x128xf32> to vector<2x128xf32>
    %109 = arith.mulf %107, %108 : vector<2x128xf32>
    %cst_27 = arith.constant dense<0.000000e+00> : vector<2x128xf32>
    %110 = tpu.matmul %84, %2, %cst_27 {dimension_numbers = #tpu.dot_dimension_numbers<[1], [0], [0], [1], [0, 0, 1, 1], [], []>} : vector<2x32xf32>, vector<32x128xf32>, vector<2x128xf32> -> vector<2x128xf32>
    %111 = arith.addf %109, %110 : vector<2x128xf32>
    %112 = vector.broadcast %3 : vector<1x128xf32> to vector<2x128xf32>
    %113 = arith.addf %111, %112 : vector<2x128xf32>
    %114 = math.tanh %113 : vector<2x128xf32>
    %115 = arith.negf %113 : vector<2x128xf32>
    %116 = math.exp %115 : vector<2x128xf32>
    %cst_28 = arith.constant 1.000000e+00 : f32
    %117 = vector.broadcast %cst_28 : f32 to vector<2x128xf32>
    %118 = arith.addf %117, %116 : vector<2x128xf32>
    %119 = arith.divf %117, %118 : vector<2x128xf32>
    %120 = arith.select %14, %114, %119 : vector<2x128xi1>, vector<2x128xf32>
    %121 = vector.extract_strided_slice %120 {offsets = [0, 0], sizes = [2, 32], strides = [1, 1]} : vector<2x128xf32> to vector<2x32xf32>
    %122 = vector.extract_strided_slice %120 {offsets = [0, 32], sizes = [2, 32], strides = [1, 1]} : vector<2x128xf32> to vector<2x32xf32>
    %123 = vector.extract_strided_slice %120 {offsets = [0, 64], sizes = [2, 32], strides = [1, 1]} : vector<2x128xf32> to vector<2x32xf32>
    %124 = vector.extract_strided_slice %120 {offsets = [0, 96], sizes = [2, 32], strides = [1, 1]} : vector<2x128xf32> to vector<2x32xf32>
    %125 = arith.mulf %122, %82 : vector<2x32xf32>
    %126 = arith.mulf %121, %123 : vector<2x32xf32>
    %127 = arith.addf %125, %126 : vector<2x32xf32>
    %128 = math.tanh %127 : vector<2x32xf32>
    %129 = arith.mulf %124, %128 : vector<2x32xf32>
    %cst_29 = arith.constant dense<0.000000e+00> : vector<2x128xf32>
    %130 = tpu.matmul %129, %4, %cst_29 {dimension_numbers = #tpu.dot_dimension_numbers<[1], [0], [0], [1], [0, 0, 1, 1], [], []>} : vector<2x32xf32>, vector<32x128xf32>, vector<2x128xf32> -> vector<2x128xf32>
    %cst_30 = arith.constant dense<0.000000e+00> : vector<2x128xf32>
    %131 = tpu.matmul %105, %5, %cst_30 {dimension_numbers = #tpu.dot_dimension_numbers<[1], [0], [0], [1], [0, 0, 1, 1], [], []>} : vector<2x32xf32>, vector<32x128xf32>, vector<2x128xf32> -> vector<2x128xf32>
    %132 = arith.addf %130, %131 : vector<2x128xf32>
    %133 = vector.broadcast %6 : vector<1x128xf32> to vector<2x128xf32>
    %134 = arith.addf %132, %133 : vector<2x128xf32>
    %135 = math.tanh %134 : vector<2x128xf32>
    %136 = arith.negf %134 : vector<2x128xf32>
    %137 = math.exp %136 : vector<2x128xf32>
    %cst_31 = arith.constant 1.000000e+00 : f32
    %138 = vector.broadcast %cst_31 : f32 to vector<2x128xf32>
    %139 = arith.addf %138, %137 : vector<2x128xf32>
    %140 = arith.divf %138, %139 : vector<2x128xf32>
    %141 = arith.select %14, %135, %140 : vector<2x128xi1>, vector<2x128xf32>
    %142 = vector.extract_strided_slice %141 {offsets = [0, 0], sizes = [2, 32], strides = [1, 1]} : vector<2x128xf32> to vector<2x32xf32>
    %143 = vector.extract_strided_slice %141 {offsets = [0, 32], sizes = [2, 32], strides = [1, 1]} : vector<2x128xf32> to vector<2x32xf32>
    %144 = vector.extract_strided_slice %141 {offsets = [0, 64], sizes = [2, 32], strides = [1, 1]} : vector<2x128xf32> to vector<2x32xf32>
    %145 = vector.extract_strided_slice %141 {offsets = [0, 96], sizes = [2, 32], strides = [1, 1]} : vector<2x128xf32> to vector<2x32xf32>
    %146 = arith.mulf %143, %103 : vector<2x32xf32>
    %147 = arith.mulf %142, %144 : vector<2x32xf32>
    %148 = arith.addf %146, %147 : vector<2x32xf32>
    %149 = math.tanh %148 : vector<2x32xf32>
    %150 = arith.mulf %145, %149 : vector<2x32xf32>
    %151 = vector.extract_strided_slice %0 {offsets = [0, 3], sizes = [2, 1], strides = [1, 1]} : vector<2x16xf32> to vector<2x1xf32>
    %152 = vector.broadcast %151 : vector<2x1xf32> to vector<2x128xf32>
    %153 = vector.broadcast %1 : vector<1x128xf32> to vector<2x128xf32>
    %154 = arith.mulf %152, %153 : vector<2x128xf32>
    %cst_32 = arith.constant dense<0.000000e+00> : vector<2x128xf32>
    %155 = tpu.matmul %129, %2, %cst_32 {dimension_numbers = #tpu.dot_dimension_numbers<[1], [0], [0], [1], [0, 0, 1, 1], [], []>} : vector<2x32xf32>, vector<32x128xf32>, vector<2x128xf32> -> vector<2x128xf32>
    %156 = arith.addf %154, %155 : vector<2x128xf32>
    %157 = vector.broadcast %3 : vector<1x128xf32> to vector<2x128xf32>
    %158 = arith.addf %156, %157 : vector<2x128xf32>
    %159 = math.tanh %158 : vector<2x128xf32>
    %160 = arith.negf %158 : vector<2x128xf32>
    %161 = math.exp %160 : vector<2x128xf32>
    %cst_33 = arith.constant 1.000000e+00 : f32
    %162 = vector.broadcast %cst_33 : f32 to vector<2x128xf32>
    %163 = arith.addf %162, %161 : vector<2x128xf32>
    %164 = arith.divf %162, %163 : vector<2x128xf32>
    %165 = arith.select %14, %159, %164 : vector<2x128xi1>, vector<2x128xf32>
    %166 = vector.extract_strided_slice %165 {offsets = [0, 0], sizes = [2, 32], strides = [1, 1]} : vector<2x128xf32> to vector<2x32xf32>
    %167 = vector.extract_strided_slice %165 {offsets = [0, 32], sizes = [2, 32], strides = [1, 1]} : vector<2x128xf32> to vector<2x32xf32>
    %168 = vector.extract_strided_slice %165 {offsets = [0, 64], sizes = [2, 32], strides = [1, 1]} : vector<2x128xf32> to vector<2x32xf32>
    %169 = vector.extract_strided_slice %165 {offsets = [0, 96], sizes = [2, 32], strides = [1, 1]} : vector<2x128xf32> to vector<2x32xf32>
    %170 = arith.mulf %167, %127 : vector<2x32xf32>
    %171 = arith.mulf %166, %168 : vector<2x32xf32>
    %172 = arith.addf %170, %171 : vector<2x32xf32>
    %173 = math.tanh %172 : vector<2x32xf32>
    %174 = arith.mulf %169, %173 : vector<2x32xf32>
    %cst_34 = arith.constant dense<0.000000e+00> : vector<2x128xf32>
    %175 = tpu.matmul %174, %4, %cst_34 {dimension_numbers = #tpu.dot_dimension_numbers<[1], [0], [0], [1], [0, 0, 1, 1], [], []>} : vector<2x32xf32>, vector<32x128xf32>, vector<2x128xf32> -> vector<2x128xf32>
    %cst_35 = arith.constant dense<0.000000e+00> : vector<2x128xf32>
    %176 = tpu.matmul %150, %5, %cst_35 {dimension_numbers = #tpu.dot_dimension_numbers<[1], [0], [0], [1], [0, 0, 1, 1], [], []>} : vector<2x32xf32>, vector<32x128xf32>, vector<2x128xf32> -> vector<2x128xf32>
    %177 = arith.addf %175, %176 : vector<2x128xf32>
    %178 = vector.broadcast %6 : vector<1x128xf32> to vector<2x128xf32>
    %179 = arith.addf %177, %178 : vector<2x128xf32>
    %180 = math.tanh %179 : vector<2x128xf32>
    %181 = arith.negf %179 : vector<2x128xf32>
    %182 = math.exp %181 : vector<2x128xf32>
    %cst_36 = arith.constant 1.000000e+00 : f32
    %183 = vector.broadcast %cst_36 : f32 to vector<2x128xf32>
    %184 = arith.addf %183, %182 : vector<2x128xf32>
    %185 = arith.divf %183, %184 : vector<2x128xf32>
    %186 = arith.select %14, %180, %185 : vector<2x128xi1>, vector<2x128xf32>
    %187 = vector.extract_strided_slice %186 {offsets = [0, 0], sizes = [2, 32], strides = [1, 1]} : vector<2x128xf32> to vector<2x32xf32>
    %188 = vector.extract_strided_slice %186 {offsets = [0, 32], sizes = [2, 32], strides = [1, 1]} : vector<2x128xf32> to vector<2x32xf32>
    %189 = vector.extract_strided_slice %186 {offsets = [0, 64], sizes = [2, 32], strides = [1, 1]} : vector<2x128xf32> to vector<2x32xf32>
    %190 = vector.extract_strided_slice %186 {offsets = [0, 96], sizes = [2, 32], strides = [1, 1]} : vector<2x128xf32> to vector<2x32xf32>
    %191 = arith.mulf %188, %148 : vector<2x32xf32>
    %192 = arith.mulf %187, %189 : vector<2x32xf32>
    %193 = arith.addf %191, %192 : vector<2x32xf32>
    %194 = math.tanh %193 : vector<2x32xf32>
    %195 = arith.mulf %190, %194 : vector<2x32xf32>
    %196 = vector.extract_strided_slice %0 {offsets = [0, 4], sizes = [2, 1], strides = [1, 1]} : vector<2x16xf32> to vector<2x1xf32>
    %197 = vector.broadcast %196 : vector<2x1xf32> to vector<2x128xf32>
    %198 = vector.broadcast %1 : vector<1x128xf32> to vector<2x128xf32>
    %199 = arith.mulf %197, %198 : vector<2x128xf32>
    %cst_37 = arith.constant dense<0.000000e+00> : vector<2x128xf32>
    %200 = tpu.matmul %174, %2, %cst_37 {dimension_numbers = #tpu.dot_dimension_numbers<[1], [0], [0], [1], [0, 0, 1, 1], [], []>} : vector<2x32xf32>, vector<32x128xf32>, vector<2x128xf32> -> vector<2x128xf32>
    %201 = arith.addf %199, %200 : vector<2x128xf32>
    %202 = vector.broadcast %3 : vector<1x128xf32> to vector<2x128xf32>
    %203 = arith.addf %201, %202 : vector<2x128xf32>
    %204 = math.tanh %203 : vector<2x128xf32>
    %205 = arith.negf %203 : vector<2x128xf32>
    %206 = math.exp %205 : vector<2x128xf32>
    %cst_38 = arith.constant 1.000000e+00 : f32
    %207 = vector.broadcast %cst_38 : f32 to vector<2x128xf32>
    %208 = arith.addf %207, %206 : vector<2x128xf32>
    %209 = arith.divf %207, %208 : vector<2x128xf32>
    %210 = arith.select %14, %204, %209 : vector<2x128xi1>, vector<2x128xf32>
    %211 = vector.extract_strided_slice %210 {offsets = [0, 0], sizes = [2, 32], strides = [1, 1]} : vector<2x128xf32> to vector<2x32xf32>
    %212 = vector.extract_strided_slice %210 {offsets = [0, 32], sizes = [2, 32], strides = [1, 1]} : vector<2x128xf32> to vector<2x32xf32>
    %213 = vector.extract_strided_slice %210 {offsets = [0, 64], sizes = [2, 32], strides = [1, 1]} : vector<2x128xf32> to vector<2x32xf32>
    %214 = vector.extract_strided_slice %210 {offsets = [0, 96], sizes = [2, 32], strides = [1, 1]} : vector<2x128xf32> to vector<2x32xf32>
    %215 = arith.mulf %212, %172 : vector<2x32xf32>
    %216 = arith.mulf %211, %213 : vector<2x32xf32>
    %217 = arith.addf %215, %216 : vector<2x32xf32>
    %218 = math.tanh %217 : vector<2x32xf32>
    %219 = arith.mulf %214, %218 : vector<2x32xf32>
    %cst_39 = arith.constant dense<0.000000e+00> : vector<2x128xf32>
    %220 = tpu.matmul %219, %4, %cst_39 {dimension_numbers = #tpu.dot_dimension_numbers<[1], [0], [0], [1], [0, 0, 1, 1], [], []>} : vector<2x32xf32>, vector<32x128xf32>, vector<2x128xf32> -> vector<2x128xf32>
    %cst_40 = arith.constant dense<0.000000e+00> : vector<2x128xf32>
    %221 = tpu.matmul %195, %5, %cst_40 {dimension_numbers = #tpu.dot_dimension_numbers<[1], [0], [0], [1], [0, 0, 1, 1], [], []>} : vector<2x32xf32>, vector<32x128xf32>, vector<2x128xf32> -> vector<2x128xf32>
    %222 = arith.addf %220, %221 : vector<2x128xf32>
    %223 = vector.broadcast %6 : vector<1x128xf32> to vector<2x128xf32>
    %224 = arith.addf %222, %223 : vector<2x128xf32>
    %225 = math.tanh %224 : vector<2x128xf32>
    %226 = arith.negf %224 : vector<2x128xf32>
    %227 = math.exp %226 : vector<2x128xf32>
    %cst_41 = arith.constant 1.000000e+00 : f32
    %228 = vector.broadcast %cst_41 : f32 to vector<2x128xf32>
    %229 = arith.addf %228, %227 : vector<2x128xf32>
    %230 = arith.divf %228, %229 : vector<2x128xf32>
    %231 = arith.select %14, %225, %230 : vector<2x128xi1>, vector<2x128xf32>
    %232 = vector.extract_strided_slice %231 {offsets = [0, 0], sizes = [2, 32], strides = [1, 1]} : vector<2x128xf32> to vector<2x32xf32>
    %233 = vector.extract_strided_slice %231 {offsets = [0, 32], sizes = [2, 32], strides = [1, 1]} : vector<2x128xf32> to vector<2x32xf32>
    %234 = vector.extract_strided_slice %231 {offsets = [0, 64], sizes = [2, 32], strides = [1, 1]} : vector<2x128xf32> to vector<2x32xf32>
    %235 = vector.extract_strided_slice %231 {offsets = [0, 96], sizes = [2, 32], strides = [1, 1]} : vector<2x128xf32> to vector<2x32xf32>
    %236 = arith.mulf %233, %193 : vector<2x32xf32>
    %237 = arith.mulf %232, %234 : vector<2x32xf32>
    %238 = arith.addf %236, %237 : vector<2x32xf32>
    %239 = math.tanh %238 : vector<2x32xf32>
    %240 = arith.mulf %235, %239 : vector<2x32xf32>
    %241 = vector.extract_strided_slice %0 {offsets = [0, 5], sizes = [2, 1], strides = [1, 1]} : vector<2x16xf32> to vector<2x1xf32>
    %242 = vector.broadcast %241 : vector<2x1xf32> to vector<2x128xf32>
    %243 = vector.broadcast %1 : vector<1x128xf32> to vector<2x128xf32>
    %244 = arith.mulf %242, %243 : vector<2x128xf32>
    %cst_42 = arith.constant dense<0.000000e+00> : vector<2x128xf32>
    %245 = tpu.matmul %219, %2, %cst_42 {dimension_numbers = #tpu.dot_dimension_numbers<[1], [0], [0], [1], [0, 0, 1, 1], [], []>} : vector<2x32xf32>, vector<32x128xf32>, vector<2x128xf32> -> vector<2x128xf32>
    %246 = arith.addf %244, %245 : vector<2x128xf32>
    %247 = vector.broadcast %3 : vector<1x128xf32> to vector<2x128xf32>
    %248 = arith.addf %246, %247 : vector<2x128xf32>
    %249 = math.tanh %248 : vector<2x128xf32>
    %250 = arith.negf %248 : vector<2x128xf32>
    %251 = math.exp %250 : vector<2x128xf32>
    %cst_43 = arith.constant 1.000000e+00 : f32
    %252 = vector.broadcast %cst_43 : f32 to vector<2x128xf32>
    %253 = arith.addf %252, %251 : vector<2x128xf32>
    %254 = arith.divf %252, %253 : vector<2x128xf32>
    %255 = arith.select %14, %249, %254 : vector<2x128xi1>, vector<2x128xf32>
    %256 = vector.extract_strided_slice %255 {offsets = [0, 0], sizes = [2, 32], strides = [1, 1]} : vector<2x128xf32> to vector<2x32xf32>
    %257 = vector.extract_strided_slice %255 {offsets = [0, 32], sizes = [2, 32], strides = [1, 1]} : vector<2x128xf32> to vector<2x32xf32>
    %258 = vector.extract_strided_slice %255 {offsets = [0, 64], sizes = [2, 32], strides = [1, 1]} : vector<2x128xf32> to vector<2x32xf32>
    %259 = vector.extract_strided_slice %255 {offsets = [0, 96], sizes = [2, 32], strides = [1, 1]} : vector<2x128xf32> to vector<2x32xf32>
    %260 = arith.mulf %257, %217 : vector<2x32xf32>
    %261 = arith.mulf %256, %258 : vector<2x32xf32>
    %262 = arith.addf %260, %261 : vector<2x32xf32>
    %263 = math.tanh %262 : vector<2x32xf32>
    %264 = arith.mulf %259, %263 : vector<2x32xf32>
    %cst_44 = arith.constant dense<0.000000e+00> : vector<2x128xf32>
    %265 = tpu.matmul %264, %4, %cst_44 {dimension_numbers = #tpu.dot_dimension_numbers<[1], [0], [0], [1], [0, 0, 1, 1], [], []>} : vector<2x32xf32>, vector<32x128xf32>, vector<2x128xf32> -> vector<2x128xf32>
    %cst_45 = arith.constant dense<0.000000e+00> : vector<2x128xf32>
    %266 = tpu.matmul %240, %5, %cst_45 {dimension_numbers = #tpu.dot_dimension_numbers<[1], [0], [0], [1], [0, 0, 1, 1], [], []>} : vector<2x32xf32>, vector<32x128xf32>, vector<2x128xf32> -> vector<2x128xf32>
    %267 = arith.addf %265, %266 : vector<2x128xf32>
    %268 = vector.broadcast %6 : vector<1x128xf32> to vector<2x128xf32>
    %269 = arith.addf %267, %268 : vector<2x128xf32>
    %270 = math.tanh %269 : vector<2x128xf32>
    %271 = arith.negf %269 : vector<2x128xf32>
    %272 = math.exp %271 : vector<2x128xf32>
    %cst_46 = arith.constant 1.000000e+00 : f32
    %273 = vector.broadcast %cst_46 : f32 to vector<2x128xf32>
    %274 = arith.addf %273, %272 : vector<2x128xf32>
    %275 = arith.divf %273, %274 : vector<2x128xf32>
    %276 = arith.select %14, %270, %275 : vector<2x128xi1>, vector<2x128xf32>
    %277 = vector.extract_strided_slice %276 {offsets = [0, 0], sizes = [2, 32], strides = [1, 1]} : vector<2x128xf32> to vector<2x32xf32>
    %278 = vector.extract_strided_slice %276 {offsets = [0, 32], sizes = [2, 32], strides = [1, 1]} : vector<2x128xf32> to vector<2x32xf32>
    %279 = vector.extract_strided_slice %276 {offsets = [0, 64], sizes = [2, 32], strides = [1, 1]} : vector<2x128xf32> to vector<2x32xf32>
    %280 = vector.extract_strided_slice %276 {offsets = [0, 96], sizes = [2, 32], strides = [1, 1]} : vector<2x128xf32> to vector<2x32xf32>
    %281 = arith.mulf %278, %238 : vector<2x32xf32>
    %282 = arith.mulf %277, %279 : vector<2x32xf32>
    %283 = arith.addf %281, %282 : vector<2x32xf32>
    %284 = math.tanh %283 : vector<2x32xf32>
    %285 = arith.mulf %280, %284 : vector<2x32xf32>
    %286 = vector.extract_strided_slice %0 {offsets = [0, 6], sizes = [2, 1], strides = [1, 1]} : vector<2x16xf32> to vector<2x1xf32>
    %287 = vector.broadcast %286 : vector<2x1xf32> to vector<2x128xf32>
    %288 = vector.broadcast %1 : vector<1x128xf32> to vector<2x128xf32>
    %289 = arith.mulf %287, %288 : vector<2x128xf32>
    %cst_47 = arith.constant dense<0.000000e+00> : vector<2x128xf32>
    %290 = tpu.matmul %264, %2, %cst_47 {dimension_numbers = #tpu.dot_dimension_numbers<[1], [0], [0], [1], [0, 0, 1, 1], [], []>} : vector<2x32xf32>, vector<32x128xf32>, vector<2x128xf32> -> vector<2x128xf32>
    %291 = arith.addf %289, %290 : vector<2x128xf32>
    %292 = vector.broadcast %3 : vector<1x128xf32> to vector<2x128xf32>
    %293 = arith.addf %291, %292 : vector<2x128xf32>
    %294 = math.tanh %293 : vector<2x128xf32>
    %295 = arith.negf %293 : vector<2x128xf32>
    %296 = math.exp %295 : vector<2x128xf32>
    %cst_48 = arith.constant 1.000000e+00 : f32
    %297 = vector.broadcast %cst_48 : f32 to vector<2x128xf32>
    %298 = arith.addf %297, %296 : vector<2x128xf32>
    %299 = arith.divf %297, %298 : vector<2x128xf32>
    %300 = arith.select %14, %294, %299 : vector<2x128xi1>, vector<2x128xf32>
    %301 = vector.extract_strided_slice %300 {offsets = [0, 0], sizes = [2, 32], strides = [1, 1]} : vector<2x128xf32> to vector<2x32xf32>
    %302 = vector.extract_strided_slice %300 {offsets = [0, 32], sizes = [2, 32], strides = [1, 1]} : vector<2x128xf32> to vector<2x32xf32>
    %303 = vector.extract_strided_slice %300 {offsets = [0, 64], sizes = [2, 32], strides = [1, 1]} : vector<2x128xf32> to vector<2x32xf32>
    %304 = vector.extract_strided_slice %300 {offsets = [0, 96], sizes = [2, 32], strides = [1, 1]} : vector<2x128xf32> to vector<2x32xf32>
    %305 = arith.mulf %302, %262 : vector<2x32xf32>
    %306 = arith.mulf %301, %303 : vector<2x32xf32>
    %307 = arith.addf %305, %306 : vector<2x32xf32>
    %308 = math.tanh %307 : vector<2x32xf32>
    %309 = arith.mulf %304, %308 : vector<2x32xf32>
    %cst_49 = arith.constant dense<0.000000e+00> : vector<2x128xf32>
    %310 = tpu.matmul %309, %4, %cst_49 {dimension_numbers = #tpu.dot_dimension_numbers<[1], [0], [0], [1], [0, 0, 1, 1], [], []>} : vector<2x32xf32>, vector<32x128xf32>, vector<2x128xf32> -> vector<2x128xf32>
    %cst_50 = arith.constant dense<0.000000e+00> : vector<2x128xf32>
    %311 = tpu.matmul %285, %5, %cst_50 {dimension_numbers = #tpu.dot_dimension_numbers<[1], [0], [0], [1], [0, 0, 1, 1], [], []>} : vector<2x32xf32>, vector<32x128xf32>, vector<2x128xf32> -> vector<2x128xf32>
    %312 = arith.addf %310, %311 : vector<2x128xf32>
    %313 = vector.broadcast %6 : vector<1x128xf32> to vector<2x128xf32>
    %314 = arith.addf %312, %313 : vector<2x128xf32>
    %315 = math.tanh %314 : vector<2x128xf32>
    %316 = arith.negf %314 : vector<2x128xf32>
    %317 = math.exp %316 : vector<2x128xf32>
    %cst_51 = arith.constant 1.000000e+00 : f32
    %318 = vector.broadcast %cst_51 : f32 to vector<2x128xf32>
    %319 = arith.addf %318, %317 : vector<2x128xf32>
    %320 = arith.divf %318, %319 : vector<2x128xf32>
    %321 = arith.select %14, %315, %320 : vector<2x128xi1>, vector<2x128xf32>
    %322 = vector.extract_strided_slice %321 {offsets = [0, 0], sizes = [2, 32], strides = [1, 1]} : vector<2x128xf32> to vector<2x32xf32>
    %323 = vector.extract_strided_slice %321 {offsets = [0, 32], sizes = [2, 32], strides = [1, 1]} : vector<2x128xf32> to vector<2x32xf32>
    %324 = vector.extract_strided_slice %321 {offsets = [0, 64], sizes = [2, 32], strides = [1, 1]} : vector<2x128xf32> to vector<2x32xf32>
    %325 = vector.extract_strided_slice %321 {offsets = [0, 96], sizes = [2, 32], strides = [1, 1]} : vector<2x128xf32> to vector<2x32xf32>
    %326 = arith.mulf %323, %283 : vector<2x32xf32>
    %327 = arith.mulf %322, %324 : vector<2x32xf32>
    %328 = arith.addf %326, %327 : vector<2x32xf32>
    %329 = math.tanh %328 : vector<2x32xf32>
    %330 = arith.mulf %325, %329 : vector<2x32xf32>
    %331 = vector.extract_strided_slice %0 {offsets = [0, 7], sizes = [2, 1], strides = [1, 1]} : vector<2x16xf32> to vector<2x1xf32>
    %332 = vector.broadcast %331 : vector<2x1xf32> to vector<2x128xf32>
    %333 = vector.broadcast %1 : vector<1x128xf32> to vector<2x128xf32>
    %334 = arith.mulf %332, %333 : vector<2x128xf32>
    %cst_52 = arith.constant dense<0.000000e+00> : vector<2x128xf32>
    %335 = tpu.matmul %309, %2, %cst_52 {dimension_numbers = #tpu.dot_dimension_numbers<[1], [0], [0], [1], [0, 0, 1, 1], [], []>} : vector<2x32xf32>, vector<32x128xf32>, vector<2x128xf32> -> vector<2x128xf32>
    %336 = arith.addf %334, %335 : vector<2x128xf32>
    %337 = vector.broadcast %3 : vector<1x128xf32> to vector<2x128xf32>
    %338 = arith.addf %336, %337 : vector<2x128xf32>
    %339 = math.tanh %338 : vector<2x128xf32>
    %340 = arith.negf %338 : vector<2x128xf32>
    %341 = math.exp %340 : vector<2x128xf32>
    %cst_53 = arith.constant 1.000000e+00 : f32
    %342 = vector.broadcast %cst_53 : f32 to vector<2x128xf32>
    %343 = arith.addf %342, %341 : vector<2x128xf32>
    %344 = arith.divf %342, %343 : vector<2x128xf32>
    %345 = arith.select %14, %339, %344 : vector<2x128xi1>, vector<2x128xf32>
    %346 = vector.extract_strided_slice %345 {offsets = [0, 0], sizes = [2, 32], strides = [1, 1]} : vector<2x128xf32> to vector<2x32xf32>
    %347 = vector.extract_strided_slice %345 {offsets = [0, 32], sizes = [2, 32], strides = [1, 1]} : vector<2x128xf32> to vector<2x32xf32>
    %348 = vector.extract_strided_slice %345 {offsets = [0, 64], sizes = [2, 32], strides = [1, 1]} : vector<2x128xf32> to vector<2x32xf32>
    %349 = vector.extract_strided_slice %345 {offsets = [0, 96], sizes = [2, 32], strides = [1, 1]} : vector<2x128xf32> to vector<2x32xf32>
    %350 = arith.mulf %347, %307 : vector<2x32xf32>
    %351 = arith.mulf %346, %348 : vector<2x32xf32>
    %352 = arith.addf %350, %351 : vector<2x32xf32>
    %353 = math.tanh %352 : vector<2x32xf32>
    %354 = arith.mulf %349, %353 : vector<2x32xf32>
    %cst_54 = arith.constant dense<0.000000e+00> : vector<2x128xf32>
    %355 = tpu.matmul %354, %4, %cst_54 {dimension_numbers = #tpu.dot_dimension_numbers<[1], [0], [0], [1], [0, 0, 1, 1], [], []>} : vector<2x32xf32>, vector<32x128xf32>, vector<2x128xf32> -> vector<2x128xf32>
    %cst_55 = arith.constant dense<0.000000e+00> : vector<2x128xf32>
    %356 = tpu.matmul %330, %5, %cst_55 {dimension_numbers = #tpu.dot_dimension_numbers<[1], [0], [0], [1], [0, 0, 1, 1], [], []>} : vector<2x32xf32>, vector<32x128xf32>, vector<2x128xf32> -> vector<2x128xf32>
    %357 = arith.addf %355, %356 : vector<2x128xf32>
    %358 = vector.broadcast %6 : vector<1x128xf32> to vector<2x128xf32>
    %359 = arith.addf %357, %358 : vector<2x128xf32>
    %360 = math.tanh %359 : vector<2x128xf32>
    %361 = arith.negf %359 : vector<2x128xf32>
    %362 = math.exp %361 : vector<2x128xf32>
    %cst_56 = arith.constant 1.000000e+00 : f32
    %363 = vector.broadcast %cst_56 : f32 to vector<2x128xf32>
    %364 = arith.addf %363, %362 : vector<2x128xf32>
    %365 = arith.divf %363, %364 : vector<2x128xf32>
    %366 = arith.select %14, %360, %365 : vector<2x128xi1>, vector<2x128xf32>
    %367 = vector.extract_strided_slice %366 {offsets = [0, 0], sizes = [2, 32], strides = [1, 1]} : vector<2x128xf32> to vector<2x32xf32>
    %368 = vector.extract_strided_slice %366 {offsets = [0, 32], sizes = [2, 32], strides = [1, 1]} : vector<2x128xf32> to vector<2x32xf32>
    %369 = vector.extract_strided_slice %366 {offsets = [0, 64], sizes = [2, 32], strides = [1, 1]} : vector<2x128xf32> to vector<2x32xf32>
    %370 = vector.extract_strided_slice %366 {offsets = [0, 96], sizes = [2, 32], strides = [1, 1]} : vector<2x128xf32> to vector<2x32xf32>
    %371 = arith.mulf %368, %328 : vector<2x32xf32>
    %372 = arith.mulf %367, %369 : vector<2x32xf32>
    %373 = arith.addf %371, %372 : vector<2x32xf32>
    %374 = math.tanh %373 : vector<2x32xf32>
    %375 = arith.mulf %370, %374 : vector<2x32xf32>
    %376 = vector.extract_strided_slice %0 {offsets = [0, 8], sizes = [2, 1], strides = [1, 1]} : vector<2x16xf32> to vector<2x1xf32>
    %377 = vector.broadcast %376 : vector<2x1xf32> to vector<2x128xf32>
    %378 = vector.broadcast %1 : vector<1x128xf32> to vector<2x128xf32>
    %379 = arith.mulf %377, %378 : vector<2x128xf32>
    %cst_57 = arith.constant dense<0.000000e+00> : vector<2x128xf32>
    %380 = tpu.matmul %354, %2, %cst_57 {dimension_numbers = #tpu.dot_dimension_numbers<[1], [0], [0], [1], [0, 0, 1, 1], [], []>} : vector<2x32xf32>, vector<32x128xf32>, vector<2x128xf32> -> vector<2x128xf32>
    %381 = arith.addf %379, %380 : vector<2x128xf32>
    %382 = vector.broadcast %3 : vector<1x128xf32> to vector<2x128xf32>
    %383 = arith.addf %381, %382 : vector<2x128xf32>
    %384 = math.tanh %383 : vector<2x128xf32>
    %385 = arith.negf %383 : vector<2x128xf32>
    %386 = math.exp %385 : vector<2x128xf32>
    %cst_58 = arith.constant 1.000000e+00 : f32
    %387 = vector.broadcast %cst_58 : f32 to vector<2x128xf32>
    %388 = arith.addf %387, %386 : vector<2x128xf32>
    %389 = arith.divf %387, %388 : vector<2x128xf32>
    %390 = arith.select %14, %384, %389 : vector<2x128xi1>, vector<2x128xf32>
    %391 = vector.extract_strided_slice %390 {offsets = [0, 0], sizes = [2, 32], strides = [1, 1]} : vector<2x128xf32> to vector<2x32xf32>
    %392 = vector.extract_strided_slice %390 {offsets = [0, 32], sizes = [2, 32], strides = [1, 1]} : vector<2x128xf32> to vector<2x32xf32>
    %393 = vector.extract_strided_slice %390 {offsets = [0, 64], sizes = [2, 32], strides = [1, 1]} : vector<2x128xf32> to vector<2x32xf32>
    %394 = vector.extract_strided_slice %390 {offsets = [0, 96], sizes = [2, 32], strides = [1, 1]} : vector<2x128xf32> to vector<2x32xf32>
    %395 = arith.mulf %392, %352 : vector<2x32xf32>
    %396 = arith.mulf %391, %393 : vector<2x32xf32>
    %397 = arith.addf %395, %396 : vector<2x32xf32>
    %398 = math.tanh %397 : vector<2x32xf32>
    %399 = arith.mulf %394, %398 : vector<2x32xf32>
    %cst_59 = arith.constant dense<0.000000e+00> : vector<2x128xf32>
    %400 = tpu.matmul %399, %4, %cst_59 {dimension_numbers = #tpu.dot_dimension_numbers<[1], [0], [0], [1], [0, 0, 1, 1], [], []>} : vector<2x32xf32>, vector<32x128xf32>, vector<2x128xf32> -> vector<2x128xf32>
    %cst_60 = arith.constant dense<0.000000e+00> : vector<2x128xf32>
    %401 = tpu.matmul %375, %5, %cst_60 {dimension_numbers = #tpu.dot_dimension_numbers<[1], [0], [0], [1], [0, 0, 1, 1], [], []>} : vector<2x32xf32>, vector<32x128xf32>, vector<2x128xf32> -> vector<2x128xf32>
    %402 = arith.addf %400, %401 : vector<2x128xf32>
    %403 = vector.broadcast %6 : vector<1x128xf32> to vector<2x128xf32>
    %404 = arith.addf %402, %403 : vector<2x128xf32>
    %405 = math.tanh %404 : vector<2x128xf32>
    %406 = arith.negf %404 : vector<2x128xf32>
    %407 = math.exp %406 : vector<2x128xf32>
    %cst_61 = arith.constant 1.000000e+00 : f32
    %408 = vector.broadcast %cst_61 : f32 to vector<2x128xf32>
    %409 = arith.addf %408, %407 : vector<2x128xf32>
    %410 = arith.divf %408, %409 : vector<2x128xf32>
    %411 = arith.select %14, %405, %410 : vector<2x128xi1>, vector<2x128xf32>
    %412 = vector.extract_strided_slice %411 {offsets = [0, 0], sizes = [2, 32], strides = [1, 1]} : vector<2x128xf32> to vector<2x32xf32>
    %413 = vector.extract_strided_slice %411 {offsets = [0, 32], sizes = [2, 32], strides = [1, 1]} : vector<2x128xf32> to vector<2x32xf32>
    %414 = vector.extract_strided_slice %411 {offsets = [0, 64], sizes = [2, 32], strides = [1, 1]} : vector<2x128xf32> to vector<2x32xf32>
    %415 = vector.extract_strided_slice %411 {offsets = [0, 96], sizes = [2, 32], strides = [1, 1]} : vector<2x128xf32> to vector<2x32xf32>
    %416 = arith.mulf %413, %373 : vector<2x32xf32>
    %417 = arith.mulf %412, %414 : vector<2x32xf32>
    %418 = arith.addf %416, %417 : vector<2x32xf32>
    %419 = math.tanh %418 : vector<2x32xf32>
    %420 = arith.mulf %415, %419 : vector<2x32xf32>
    %421 = vector.extract_strided_slice %0 {offsets = [0, 9], sizes = [2, 1], strides = [1, 1]} : vector<2x16xf32> to vector<2x1xf32>
    %422 = vector.broadcast %421 : vector<2x1xf32> to vector<2x128xf32>
    %423 = vector.broadcast %1 : vector<1x128xf32> to vector<2x128xf32>
    %424 = arith.mulf %422, %423 : vector<2x128xf32>
    %cst_62 = arith.constant dense<0.000000e+00> : vector<2x128xf32>
    %425 = tpu.matmul %399, %2, %cst_62 {dimension_numbers = #tpu.dot_dimension_numbers<[1], [0], [0], [1], [0, 0, 1, 1], [], []>} : vector<2x32xf32>, vector<32x128xf32>, vector<2x128xf32> -> vector<2x128xf32>
    %426 = arith.addf %424, %425 : vector<2x128xf32>
    %427 = vector.broadcast %3 : vector<1x128xf32> to vector<2x128xf32>
    %428 = arith.addf %426, %427 : vector<2x128xf32>
    %429 = math.tanh %428 : vector<2x128xf32>
    %430 = arith.negf %428 : vector<2x128xf32>
    %431 = math.exp %430 : vector<2x128xf32>
    %cst_63 = arith.constant 1.000000e+00 : f32
    %432 = vector.broadcast %cst_63 : f32 to vector<2x128xf32>
    %433 = arith.addf %432, %431 : vector<2x128xf32>
    %434 = arith.divf %432, %433 : vector<2x128xf32>
    %435 = arith.select %14, %429, %434 : vector<2x128xi1>, vector<2x128xf32>
    %436 = vector.extract_strided_slice %435 {offsets = [0, 0], sizes = [2, 32], strides = [1, 1]} : vector<2x128xf32> to vector<2x32xf32>
    %437 = vector.extract_strided_slice %435 {offsets = [0, 32], sizes = [2, 32], strides = [1, 1]} : vector<2x128xf32> to vector<2x32xf32>
    %438 = vector.extract_strided_slice %435 {offsets = [0, 64], sizes = [2, 32], strides = [1, 1]} : vector<2x128xf32> to vector<2x32xf32>
    %439 = vector.extract_strided_slice %435 {offsets = [0, 96], sizes = [2, 32], strides = [1, 1]} : vector<2x128xf32> to vector<2x32xf32>
    %440 = arith.mulf %437, %397 : vector<2x32xf32>
    %441 = arith.mulf %436, %438 : vector<2x32xf32>
    %442 = arith.addf %440, %441 : vector<2x32xf32>
    %443 = math.tanh %442 : vector<2x32xf32>
    %444 = arith.mulf %439, %443 : vector<2x32xf32>
    %cst_64 = arith.constant dense<0.000000e+00> : vector<2x128xf32>
    %445 = tpu.matmul %444, %4, %cst_64 {dimension_numbers = #tpu.dot_dimension_numbers<[1], [0], [0], [1], [0, 0, 1, 1], [], []>} : vector<2x32xf32>, vector<32x128xf32>, vector<2x128xf32> -> vector<2x128xf32>
    %cst_65 = arith.constant dense<0.000000e+00> : vector<2x128xf32>
    %446 = tpu.matmul %420, %5, %cst_65 {dimension_numbers = #tpu.dot_dimension_numbers<[1], [0], [0], [1], [0, 0, 1, 1], [], []>} : vector<2x32xf32>, vector<32x128xf32>, vector<2x128xf32> -> vector<2x128xf32>
    %447 = arith.addf %445, %446 : vector<2x128xf32>
    %448 = vector.broadcast %6 : vector<1x128xf32> to vector<2x128xf32>
    %449 = arith.addf %447, %448 : vector<2x128xf32>
    %450 = math.tanh %449 : vector<2x128xf32>
    %451 = arith.negf %449 : vector<2x128xf32>
    %452 = math.exp %451 : vector<2x128xf32>
    %cst_66 = arith.constant 1.000000e+00 : f32
    %453 = vector.broadcast %cst_66 : f32 to vector<2x128xf32>
    %454 = arith.addf %453, %452 : vector<2x128xf32>
    %455 = arith.divf %453, %454 : vector<2x128xf32>
    %456 = arith.select %14, %450, %455 : vector<2x128xi1>, vector<2x128xf32>
    %457 = vector.extract_strided_slice %456 {offsets = [0, 0], sizes = [2, 32], strides = [1, 1]} : vector<2x128xf32> to vector<2x32xf32>
    %458 = vector.extract_strided_slice %456 {offsets = [0, 32], sizes = [2, 32], strides = [1, 1]} : vector<2x128xf32> to vector<2x32xf32>
    %459 = vector.extract_strided_slice %456 {offsets = [0, 64], sizes = [2, 32], strides = [1, 1]} : vector<2x128xf32> to vector<2x32xf32>
    %460 = vector.extract_strided_slice %456 {offsets = [0, 96], sizes = [2, 32], strides = [1, 1]} : vector<2x128xf32> to vector<2x32xf32>
    %461 = arith.mulf %458, %418 : vector<2x32xf32>
    %462 = arith.mulf %457, %459 : vector<2x32xf32>
    %463 = arith.addf %461, %462 : vector<2x32xf32>
    %464 = math.tanh %463 : vector<2x32xf32>
    %465 = arith.mulf %460, %464 : vector<2x32xf32>
    %466 = vector.extract_strided_slice %0 {offsets = [0, 10], sizes = [2, 1], strides = [1, 1]} : vector<2x16xf32> to vector<2x1xf32>
    %467 = vector.broadcast %466 : vector<2x1xf32> to vector<2x128xf32>
    %468 = vector.broadcast %1 : vector<1x128xf32> to vector<2x128xf32>
    %469 = arith.mulf %467, %468 : vector<2x128xf32>
    %cst_67 = arith.constant dense<0.000000e+00> : vector<2x128xf32>
    %470 = tpu.matmul %444, %2, %cst_67 {dimension_numbers = #tpu.dot_dimension_numbers<[1], [0], [0], [1], [0, 0, 1, 1], [], []>} : vector<2x32xf32>, vector<32x128xf32>, vector<2x128xf32> -> vector<2x128xf32>
    %471 = arith.addf %469, %470 : vector<2x128xf32>
    %472 = vector.broadcast %3 : vector<1x128xf32> to vector<2x128xf32>
    %473 = arith.addf %471, %472 : vector<2x128xf32>
    %474 = math.tanh %473 : vector<2x128xf32>
    %475 = arith.negf %473 : vector<2x128xf32>
    %476 = math.exp %475 : vector<2x128xf32>
    %cst_68 = arith.constant 1.000000e+00 : f32
    %477 = vector.broadcast %cst_68 : f32 to vector<2x128xf32>
    %478 = arith.addf %477, %476 : vector<2x128xf32>
    %479 = arith.divf %477, %478 : vector<2x128xf32>
    %480 = arith.select %14, %474, %479 : vector<2x128xi1>, vector<2x128xf32>
    %481 = vector.extract_strided_slice %480 {offsets = [0, 0], sizes = [2, 32], strides = [1, 1]} : vector<2x128xf32> to vector<2x32xf32>
    %482 = vector.extract_strided_slice %480 {offsets = [0, 32], sizes = [2, 32], strides = [1, 1]} : vector<2x128xf32> to vector<2x32xf32>
    %483 = vector.extract_strided_slice %480 {offsets = [0, 64], sizes = [2, 32], strides = [1, 1]} : vector<2x128xf32> to vector<2x32xf32>
    %484 = vector.extract_strided_slice %480 {offsets = [0, 96], sizes = [2, 32], strides = [1, 1]} : vector<2x128xf32> to vector<2x32xf32>
    %485 = arith.mulf %482, %442 : vector<2x32xf32>
    %486 = arith.mulf %481, %483 : vector<2x32xf32>
    %487 = arith.addf %485, %486 : vector<2x32xf32>
    %488 = math.tanh %487 : vector<2x32xf32>
    %489 = arith.mulf %484, %488 : vector<2x32xf32>
    %cst_69 = arith.constant dense<0.000000e+00> : vector<2x128xf32>
    %490 = tpu.matmul %489, %4, %cst_69 {dimension_numbers = #tpu.dot_dimension_numbers<[1], [0], [0], [1], [0, 0, 1, 1], [], []>} : vector<2x32xf32>, vector<32x128xf32>, vector<2x128xf32> -> vector<2x128xf32>
    %cst_70 = arith.constant dense<0.000000e+00> : vector<2x128xf32>
    %491 = tpu.matmul %465, %5, %cst_70 {dimension_numbers = #tpu.dot_dimension_numbers<[1], [0], [0], [1], [0, 0, 1, 1], [], []>} : vector<2x32xf32>, vector<32x128xf32>, vector<2x128xf32> -> vector<2x128xf32>
    %492 = arith.addf %490, %491 : vector<2x128xf32>
    %493 = vector.broadcast %6 : vector<1x128xf32> to vector<2x128xf32>
    %494 = arith.addf %492, %493 : vector<2x128xf32>
    %495 = math.tanh %494 : vector<2x128xf32>
    %496 = arith.negf %494 : vector<2x128xf32>
    %497 = math.exp %496 : vector<2x128xf32>
    %cst_71 = arith.constant 1.000000e+00 : f32
    %498 = vector.broadcast %cst_71 : f32 to vector<2x128xf32>
    %499 = arith.addf %498, %497 : vector<2x128xf32>
    %500 = arith.divf %498, %499 : vector<2x128xf32>
    %501 = arith.select %14, %495, %500 : vector<2x128xi1>, vector<2x128xf32>
    %502 = vector.extract_strided_slice %501 {offsets = [0, 0], sizes = [2, 32], strides = [1, 1]} : vector<2x128xf32> to vector<2x32xf32>
    %503 = vector.extract_strided_slice %501 {offsets = [0, 32], sizes = [2, 32], strides = [1, 1]} : vector<2x128xf32> to vector<2x32xf32>
    %504 = vector.extract_strided_slice %501 {offsets = [0, 64], sizes = [2, 32], strides = [1, 1]} : vector<2x128xf32> to vector<2x32xf32>
    %505 = vector.extract_strided_slice %501 {offsets = [0, 96], sizes = [2, 32], strides = [1, 1]} : vector<2x128xf32> to vector<2x32xf32>
    %506 = arith.mulf %503, %463 : vector<2x32xf32>
    %507 = arith.mulf %502, %504 : vector<2x32xf32>
    %508 = arith.addf %506, %507 : vector<2x32xf32>
    %509 = math.tanh %508 : vector<2x32xf32>
    %510 = arith.mulf %505, %509 : vector<2x32xf32>
    %511 = vector.extract_strided_slice %0 {offsets = [0, 11], sizes = [2, 1], strides = [1, 1]} : vector<2x16xf32> to vector<2x1xf32>
    %512 = vector.broadcast %511 : vector<2x1xf32> to vector<2x128xf32>
    %513 = vector.broadcast %1 : vector<1x128xf32> to vector<2x128xf32>
    %514 = arith.mulf %512, %513 : vector<2x128xf32>
    %cst_72 = arith.constant dense<0.000000e+00> : vector<2x128xf32>
    %515 = tpu.matmul %489, %2, %cst_72 {dimension_numbers = #tpu.dot_dimension_numbers<[1], [0], [0], [1], [0, 0, 1, 1], [], []>} : vector<2x32xf32>, vector<32x128xf32>, vector<2x128xf32> -> vector<2x128xf32>
    %516 = arith.addf %514, %515 : vector<2x128xf32>
    %517 = vector.broadcast %3 : vector<1x128xf32> to vector<2x128xf32>
    %518 = arith.addf %516, %517 : vector<2x128xf32>
    %519 = math.tanh %518 : vector<2x128xf32>
    %520 = arith.negf %518 : vector<2x128xf32>
    %521 = math.exp %520 : vector<2x128xf32>
    %cst_73 = arith.constant 1.000000e+00 : f32
    %522 = vector.broadcast %cst_73 : f32 to vector<2x128xf32>
    %523 = arith.addf %522, %521 : vector<2x128xf32>
    %524 = arith.divf %522, %523 : vector<2x128xf32>
    %525 = arith.select %14, %519, %524 : vector<2x128xi1>, vector<2x128xf32>
    %526 = vector.extract_strided_slice %525 {offsets = [0, 0], sizes = [2, 32], strides = [1, 1]} : vector<2x128xf32> to vector<2x32xf32>
    %527 = vector.extract_strided_slice %525 {offsets = [0, 32], sizes = [2, 32], strides = [1, 1]} : vector<2x128xf32> to vector<2x32xf32>
    %528 = vector.extract_strided_slice %525 {offsets = [0, 64], sizes = [2, 32], strides = [1, 1]} : vector<2x128xf32> to vector<2x32xf32>
    %529 = vector.extract_strided_slice %525 {offsets = [0, 96], sizes = [2, 32], strides = [1, 1]} : vector<2x128xf32> to vector<2x32xf32>
    %530 = arith.mulf %527, %487 : vector<2x32xf32>
    %531 = arith.mulf %526, %528 : vector<2x32xf32>
    %532 = arith.addf %530, %531 : vector<2x32xf32>
    %533 = math.tanh %532 : vector<2x32xf32>
    %534 = arith.mulf %529, %533 : vector<2x32xf32>
    %cst_74 = arith.constant dense<0.000000e+00> : vector<2x128xf32>
    %535 = tpu.matmul %534, %4, %cst_74 {dimension_numbers = #tpu.dot_dimension_numbers<[1], [0], [0], [1], [0, 0, 1, 1], [], []>} : vector<2x32xf32>, vector<32x128xf32>, vector<2x128xf32> -> vector<2x128xf32>
    %cst_75 = arith.constant dense<0.000000e+00> : vector<2x128xf32>
    %536 = tpu.matmul %510, %5, %cst_75 {dimension_numbers = #tpu.dot_dimension_numbers<[1], [0], [0], [1], [0, 0, 1, 1], [], []>} : vector<2x32xf32>, vector<32x128xf32>, vector<2x128xf32> -> vector<2x128xf32>
    %537 = arith.addf %535, %536 : vector<2x128xf32>
    %538 = vector.broadcast %6 : vector<1x128xf32> to vector<2x128xf32>
    %539 = arith.addf %537, %538 : vector<2x128xf32>
    %540 = math.tanh %539 : vector<2x128xf32>
    %541 = arith.negf %539 : vector<2x128xf32>
    %542 = math.exp %541 : vector<2x128xf32>
    %cst_76 = arith.constant 1.000000e+00 : f32
    %543 = vector.broadcast %cst_76 : f32 to vector<2x128xf32>
    %544 = arith.addf %543, %542 : vector<2x128xf32>
    %545 = arith.divf %543, %544 : vector<2x128xf32>
    %546 = arith.select %14, %540, %545 : vector<2x128xi1>, vector<2x128xf32>
    %547 = vector.extract_strided_slice %546 {offsets = [0, 0], sizes = [2, 32], strides = [1, 1]} : vector<2x128xf32> to vector<2x32xf32>
    %548 = vector.extract_strided_slice %546 {offsets = [0, 32], sizes = [2, 32], strides = [1, 1]} : vector<2x128xf32> to vector<2x32xf32>
    %549 = vector.extract_strided_slice %546 {offsets = [0, 64], sizes = [2, 32], strides = [1, 1]} : vector<2x128xf32> to vector<2x32xf32>
    %550 = vector.extract_strided_slice %546 {offsets = [0, 96], sizes = [2, 32], strides = [1, 1]} : vector<2x128xf32> to vector<2x32xf32>
    %551 = arith.mulf %548, %508 : vector<2x32xf32>
    %552 = arith.mulf %547, %549 : vector<2x32xf32>
    %553 = arith.addf %551, %552 : vector<2x32xf32>
    %554 = math.tanh %553 : vector<2x32xf32>
    %555 = arith.mulf %550, %554 : vector<2x32xf32>
    %556 = vector.extract_strided_slice %0 {offsets = [0, 12], sizes = [2, 1], strides = [1, 1]} : vector<2x16xf32> to vector<2x1xf32>
    %557 = vector.broadcast %556 : vector<2x1xf32> to vector<2x128xf32>
    %558 = vector.broadcast %1 : vector<1x128xf32> to vector<2x128xf32>
    %559 = arith.mulf %557, %558 : vector<2x128xf32>
    %cst_77 = arith.constant dense<0.000000e+00> : vector<2x128xf32>
    %560 = tpu.matmul %534, %2, %cst_77 {dimension_numbers = #tpu.dot_dimension_numbers<[1], [0], [0], [1], [0, 0, 1, 1], [], []>} : vector<2x32xf32>, vector<32x128xf32>, vector<2x128xf32> -> vector<2x128xf32>
    %561 = arith.addf %559, %560 : vector<2x128xf32>
    %562 = vector.broadcast %3 : vector<1x128xf32> to vector<2x128xf32>
    %563 = arith.addf %561, %562 : vector<2x128xf32>
    %564 = math.tanh %563 : vector<2x128xf32>
    %565 = arith.negf %563 : vector<2x128xf32>
    %566 = math.exp %565 : vector<2x128xf32>
    %cst_78 = arith.constant 1.000000e+00 : f32
    %567 = vector.broadcast %cst_78 : f32 to vector<2x128xf32>
    %568 = arith.addf %567, %566 : vector<2x128xf32>
    %569 = arith.divf %567, %568 : vector<2x128xf32>
    %570 = arith.select %14, %564, %569 : vector<2x128xi1>, vector<2x128xf32>
    %571 = vector.extract_strided_slice %570 {offsets = [0, 0], sizes = [2, 32], strides = [1, 1]} : vector<2x128xf32> to vector<2x32xf32>
    %572 = vector.extract_strided_slice %570 {offsets = [0, 32], sizes = [2, 32], strides = [1, 1]} : vector<2x128xf32> to vector<2x32xf32>
    %573 = vector.extract_strided_slice %570 {offsets = [0, 64], sizes = [2, 32], strides = [1, 1]} : vector<2x128xf32> to vector<2x32xf32>
    %574 = vector.extract_strided_slice %570 {offsets = [0, 96], sizes = [2, 32], strides = [1, 1]} : vector<2x128xf32> to vector<2x32xf32>
    %575 = arith.mulf %572, %532 : vector<2x32xf32>
    %576 = arith.mulf %571, %573 : vector<2x32xf32>
    %577 = arith.addf %575, %576 : vector<2x32xf32>
    %578 = math.tanh %577 : vector<2x32xf32>
    %579 = arith.mulf %574, %578 : vector<2x32xf32>
    %cst_79 = arith.constant dense<0.000000e+00> : vector<2x128xf32>
    %580 = tpu.matmul %579, %4, %cst_79 {dimension_numbers = #tpu.dot_dimension_numbers<[1], [0], [0], [1], [0, 0, 1, 1], [], []>} : vector<2x32xf32>, vector<32x128xf32>, vector<2x128xf32> -> vector<2x128xf32>
    %cst_80 = arith.constant dense<0.000000e+00> : vector<2x128xf32>
    %581 = tpu.matmul %555, %5, %cst_80 {dimension_numbers = #tpu.dot_dimension_numbers<[1], [0], [0], [1], [0, 0, 1, 1], [], []>} : vector<2x32xf32>, vector<32x128xf32>, vector<2x128xf32> -> vector<2x128xf32>
    %582 = arith.addf %580, %581 : vector<2x128xf32>
    %583 = vector.broadcast %6 : vector<1x128xf32> to vector<2x128xf32>
    %584 = arith.addf %582, %583 : vector<2x128xf32>
    %585 = math.tanh %584 : vector<2x128xf32>
    %586 = arith.negf %584 : vector<2x128xf32>
    %587 = math.exp %586 : vector<2x128xf32>
    %cst_81 = arith.constant 1.000000e+00 : f32
    %588 = vector.broadcast %cst_81 : f32 to vector<2x128xf32>
    %589 = arith.addf %588, %587 : vector<2x128xf32>
    %590 = arith.divf %588, %589 : vector<2x128xf32>
    %591 = arith.select %14, %585, %590 : vector<2x128xi1>, vector<2x128xf32>
    %592 = vector.extract_strided_slice %591 {offsets = [0, 0], sizes = [2, 32], strides = [1, 1]} : vector<2x128xf32> to vector<2x32xf32>
    %593 = vector.extract_strided_slice %591 {offsets = [0, 32], sizes = [2, 32], strides = [1, 1]} : vector<2x128xf32> to vector<2x32xf32>
    %594 = vector.extract_strided_slice %591 {offsets = [0, 64], sizes = [2, 32], strides = [1, 1]} : vector<2x128xf32> to vector<2x32xf32>
    %595 = vector.extract_strided_slice %591 {offsets = [0, 96], sizes = [2, 32], strides = [1, 1]} : vector<2x128xf32> to vector<2x32xf32>
    %596 = arith.mulf %593, %553 : vector<2x32xf32>
    %597 = arith.mulf %592, %594 : vector<2x32xf32>
    %598 = arith.addf %596, %597 : vector<2x32xf32>
    %599 = math.tanh %598 : vector<2x32xf32>
    %600 = arith.mulf %595, %599 : vector<2x32xf32>
    %601 = vector.extract_strided_slice %0 {offsets = [0, 13], sizes = [2, 1], strides = [1, 1]} : vector<2x16xf32> to vector<2x1xf32>
    %602 = vector.broadcast %601 : vector<2x1xf32> to vector<2x128xf32>
    %603 = vector.broadcast %1 : vector<1x128xf32> to vector<2x128xf32>
    %604 = arith.mulf %602, %603 : vector<2x128xf32>
    %cst_82 = arith.constant dense<0.000000e+00> : vector<2x128xf32>
    %605 = tpu.matmul %579, %2, %cst_82 {dimension_numbers = #tpu.dot_dimension_numbers<[1], [0], [0], [1], [0, 0, 1, 1], [], []>} : vector<2x32xf32>, vector<32x128xf32>, vector<2x128xf32> -> vector<2x128xf32>
    %606 = arith.addf %604, %605 : vector<2x128xf32>
    %607 = vector.broadcast %3 : vector<1x128xf32> to vector<2x128xf32>
    %608 = arith.addf %606, %607 : vector<2x128xf32>
    %609 = math.tanh %608 : vector<2x128xf32>
    %610 = arith.negf %608 : vector<2x128xf32>
    %611 = math.exp %610 : vector<2x128xf32>
    %cst_83 = arith.constant 1.000000e+00 : f32
    %612 = vector.broadcast %cst_83 : f32 to vector<2x128xf32>
    %613 = arith.addf %612, %611 : vector<2x128xf32>
    %614 = arith.divf %612, %613 : vector<2x128xf32>
    %615 = arith.select %14, %609, %614 : vector<2x128xi1>, vector<2x128xf32>
    %616 = vector.extract_strided_slice %615 {offsets = [0, 0], sizes = [2, 32], strides = [1, 1]} : vector<2x128xf32> to vector<2x32xf32>
    %617 = vector.extract_strided_slice %615 {offsets = [0, 32], sizes = [2, 32], strides = [1, 1]} : vector<2x128xf32> to vector<2x32xf32>
    %618 = vector.extract_strided_slice %615 {offsets = [0, 64], sizes = [2, 32], strides = [1, 1]} : vector<2x128xf32> to vector<2x32xf32>
    %619 = vector.extract_strided_slice %615 {offsets = [0, 96], sizes = [2, 32], strides = [1, 1]} : vector<2x128xf32> to vector<2x32xf32>
    %620 = arith.mulf %617, %577 : vector<2x32xf32>
    %621 = arith.mulf %616, %618 : vector<2x32xf32>
    %622 = arith.addf %620, %621 : vector<2x32xf32>
    %623 = math.tanh %622 : vector<2x32xf32>
    %624 = arith.mulf %619, %623 : vector<2x32xf32>
    %cst_84 = arith.constant dense<0.000000e+00> : vector<2x128xf32>
    %625 = tpu.matmul %624, %4, %cst_84 {dimension_numbers = #tpu.dot_dimension_numbers<[1], [0], [0], [1], [0, 0, 1, 1], [], []>} : vector<2x32xf32>, vector<32x128xf32>, vector<2x128xf32> -> vector<2x128xf32>
    %cst_85 = arith.constant dense<0.000000e+00> : vector<2x128xf32>
    %626 = tpu.matmul %600, %5, %cst_85 {dimension_numbers = #tpu.dot_dimension_numbers<[1], [0], [0], [1], [0, 0, 1, 1], [], []>} : vector<2x32xf32>, vector<32x128xf32>, vector<2x128xf32> -> vector<2x128xf32>
    %627 = arith.addf %625, %626 : vector<2x128xf32>
    %628 = vector.broadcast %6 : vector<1x128xf32> to vector<2x128xf32>
    %629 = arith.addf %627, %628 : vector<2x128xf32>
    %630 = math.tanh %629 : vector<2x128xf32>
    %631 = arith.negf %629 : vector<2x128xf32>
    %632 = math.exp %631 : vector<2x128xf32>
    %cst_86 = arith.constant 1.000000e+00 : f32
    %633 = vector.broadcast %cst_86 : f32 to vector<2x128xf32>
    %634 = arith.addf %633, %632 : vector<2x128xf32>
    %635 = arith.divf %633, %634 : vector<2x128xf32>
    %636 = arith.select %14, %630, %635 : vector<2x128xi1>, vector<2x128xf32>
    %637 = vector.extract_strided_slice %636 {offsets = [0, 0], sizes = [2, 32], strides = [1, 1]} : vector<2x128xf32> to vector<2x32xf32>
    %638 = vector.extract_strided_slice %636 {offsets = [0, 32], sizes = [2, 32], strides = [1, 1]} : vector<2x128xf32> to vector<2x32xf32>
    %639 = vector.extract_strided_slice %636 {offsets = [0, 64], sizes = [2, 32], strides = [1, 1]} : vector<2x128xf32> to vector<2x32xf32>
    %640 = vector.extract_strided_slice %636 {offsets = [0, 96], sizes = [2, 32], strides = [1, 1]} : vector<2x128xf32> to vector<2x32xf32>
    %641 = arith.mulf %638, %598 : vector<2x32xf32>
    %642 = arith.mulf %637, %639 : vector<2x32xf32>
    %643 = arith.addf %641, %642 : vector<2x32xf32>
    %644 = math.tanh %643 : vector<2x32xf32>
    %645 = arith.mulf %640, %644 : vector<2x32xf32>
    %646 = vector.extract_strided_slice %0 {offsets = [0, 14], sizes = [2, 1], strides = [1, 1]} : vector<2x16xf32> to vector<2x1xf32>
    %647 = vector.broadcast %646 : vector<2x1xf32> to vector<2x128xf32>
    %648 = vector.broadcast %1 : vector<1x128xf32> to vector<2x128xf32>
    %649 = arith.mulf %647, %648 : vector<2x128xf32>
    %cst_87 = arith.constant dense<0.000000e+00> : vector<2x128xf32>
    %650 = tpu.matmul %624, %2, %cst_87 {dimension_numbers = #tpu.dot_dimension_numbers<[1], [0], [0], [1], [0, 0, 1, 1], [], []>} : vector<2x32xf32>, vector<32x128xf32>, vector<2x128xf32> -> vector<2x128xf32>
    %651 = arith.addf %649, %650 : vector<2x128xf32>
    %652 = vector.broadcast %3 : vector<1x128xf32> to vector<2x128xf32>
    %653 = arith.addf %651, %652 : vector<2x128xf32>
    %654 = math.tanh %653 : vector<2x128xf32>
    %655 = arith.negf %653 : vector<2x128xf32>
    %656 = math.exp %655 : vector<2x128xf32>
    %cst_88 = arith.constant 1.000000e+00 : f32
    %657 = vector.broadcast %cst_88 : f32 to vector<2x128xf32>
    %658 = arith.addf %657, %656 : vector<2x128xf32>
    %659 = arith.divf %657, %658 : vector<2x128xf32>
    %660 = arith.select %14, %654, %659 : vector<2x128xi1>, vector<2x128xf32>
    %661 = vector.extract_strided_slice %660 {offsets = [0, 0], sizes = [2, 32], strides = [1, 1]} : vector<2x128xf32> to vector<2x32xf32>
    %662 = vector.extract_strided_slice %660 {offsets = [0, 32], sizes = [2, 32], strides = [1, 1]} : vector<2x128xf32> to vector<2x32xf32>
    %663 = vector.extract_strided_slice %660 {offsets = [0, 64], sizes = [2, 32], strides = [1, 1]} : vector<2x128xf32> to vector<2x32xf32>
    %664 = vector.extract_strided_slice %660 {offsets = [0, 96], sizes = [2, 32], strides = [1, 1]} : vector<2x128xf32> to vector<2x32xf32>
    %665 = arith.mulf %662, %622 : vector<2x32xf32>
    %666 = arith.mulf %661, %663 : vector<2x32xf32>
    %667 = arith.addf %665, %666 : vector<2x32xf32>
    %668 = math.tanh %667 : vector<2x32xf32>
    %669 = arith.mulf %664, %668 : vector<2x32xf32>
    %cst_89 = arith.constant dense<0.000000e+00> : vector<2x128xf32>
    %670 = tpu.matmul %669, %4, %cst_89 {dimension_numbers = #tpu.dot_dimension_numbers<[1], [0], [0], [1], [0, 0, 1, 1], [], []>} : vector<2x32xf32>, vector<32x128xf32>, vector<2x128xf32> -> vector<2x128xf32>
    %cst_90 = arith.constant dense<0.000000e+00> : vector<2x128xf32>
    %671 = tpu.matmul %645, %5, %cst_90 {dimension_numbers = #tpu.dot_dimension_numbers<[1], [0], [0], [1], [0, 0, 1, 1], [], []>} : vector<2x32xf32>, vector<32x128xf32>, vector<2x128xf32> -> vector<2x128xf32>
    %672 = arith.addf %670, %671 : vector<2x128xf32>
    %673 = vector.broadcast %6 : vector<1x128xf32> to vector<2x128xf32>
    %674 = arith.addf %672, %673 : vector<2x128xf32>
    %675 = math.tanh %674 : vector<2x128xf32>
    %676 = arith.negf %674 : vector<2x128xf32>
    %677 = math.exp %676 : vector<2x128xf32>
    %cst_91 = arith.constant 1.000000e+00 : f32
    %678 = vector.broadcast %cst_91 : f32 to vector<2x128xf32>
    %679 = arith.addf %678, %677 : vector<2x128xf32>
    %680 = arith.divf %678, %679 : vector<2x128xf32>
    %681 = arith.select %14, %675, %680 : vector<2x128xi1>, vector<2x128xf32>
    %682 = vector.extract_strided_slice %681 {offsets = [0, 0], sizes = [2, 32], strides = [1, 1]} : vector<2x128xf32> to vector<2x32xf32>
    %683 = vector.extract_strided_slice %681 {offsets = [0, 32], sizes = [2, 32], strides = [1, 1]} : vector<2x128xf32> to vector<2x32xf32>
    %684 = vector.extract_strided_slice %681 {offsets = [0, 64], sizes = [2, 32], strides = [1, 1]} : vector<2x128xf32> to vector<2x32xf32>
    %685 = vector.extract_strided_slice %681 {offsets = [0, 96], sizes = [2, 32], strides = [1, 1]} : vector<2x128xf32> to vector<2x32xf32>
    %686 = arith.mulf %683, %643 : vector<2x32xf32>
    %687 = arith.mulf %682, %684 : vector<2x32xf32>
    %688 = arith.addf %686, %687 : vector<2x32xf32>
    %689 = math.tanh %688 : vector<2x32xf32>
    %690 = arith.mulf %685, %689 : vector<2x32xf32>
    %691 = vector.extract_strided_slice %0 {offsets = [0, 15], sizes = [2, 1], strides = [1, 1]} : vector<2x16xf32> to vector<2x1xf32>
    %692 = vector.broadcast %691 : vector<2x1xf32> to vector<2x128xf32>
    %693 = vector.broadcast %1 : vector<1x128xf32> to vector<2x128xf32>
    %694 = arith.mulf %692, %693 : vector<2x128xf32>
    %cst_92 = arith.constant dense<0.000000e+00> : vector<2x128xf32>
    %695 = tpu.matmul %669, %2, %cst_92 {dimension_numbers = #tpu.dot_dimension_numbers<[1], [0], [0], [1], [0, 0, 1, 1], [], []>} : vector<2x32xf32>, vector<32x128xf32>, vector<2x128xf32> -> vector<2x128xf32>
    %696 = arith.addf %694, %695 : vector<2x128xf32>
    %697 = vector.broadcast %3 : vector<1x128xf32> to vector<2x128xf32>
    %698 = arith.addf %696, %697 : vector<2x128xf32>
    %699 = math.tanh %698 : vector<2x128xf32>
    %700 = arith.negf %698 : vector<2x128xf32>
    %701 = math.exp %700 : vector<2x128xf32>
    %cst_93 = arith.constant 1.000000e+00 : f32
    %702 = vector.broadcast %cst_93 : f32 to vector<2x128xf32>
    %703 = arith.addf %702, %701 : vector<2x128xf32>
    %704 = arith.divf %702, %703 : vector<2x128xf32>
    %705 = arith.select %14, %699, %704 : vector<2x128xi1>, vector<2x128xf32>
    %706 = vector.extract_strided_slice %705 {offsets = [0, 0], sizes = [2, 32], strides = [1, 1]} : vector<2x128xf32> to vector<2x32xf32>
    %707 = vector.extract_strided_slice %705 {offsets = [0, 32], sizes = [2, 32], strides = [1, 1]} : vector<2x128xf32> to vector<2x32xf32>
    %708 = vector.extract_strided_slice %705 {offsets = [0, 64], sizes = [2, 32], strides = [1, 1]} : vector<2x128xf32> to vector<2x32xf32>
    %709 = vector.extract_strided_slice %705 {offsets = [0, 96], sizes = [2, 32], strides = [1, 1]} : vector<2x128xf32> to vector<2x32xf32>
    %710 = arith.mulf %707, %667 : vector<2x32xf32>
    %711 = arith.mulf %706, %708 : vector<2x32xf32>
    %712 = arith.addf %710, %711 : vector<2x32xf32>
    %713 = math.tanh %712 : vector<2x32xf32>
    %714 = arith.mulf %709, %713 : vector<2x32xf32>
    %cst_94 = arith.constant dense<0.000000e+00> : vector<2x128xf32>
    %715 = tpu.matmul %714, %4, %cst_94 {dimension_numbers = #tpu.dot_dimension_numbers<[1], [0], [0], [1], [0, 0, 1, 1], [], []>} : vector<2x32xf32>, vector<32x128xf32>, vector<2x128xf32> -> vector<2x128xf32>
    %cst_95 = arith.constant dense<0.000000e+00> : vector<2x128xf32>
    %716 = tpu.matmul %690, %5, %cst_95 {dimension_numbers = #tpu.dot_dimension_numbers<[1], [0], [0], [1], [0, 0, 1, 1], [], []>} : vector<2x32xf32>, vector<32x128xf32>, vector<2x128xf32> -> vector<2x128xf32>
    %717 = arith.addf %715, %716 : vector<2x128xf32>
    %718 = vector.broadcast %6 : vector<1x128xf32> to vector<2x128xf32>
    %719 = arith.addf %717, %718 : vector<2x128xf32>
    %720 = math.tanh %719 : vector<2x128xf32>
    %721 = arith.negf %719 : vector<2x128xf32>
    %722 = math.exp %721 : vector<2x128xf32>
    %cst_96 = arith.constant 1.000000e+00 : f32
    %723 = vector.broadcast %cst_96 : f32 to vector<2x128xf32>
    %724 = arith.addf %723, %722 : vector<2x128xf32>
    %725 = arith.divf %723, %724 : vector<2x128xf32>
    %726 = arith.select %14, %720, %725 : vector<2x128xi1>, vector<2x128xf32>
    %727 = vector.extract_strided_slice %726 {offsets = [0, 0], sizes = [2, 32], strides = [1, 1]} : vector<2x128xf32> to vector<2x32xf32>
    %728 = vector.extract_strided_slice %726 {offsets = [0, 32], sizes = [2, 32], strides = [1, 1]} : vector<2x128xf32> to vector<2x32xf32>
    %729 = vector.extract_strided_slice %726 {offsets = [0, 64], sizes = [2, 32], strides = [1, 1]} : vector<2x128xf32> to vector<2x32xf32>
    %730 = vector.extract_strided_slice %726 {offsets = [0, 96], sizes = [2, 32], strides = [1, 1]} : vector<2x128xf32> to vector<2x32xf32>
    %731 = arith.mulf %728, %688 : vector<2x32xf32>
    %732 = arith.mulf %727, %729 : vector<2x32xf32>
    %733 = arith.addf %731, %732 : vector<2x32xf32>
    %734 = math.tanh %733 : vector<2x32xf32>
    %735 = arith.mulf %730, %734 : vector<2x32xf32>
    %736 = vector.broadcast %7 : vector<1x32xf32> to vector<2x32xf32>
    %737 = arith.mulf %735, %736 : vector<2x32xf32>
    %cst_97 = arith.constant dense<0.000000e+00> : vector<2xf32>
    %738 = vector.multi_reduction <add>, %737, %cst_97 [1] : vector<2x32xf32> to vector<2xf32>
    %739 = vector.shape_cast %738 : vector<2xf32> to vector<2x1xf32>
    %740 = vector.broadcast %8 : vector<1x1xf32> to vector<2x1xf32>
    %741 = arith.addf %739, %740 : vector<2x1xf32>
    %742 = arith.negf %741 : vector<2x1xf32>
    %743 = math.exp %742 : vector<2x1xf32>
    %cst_98 = arith.constant 1.000000e+00 : f32
    %744 = vector.broadcast %cst_98 : f32 to vector<2x1xf32>
    %745 = arith.addf %744, %743 : vector<2x1xf32>
    %746 = arith.divf %744, %745 : vector<2x1xf32>
    %c0_99 = arith.constant 0 : index
    %c0_100 = arith.constant 0 : index
    %747 = vector.load %arg9[%c0_99, %c0_100] : memref<2x1xf32, #tpu.memory_space<vmem>>, vector<2x1xf32>
    tpu.vector_store %arg9[%c0_99, %c0_100], %746 {strides = array<i32>} : memref<2x1xf32, #tpu.memory_space<vmem>>, vector<2x1xf32>,
    return
  }
}

</mosaic_0001>

<llo_original>
// kernel: tpu_custom_call.1
$region0: #{tpu_custom_call.1}
  #allocation0 [shape = 'u32[]', space=smem, size = 0x4, offset = 0x4, fixed_abs, tag = 'smem constant byte address 0x4 - core index']
  #allocation1 [shape = 'u32[144,128]{1,0:T(1,128)}', space=vmem, size = 0x12000, scoped, tag = 'internal scratch']
  #allocation2 [shape = 'f32[1,1]{1,0:T(1,128)S(1)}', space=vmem, size = 0x200, scoped, tag = 'scoped memory for tpu_custom_call.1']
  %s0 = inlined_call_operand.vmem [shape: f32[2,16], index: 0, kind: input, shape index: {}]
  %s1 = inlined_call_operand.vmem [shape: f32[1,128], index: 1, kind: input, shape index: {}]
  %s2 = inlined_call_operand.hbm [shape: f32[32,128], index: 2, kind: input, shape index: {}]
  %s3 = inlined_call_operand.vmem [shape: f32[1,128], index: 3, kind: input, shape index: {}]
  %s4 = inlined_call_operand.hbm [shape: f32[32,128], index: 4, kind: input, shape index: {}]
  %s5 = inlined_call_operand.hbm [shape: f32[32,128], index: 5, kind: input, shape index: {}]
  %s6 = inlined_call_operand.vmem [shape: f32[1,128], index: 6, kind: input, shape index: {}]
  %s7 = inlined_call_operand.vmem [shape: f32[1,32], index: 7, kind: input, shape index: {}]
  %s8 = inlined_call_operand.<no memory space> [shape: f32[1,1], index: 8, kind: input, shape index: {}]
  %s9 = inlined_call_operand.vmem [shape: f32[2,1], index: 9, kind: output, shape index: {}]
  %s10 = sld [smem:[#allocation0]]
  $region58: #{tpu_custom_call.1} parent=0
    _
  %s12 = ssub.s32 1, %s10
  %s13 = scalar_select 0, %s12, %s10
  %v14 = vstv %s8
  %15 = vst [vmem:[#allocation2] sm:$0x1] %v14
  $region1: #{tpu_custom_call.1} parent=0
    #allocation3 [shape = 'u8[16384]{0}', space=vmem, size = 0x4000, scoped, tag = 'input window, operand 2, single buffered']
    #allocation4 [shape = 's32[1]{0}', space=sflag, size = 0x4, scoped, tag = 'scoped memory for tpu_custom_call.1']
    #allocation5 [shape = 'u8[16384]{0}', space=vmem, size = 0x4000, scoped, tag = 'input window, operand 4, single buffered']
    #allocation6 [shape = 's32[1]{0}', space=sflag, size = 0x4, scoped, tag = 'scoped memory for tpu_custom_call.1']
    #allocation7 [shape = 'u8[16384]{0}', space=vmem, size = 0x4000, scoped, tag = 'input window, operand 5, single buffered']
    %16 = vsyncpa [#allocation4], 0
    %17 = vsyncpa [#allocation6], 0
    // Predicated region
    $region2: #{tpu_custom_call.1} parent=1 // pred_check
      _
    $region3: #{tpu_custom_call.1} parent=1 // pred_check_branch
      %19 = sbr.rel (0) target = $region5
    $region4: #{tpu_custom_call.1} parent=1 // pred_region
      _
    $region5: #{tpu_custom_call.1} parent=1 // pred_fallthru
      _
    // Predicated region
    $region6: #{tpu_custom_call.1} parent=1 // pred_check
      _
    $region7: #{tpu_custom_call.1} parent=1 // pred_check_branch
      %21 = sbr.rel (0) target = $region9
    $region8: #{tpu_custom_call.1} parent=1 // pred_region
      _
    $region9: #{tpu_custom_call.1} parent=1 // pred_fallthru
      _
    // Predicated region
    $region10: #{tpu_custom_call.1} parent=1 // pred_check
      _
    $region11: #{tpu_custom_call.1} parent=1 // pred_check_branch
      %23 = sbr.rel (0) target = $region13
    $region12: #{tpu_custom_call.1} parent=1 // pred_region
      %s25 = ssub.s32 512, 512
      %26 = vsyncadd [#allocation4], %s25
      %s27 = sshll.u32 [#allocation3], 4
      %s28 = int_to_ptr.vmem [resolvable:$true] %s27
      %33 = dma.hbm_to_vmem [thread:$0]  %s2, 512, %s28, [#allocation4], 128, 128, 8
    $region13: #{tpu_custom_call.1} parent=1 // pred_fallthru
      _
    // Predicated region
    $region14: #{tpu_custom_call.1} parent=1 // pred_check
      _
    $region15: #{tpu_custom_call.1} parent=1 // pred_check_branch
      %35 = sbr.rel (0) target = $region17
    $region16: #{tpu_custom_call.1} parent=1 // pred_region
      _
    $region17: #{tpu_custom_call.1} parent=1 // pred_fallthru
      _
    // Predicated region
    $region18: #{tpu_custom_call.1} parent=1 // pred_check
      _
    $region19: #{tpu_custom_call.1} parent=1 // pred_check_branch
      %37 = sbr.rel (0) target = $region21
    $region20: #{tpu_custom_call.1} parent=1 // pred_region
      %s39 = ssub.s32 512, 512
      %40 = vsyncadd [#allocation6], %s39
      %s41 = sshll.u32 [#allocation5], 4
      %s42 = int_to_ptr.vmem [resolvable:$true] %s41
      %47 = dma.hbm_to_vmem [thread:$0]  %s4, 512, %s42, [#allocation6], 128, 128, 8
    $region21: #{tpu_custom_call.1} parent=1 // pred_fallthru
      _
    // Predicated region
    $region22: #{tpu_custom_call.1} parent=1 // pred_check
      _
    $region23: #{tpu_custom_call.1} parent=1 // pred_check_branch
      %49 = sbr.rel (0) target = $region25
    $region24: #{tpu_custom_call.1} parent=1 // pred_region
      %s51 = ssub.s32 512, 512
      %52 = vsyncadd [#allocation6], %s51
      %s53 = sshll.u32 [#allocation7], 4
      %s54 = int_to_ptr.vmem [resolvable:$true] %s53
      %59 = dma.hbm_to_vmem [thread:$0]  %s5, 512, %s54, [#allocation6], 128, 128, 8
    $region25: #{tpu_custom_call.1} parent=1 // pred_fallthru
      _
    // Predicated region
    $region26: #{tpu_custom_call.1} parent=1 // pred_check
      _
    $region27: #{tpu_custom_call.1} parent=1 // pred_check_branch
      %61 = sbr.rel (0) target = $region29
    $region28: #{tpu_custom_call.1} parent=1 // pred_region
      _
    $region29: #{tpu_custom_call.1} parent=1 // pred_fallthru
      _
    // Predicated region
    $region30: #{tpu_custom_call.1} parent=1 // pred_check
      _
    $region31: #{tpu_custom_call.1} parent=1 // pred_check_branch
      %63 = sbr.rel (0) target = $region33
    $region32: #{tpu_custom_call.1} parent=1 // pred_region
      _
    $region33: #{tpu_custom_call.1} parent=1 // pred_fallthru
      _
    // Predicated region
    $region34: #{tpu_custom_call.1} parent=1 // pred_check
      _
    $region35: #{tpu_custom_call.1} parent=1 // pred_check_branch
      %65 = sbr.rel (0) target = $region37
    $region36: #{tpu_custom_call.1} parent=1 // pred_region
      _
    $region37: #{tpu_custom_call.1} parent=1 // pred_fallthru
      _
    // Predicated region
    $region38: #{tpu_custom_call.1} parent=1 // pred_check
      _
    $region39: #{tpu_custom_call.1} parent=1 // pred_check_branch
      %67 = sbr.rel (0) target = $region41
    $region40: #{tpu_custom_call.1} parent=1 // pred_region
      %68 = dma.done [#allocation4], 512
    $region41: #{tpu_custom_call.1} parent=1 // pred_fallthru
      _
    // Predicated region
    $region42: #{tpu_custom_call.1} parent=1 // pred_check
      _
    $region43: #{tpu_custom_call.1} parent=1 // pred_check_branch
      %70 = sbr.rel (0) target = $region45
    $region44: #{tpu_custom_call.1} parent=1 // pred_region
      %71 = dma.done [#allocation6], 512
    $region45: #{tpu_custom_call.1} parent=1 // pred_fallthru
      _
    // Predicated region
    $region46: #{tpu_custom_call.1} parent=1 // pred_check
      _
    $region47: #{tpu_custom_call.1} parent=1 // pred_check_branch
      %73 = sbr.rel (0) target = $region49
    $region48: #{tpu_custom_call.1} parent=1 // pred_region
      %74 = dma.done [#allocation6], 512
    $region49: #{tpu_custom_call.1} parent=1 // pred_fallthru
      _
    %v75 = vld [vmem:[%s0] sm:$0x3]
    %v76 = vld [vmem:[%s1] sm:$0x1]
    %v77 = vld [vmem:[#allocation3] sm:$0xff]
    %v78 = vld [vmem:[#allocation3 + $0x8] sm:$0xff]
    %v79 = vld [vmem:[#allocation3 + $0x10] sm:$0xff]
    %v80 = vld [vmem:[#allocation3 + $0x18] sm:$0xff]
    %v81 = vld [vmem:[%s3] sm:$0x1]
    %v82 = vld [vmem:[#allocation5] sm:$0xff]
    %v83 = vld [vmem:[#allocation5 + $0x8] sm:$0xff]
    %v84 = vld [vmem:[#allocation5 + $0x10] sm:$0xff]
    %v85 = vld [vmem:[#allocation5 + $0x18] sm:$0xff]
    %v86 = vld [vmem:[#allocation7] sm:$0xff]
    %v87 = vld [vmem:[#allocation7 + $0x8] sm:$0xff]
    %v88 = vld [vmem:[#allocation7 + $0x10] sm:$0xff]
    %v89 = vld [vmem:[#allocation7 + $0x18] sm:$0xff]
    %v90 = vld [vmem:[%s6] sm:$0x1]
    %v91 = vld [vmem:[%s7] sm:$0x1]
    %v92 = vld [vmem:[#allocation2] sm:$0x1]
    %v93 = vlaneseq
    %v94 = vand.u32 %v93, 127
    %vm95 = vcmp.ge.s32.totalorder %v94, 64
    %vm96 = vcmp.lt.s32.totalorder %v94, 96
    %vm97 = vmand %vm95, %vm96
    %99 = vset.pattern.permute.xlu0 0
    %100 = vperm.xlu0 %99, %v75
    %v101 = vpop.permute.xlu0 %100
    %v104 = vlaneseq
    %v105 = vshrl.u32 %v104, 7
    %v106 = vsub.s32 0, %v105
    %v107 = vrot.slane %v76, %v106
    %v109 = vmul.f32 %v101, %v107
    %vm110 = vcmask 261120
    %v112 = vsel %vm110, 0.0, 0
    %114 = vmatprep.subr.mxu0 0.0
    %115 = vmatpush1.msra.mxu0 %v77
    %116 = vmatprep.subr.mxu0 0.0
    %117 = vmatpush1.msra.mxu0 %v78
    %118 = vmatprep.subr.mxu0 0.0
    %119 = vmatpush1.msra.mxu0 %v79
    %120 = vmatprep.subr.mxu0 0.0
    %121 = vmatpush1.msra.mxu0 %v80
    %122 = vmatprep.subr.mxu0 0.0
    %123 = vmatpush1.msra.mxu0 0.0
    %124 = vmatprep.subr.mxu0 0.0
    %125 = vmatpush1.msra.mxu0 0.0
    %126 = vmatprep.subr.mxu0 0.0
    %127 = vmatpush1.msra.mxu0 0.0
    %128 = vmatprep.subr.mxu0 0.0
    %129 = vmatpush1.msra.mxu0 0.0
    %130 = vmatprep.subr.mxu0 0.0
    %131 = vmatpush1.msra.mxu0 0.0
    %132 = vmatprep.subr.mxu0 0.0
    %133 = vmatpush1.msra.mxu0 0.0
    %134 = vmatprep.subr.mxu0 0.0
    %135 = vmatpush1.msra.mxu0 0.0
    %136 = vmatprep.subr.mxu0 0.0
    %137 = vmatpush1.msra.mxu0 0.0
    %138 = vmatprep.subr.mxu0 0.0
    %139 = vmatpush1.msra.mxu0 0.0
    %140 = vmatprep.subr.mxu0 0.0
    %141 = vmatpush1.msra.mxu0 0.0
    %142 = vmatprep.subr.mxu0 0.0
    %143 = vmatpush1.msra.mxu0 0.0
    %144 = vmatprep.subr.mxu0 0.0
    %145 = vmatpush1.msra.mxu0 0.0
    %146 = vmatprep.subr.mxu0 0.0
    %147 = vmatpush1.msra.mxu0 0.0
    %148 = vmatprep.subr.mxu0 0.0
    %149 = vmatpush1.msra.mxu0 0.0
    %150 = vmatprep.subr.mxu0 0.0
    %151 = vmatpush1.msra.mxu0 0.0
    %152 = vmatprep.subr.mxu0 0.0
    %153 = vmatpush1.msra.mxu0 0.0
    %154 = vmatprep.subr.mxu0 0.0
    %155 = vmatpush1.msra.mxu0 0.0
    %156 = vmatprep.subr.mxu0 0.0
    %157 = vmatpush1.msra.mxu0 0.0
    %158 = vmatprep.subr.mxu0 0.0
    %159 = vmatpush1.msra.mxu0 0.0
    %160 = vmatprep.subr.mxu0 0.0
    %161 = vmatpush1.msra.mxu0 0.0
    %162 = vmatprep.subr.mxu0 0.0
    %163 = vmatpush1.msra.mxu0 0.0
    %164 = vmatprep.subr.mxu0 0.0
    %165 = vmatpush1.msra.mxu0 0.0
    %166 = vmatprep.subr.mxu0 0.0
    %167 = vmatpush1.msra.mxu0 0.0
    %168 = vmatprep.subr.mxu0 0.0
    %169 = vmatpush1.msra.mxu0 0.0
    %170 = vmatprep.subr.mxu0 0.0
    %171 = vmatpush1.msra.mxu0 0.0
    %172 = vmatprep.subr.mxu0 0.0
    %173 = vmatpush1.msra.mxu0 0.0
    %174 = vmatprep.subr.mxu0 0.0
    %175 = vmatpush1.msra.mxu0 0.0
    %176 = vmatprep.subr.mxu0 0.0
    %177 = vmatpush1.msra.mxu0 0.0
    %178 = vmatprep.mubr.f32.mxu0 0.0
    %179 = vmatmul.mubr.f32.gmra.mrb[0].mxu0 %v112
    %v180 = vpop.f32.mrb[0].mxu0
    %v181 = vadd.f32 0.0, %v180
    %v182 = vpop.f32.mrb[0].mxu0
    %183 = vdwg.mxu0
    %v184 = vadd.f32 %v109, %v181
    %v186 = vlaneseq
    %v187 = vshrl.u32 %v186, 7
    %v188 = vsub.s32 0, %v187
    %v189 = vrot.slane %v81, %v188
    %v191 = vadd.f32 %v184, %v189
    %v192 = vtanh.pop %v191
    %v193 = vxor.u32 %v191, 2147483648
    %v194 = vmul.f32 %v193, 1.442695
    %v195 = vpow.pop %v194
    %v196 = vadd.f32 %v195, 1.0
    %v197 = vrcp.pop %v196
    %v198 = vmul.f32 1.0, %v197
    %v199 = vsel %vm97, %v192, %v198
    %v200 = vmul.f32 %v199, 0.0
    %202 = vrot.lane.b32.xlu0 %v199, 64
    %v203 = vpop.permute.xlu0 %202
    %v205 = vmul.f32 %v199, %v203
    %207 = vrot.lane.b32.xlu0 %v205, 32
    %v208 = vpop.permute.xlu0 %207
    %v210 = vadd.f32 %v200, %v208
    %v211 = vtanh.pop %v210
    %213 = vrot.lane.b32.xlu0 %v211, 64
    %v214 = vpop.permute.xlu0 %213
    %v216 = vmul.f32 %v199, %v214
    %217 = vmatprep.subr.mxu0 0.0
    %218 = vmatpush1.msra.mxu0 %v86
    %219 = vmatprep.subr.mxu0 0.0
    %220 = vmatpush1.msra.mxu0 %v87
    %221 = vmatprep.subr.mxu0 0.0
    %222 = vmatpush1.msra.mxu0 %v88
    %223 = vmatprep.subr.mxu0 0.0
    %224 = vmatpush1.msra.mxu0 %v89
    %225 = vmatprep.subr.mxu0 0.0
    %226 = vmatpush1.msra.mxu0 0.0
    %227 = vmatprep.subr.mxu0 0.0
    %228 = vmatpush1.msra.mxu0 0.0
    %229 = vmatprep.subr.mxu0 0.0
    %230 = vmatpush1.msra.mxu0 0.0
    %231 = vmatprep.subr.mxu0 0.0
    %232 = vmatpush1.msra.mxu0 0.0
    %233 = vmatprep.subr.mxu0 0.0
    %234 = vmatpush1.msra.mxu0 0.0
    %235 = vmatprep.subr.mxu0 0.0
    %236 = vmatpush1.msra.mxu0 0.0
    %237 = vmatprep.subr.mxu0 0.0
    %238 = vmatpush1.msra.mxu0 0.0
    %239 = vmatprep.subr.mxu0 0.0
    %240 = vmatpush1.msra.mxu0 0.0
    %241 = vmatprep.subr.mxu0 0.0
    %242 = vmatpush1.msra.mxu0 0.0
    %243 = vmatprep.subr.mxu0 0.0
    %244 = vmatpush1.msra.mxu0 0.0
    %245 = vmatprep.subr.mxu0 0.0
    %246 = vmatpush1.msra.mxu0 0.0
    %247 = vmatprep.subr.mxu0 0.0
    %248 = vmatpush1.msra.mxu0 0.0
    %249 = vmatprep.subr.mxu0 0.0
    %250 = vmatpush1.msra.mxu0 0.0
    %251 = vmatprep.subr.mxu0 0.0
    %252 = vmatpush1.msra.mxu0 0.0
    %253 = vmatprep.subr.mxu0 0.0
    %254 = vmatpush1.msra.mxu0 0.0
    %255 = vmatprep.subr.mxu0 0.0
    %256 = vmatpush1.msra.mxu0 0.0
    %257 = vmatprep.subr.mxu0 0.0
    %258 = vmatpush1.msra.mxu0 0.0
    %259 = vmatprep.subr.mxu0 0.0
    %260 = vmatpush1.msra.mxu0 0.0
    %261 = vmatprep.subr.mxu0 0.0
    %262 = vmatpush1.msra.mxu0 0.0
    %263 = vmatprep.subr.mxu0 0.0
    %264 = vmatpush1.msra.mxu0 0.0
    %265 = vmatprep.subr.mxu0 0.0
    %266 = vmatpush1.msra.mxu0 0.0
    %267 = vmatprep.subr.mxu0 0.0
    %268 = vmatpush1.msra.mxu0 0.0
    %269 = vmatprep.subr.mxu0 0.0
    %270 = vmatpush1.msra.mxu0 0.0
    %271 = vmatprep.subr.mxu0 0.0
    %272 = vmatpush1.msra.mxu0 0.0
    %273 = vmatprep.subr.mxu0 0.0
    %274 = vmatpush1.msra.mxu0 0.0
    %275 = vmatprep.subr.mxu0 0.0
    %276 = vmatpush1.msra.mxu0 0.0
    %277 = vmatprep.subr.mxu0 0.0
    %278 = vmatpush1.msra.mxu0 0.0
    %279 = vmatprep.subr.mxu0 0.0
    %280 = vmatpush1.msra.mxu0 0.0
    %281 = vmatprep.mubr.f32.mxu0 0.0
    %282 = vmatmul.mubr.f32.gmra.mrb[0].mxu0 %v112
    %v283 = vpop.f32.mrb[0].mxu0
    %v284 = vadd.f32 0.0, %v283
    %v285 = vpop.f32.mrb[0].mxu0
    %286 = vdwg.mxu0
    %288 = vrot.lane.b32.xlu0 %v216, 32
    %v289 = vpop.permute.xlu0 %288
    %v290 = vsel %vm110, %v289, 0
    %292 = vmatprep.subr.mxu0 0.0
    %293 = vmatpush1.msra.mxu0 %v82
    %294 = vmatprep.subr.mxu0 0.0
    %295 = vmatpush1.msra.mxu0 %v83
    %296 = vmatprep.subr.mxu0 0.0
    %297 = vmatpush1.msra.mxu0 %v84
    %298 = vmatprep.subr.mxu0 0.0
    %299 = vmatpush1.msra.mxu0 %v85
    %300 = vmatprep.subr.mxu0 0.0
    %301 = vmatpush1.msra.mxu0 0.0
    %302 = vmatprep.subr.mxu0 0.0
    %303 = vmatpush1.msra.mxu0 0.0
    %304 = vmatprep.subr.mxu0 0.0
    %305 = vmatpush1.msra.mxu0 0.0
    %306 = vmatprep.subr.mxu0 0.0
    %307 = vmatpush1.msra.mxu0 0.0
    %308 = vmatprep.subr.mxu0 0.0
    %309 = vmatpush1.msra.mxu0 0.0
    %310 = vmatprep.subr.mxu0 0.0
    %311 = vmatpush1.msra.mxu0 0.0
    %312 = vmatprep.subr.mxu0 0.0
    %313 = vmatpush1.msra.mxu0 0.0
    %314 = vmatprep.subr.mxu0 0.0
    %315 = vmatpush1.msra.mxu0 0.0
    %316 = vmatprep.subr.mxu0 0.0
    %317 = vmatpush1.msra.mxu0 0.0
    %318 = vmatprep.subr.mxu0 0.0
    %319 = vmatpush1.msra.mxu0 0.0
    %320 = vmatprep.subr.mxu0 0.0
    %321 = vmatpush1.msra.mxu0 0.0
    %322 = vmatprep.subr.mxu0 0.0
    %323 = vmatpush1.msra.mxu0 0.0
    %324 = vmatprep.subr.mxu0 0.0
    %325 = vmatpush1.msra.mxu0 0.0
    %326 = vmatprep.subr.mxu0 0.0
    %327 = vmatpush1.msra.mxu0 0.0
    %328 = vmatprep.subr.mxu0 0.0
    %329 = vmatpush1.msra.mxu0 0.0
    %330 = vmatprep.subr.mxu0 0.0
    %331 = vmatpush1.msra.mxu0 0.0
    %332 = vmatprep.subr.mxu0 0.0
    %333 = vmatpush1.msra.mxu0 0.0
    %334 = vmatprep.subr.mxu0 0.0
    %335 = vmatpush1.msra.mxu0 0.0
    %336 = vmatprep.subr.mxu0 0.0
    %337 = vmatpush1.msra.mxu0 0.0
    %338 = vmatprep.subr.mxu0 0.0
    %339 = vmatpush1.msra.mxu0 0.0
    %340 = vmatprep.subr.mxu0 0.0
    %341 = vmatpush1.msra.mxu0 0.0
    %342 = vmatprep.subr.mxu0 0.0
    %343 = vmatpush1.msra.mxu0 0.0
    %344 = vmatprep.subr.mxu0 0.0
    %345 = vmatpush1.msra.mxu0 0.0
    %346 = vmatprep.subr.mxu0 0.0
    %347 = vmatpush1.msra.mxu0 0.0
    %348 = vmatprep.subr.mxu0 0.0
    %349 = vmatpush1.msra.mxu0 0.0
    %350 = vmatprep.subr.mxu0 0.0
    %351 = vmatpush1.msra.mxu0 0.0
    %352 = vmatprep.subr.mxu0 0.0
    %353 = vmatpush1.msra.mxu0 0.0
    %354 = vmatprep.subr.mxu0 0.0
    %355 = vmatpush1.msra.mxu0 0.0
    %356 = vmatprep.mubr.f32.mxu0 0.0
    %357 = vmatmul.mubr.f32.gmra.mrb[0].mxu0 %v290
    %v358 = vpop.f32.mrb[0].mxu0
    %v359 = vadd.f32 %v284, %v358
    %v360 = vpop.f32.mrb[0].mxu0
    %361 = vdwg.mxu0
    %v363 = vlaneseq
    %v364 = vshrl.u32 %v363, 7
    %v365 = vsub.s32 0, %v364
    %v366 = vrot.slane %v90, %v365
    %v368 = vadd.f32 %v359, %v366
    %v369 = vtanh.pop %v368
    %v370 = vxor.u32 %v368, 2147483648
    %v371 = vmul.f32 %v370, 1.442695
    %v372 = vpow.pop %v371
    %v373 = vadd.f32 %v372, 1.0
    %v374 = vrcp.pop %v373
    %v375 = vmul.f32 1.0, %v374
    %v376 = vsel %vm97, %v369, %v375
    %v377 = vmul.f32 %v376, 0.0
    %379 = vrot.lane.b32.xlu0 %v376, 64
    %v380 = vpop.permute.xlu0 %379
    %v382 = vmul.f32 %v376, %v380
    %384 = vrot.lane.b32.xlu0 %v382, 32
    %v385 = vpop.permute.xlu0 %384
    %v387 = vadd.f32 %v377, %v385
    %v388 = vtanh.pop %v387
    %390 = vrot.lane.b32.xlu0 %v388, 64
    %v391 = vpop.permute.xlu0 %390
    %v393 = vmul.f32 %v376, %v391
    %394 = vset.pattern.permute.xlu0 1
    %395 = vperm.xlu0 %394, %v75
    %v396 = vpop.permute.xlu0 %395
    %v398 = vmul.f32 %v396, %v107
    %399 = vmatprep.subr.mxu0 0.0
    %400 = vmatpush1.msra.mxu0 %v77
    %401 = vmatprep.subr.mxu0 0.0
    %402 = vmatpush1.msra.mxu0 %v78
    %403 = vmatprep.subr.mxu0 0.0
    %404 = vmatpush1.msra.mxu0 %v79
    %405 = vmatprep.subr.mxu0 0.0
    %406 = vmatpush1.msra.mxu0 %v80
    %407 = vmatprep.subr.mxu0 0.0
    %408 = vmatpush1.msra.mxu0 0.0
    %409 = vmatprep.subr.mxu0 0.0
    %410 = vmatpush1.msra.mxu0 0.0
    %411 = vmatprep.subr.mxu0 0.0
    %412 = vmatpush1.msra.mxu0 0.0
    %413 = vmatprep.subr.mxu0 0.0
    %414 = vmatpush1.msra.mxu0 0.0
    %415 = vmatprep.subr.mxu0 0.0
    %416 = vmatpush1.msra.mxu0 0.0
    %417 = vmatprep.subr.mxu0 0.0
    %418 = vmatpush1.msra.mxu0 0.0
    %419 = vmatprep.subr.mxu0 0.0
    %420 = vmatpush1.msra.mxu0 0.0
    %421 = vmatprep.subr.mxu0 0.0
    %422 = vmatpush1.msra.mxu0 0.0
    %423 = vmatprep.subr.mxu0 0.0
    %424 = vmatpush1.msra.mxu0 0.0
    %425 = vmatprep.subr.mxu0 0.0
    %426 = vmatpush1.msra.mxu0 0.0
    %427 = vmatprep.subr.mxu0 0.0
    %428 = vmatpush1.msra.mxu0 0.0
    %429 = vmatprep.subr.mxu0 0.0
    %430 = vmatpush1.msra.mxu0 0.0
    %431 = vmatprep.subr.mxu0 0.0
    %432 = vmatpush1.msra.mxu0 0.0
    %433 = vmatprep.subr.mxu0 0.0
    %434 = vmatpush1.msra.mxu0 0.0
    %435 = vmatprep.subr.mxu0 0.0
    %436 = vmatpush1.msra.mxu0 0.0
    %437 = vmatprep.subr.mxu0 0.0
    %438 = vmatpush1.msra.mxu0 0.0
    %439 = vmatprep.subr.mxu0 0.0
    %440 = vmatpush1.msra.mxu0 0.0
    %441 = vmatprep.subr.mxu0 0.0
    %442 = vmatpush1.msra.mxu0 0.0
    %443 = vmatprep.subr.mxu0 0.0
    %444 = vmatpush1.msra.mxu0 0.0
    %445 = vmatprep.subr.mxu0 0.0
    %446 = vmatpush1.msra.mxu0 0.0
    %447 = vmatprep.subr.mxu0 0.0
    %448 = vmatpush1.msra.mxu0 0.0
    %449 = vmatprep.subr.mxu0 0.0
    %450 = vmatpush1.msra.mxu0 0.0
    %451 = vmatprep.subr.mxu0 0.0
    %452 = vmatpush1.msra.mxu0 0.0
    %453 = vmatprep.subr.mxu0 0.0
    %454 = vmatpush1.msra.mxu0 0.0
    %455 = vmatprep.subr.mxu0 0.0
    %456 = vmatpush1.msra.mxu0 0.0
    %457 = vmatprep.subr.mxu0 0.0
    %458 = vmatpush1.msra.mxu0 0.0
    %459 = vmatprep.subr.mxu0 0.0
    %460 = vmatpush1.msra.mxu0 0.0
    %461 = vmatprep.subr.mxu0 0.0
    %462 = vmatpush1.msra.mxu0 0.0
    %463 = vmatprep.mubr.f32.mxu0 0.0
    %464 = vmatmul.mubr.f32.gmra.mrb[0].mxu0 %v290
    %v465 = vpop.f32.mrb[0].mxu0
    %v466 = vadd.f32 0.0, %v465
    %v467 = vpop.f32.mrb[0].mxu0
    %468 = vdwg.mxu0
    %v469 = vadd.f32 %v398, %v466
    %v470 = vadd.f32 %v469, %v189
    %v471 = vtanh.pop %v470
    %v472 = vxor.u32 %v470, 2147483648
    %v473 = vmul.f32 %v472, 1.442695
    %v474 = vpow.pop %v473
    %v475 = vadd.f32 %v474, 1.0
    %v476 = vrcp.pop %v475
    %v477 = vmul.f32 1.0, %v476
    %v478 = vsel %vm97, %v471, %v477
    %v479 = vmul.f32 %v478, %v210
    %481 = vrot.lane.b32.xlu0 %v478, 64
    %v482 = vpop.permute.xlu0 %481
    %v484 = vmul.f32 %v478, %v482
    %486 = vrot.lane.b32.xlu0 %v484, 32
    %v487 = vpop.permute.xlu0 %486
    %v489 = vadd.f32 %v479, %v487
    %v490 = vtanh.pop %v489
    %492 = vrot.lane.b32.xlu0 %v490, 64
    %v493 = vpop.permute.xlu0 %492
    %v495 = vmul.f32 %v478, %v493
    %497 = vrot.lane.b32.xlu0 %v393, 32
    %v498 = vpop.permute.xlu0 %497
    %v499 = vsel %vm110, %v498, 0
    %501 = vmatprep.subr.mxu0 0.0
    %502 = vmatpush1.msra.mxu0 %v86
    %503 = vmatprep.subr.mxu0 0.0
    %504 = vmatpush1.msra.mxu0 %v87
    %505 = vmatprep.subr.mxu0 0.0
    %506 = vmatpush1.msra.mxu0 %v88
    %507 = vmatprep.subr.mxu0 0.0
    %508 = vmatpush1.msra.mxu0 %v89
    %509 = vmatprep.subr.mxu0 0.0
    %510 = vmatpush1.msra.mxu0 0.0
    %511 = vmatprep.subr.mxu0 0.0
    %512 = vmatpush1.msra.mxu0 0.0
    %513 = vmatprep.subr.mxu0 0.0
    %514 = vmatpush1.msra.mxu0 0.0
    %515 = vmatprep.subr.mxu0 0.0
    %516 = vmatpush1.msra.mxu0 0.0
    %517 = vmatprep.subr.mxu0 0.0
    %518 = vmatpush1.msra.mxu0 0.0
    %519 = vmatprep.subr.mxu0 0.0
    %520 = vmatpush1.msra.mxu0 0.0
    %521 = vmatprep.subr.mxu0 0.0
    %522 = vmatpush1.msra.mxu0 0.0
    %523 = vmatprep.subr.mxu0 0.0
    %524 = vmatpush1.msra.mxu0 0.0
    %525 = vmatprep.subr.mxu0 0.0
    %526 = vmatpush1.msra.mxu0 0.0
    %527 = vmatprep.subr.mxu0 0.0
    %528 = vmatpush1.msra.mxu0 0.0
    %529 = vmatprep.subr.mxu0 0.0
    %530 = vmatpush1.msra.mxu0 0.0
    %531 = vmatprep.subr.mxu0 0.0
    %532 = vmatpush1.msra.mxu0 0.0
    %533 = vmatprep.subr.mxu0 0.0
    %534 = vmatpush1.msra.mxu0 0.0
    %535 = vmatprep.subr.mxu0 0.0
    %536 = vmatpush1.msra.mxu0 0.0
    %537 = vmatprep.subr.mxu0 0.0
    %538 = vmatpush1.msra.mxu0 0.0
    %539 = vmatprep.subr.mxu0 0.0
    %540 = vmatpush1.msra.mxu0 0.0
    %541 = vmatprep.subr.mxu0 0.0
    %542 = vmatpush1.msra.mxu0 0.0
    %543 = vmatprep.subr.mxu0 0.0
    %544 = vmatpush1.msra.mxu0 0.0
    %545 = vmatprep.subr.mxu0 0.0
    %546 = vmatpush1.msra.mxu0 0.0
    %547 = vmatprep.subr.mxu0 0.0
    %548 = vmatpush1.msra.mxu0 0.0
    %549 = vmatprep.subr.mxu0 0.0
    %550 = vmatpush1.msra.mxu0 0.0
    %551 = vmatprep.subr.mxu0 0.0
    %552 = vmatpush1.msra.mxu0 0.0
    %553 = vmatprep.subr.mxu0 0.0
    %554 = vmatpush1.msra.mxu0 0.0
    %555 = vmatprep.subr.mxu0 0.0
    %556 = vmatpush1.msra.mxu0 0.0
    %557 = vmatprep.subr.mxu0 0.0
    %558 = vmatpush1.msra.mxu0 0.0
    %559 = vmatprep.subr.mxu0 0.0
    %560 = vmatpush1.msra.mxu0 0.0
    %561 = vmatprep.subr.mxu0 0.0
    %562 = vmatpush1.msra.mxu0 0.0
    %563 = vmatprep.subr.mxu0 0.0
    %564 = vmatpush1.msra.mxu0 0.0
    %565 = vmatprep.mubr.f32.mxu0 0.0
    %566 = vmatmul.mubr.f32.gmra.mrb[0].mxu0 %v499
    %v567 = vpop.f32.mrb[0].mxu0
    %v568 = vadd.f32 0.0, %v567
    %v569 = vpop.f32.mrb[0].mxu0
    %570 = vdwg.mxu0
    %572 = vrot.lane.b32.xlu0 %v495, 32
    %v573 = vpop.permute.xlu0 %572
    %v574 = vsel %vm110, %v573, 0
    %576 = vmatprep.subr.mxu0 0.0
    %577 = vmatpush1.msra.mxu0 %v82
    %578 = vmatprep.subr.mxu0 0.0
    %579 = vmatpush1.msra.mxu0 %v83
    %580 = vmatprep.subr.mxu0 0.0
    %581 = vmatpush1.msra.mxu0 %v84
    %582 = vmatprep.subr.mxu0 0.0
    %583 = vmatpush1.msra.mxu0 %v85
    %584 = vmatprep.subr.mxu0 0.0
    %585 = vmatpush1.msra.mxu0 0.0
    %586 = vmatprep.subr.mxu0 0.0
    %587 = vmatpush1.msra.mxu0 0.0
    %588 = vmatprep.subr.mxu0 0.0
    %589 = vmatpush1.msra.mxu0 0.0
    %590 = vmatprep.subr.mxu0 0.0
    %591 = vmatpush1.msra.mxu0 0.0
    %592 = vmatprep.subr.mxu0 0.0
    %593 = vmatpush1.msra.mxu0 0.0
    %594 = vmatprep.subr.mxu0 0.0
    %595 = vmatpush1.msra.mxu0 0.0
    %596 = vmatprep.subr.mxu0 0.0
    %597 = vmatpush1.msra.mxu0 0.0
    %598 = vmatprep.subr.mxu0 0.0
    %599 = vmatpush1.msra.mxu0 0.0
    %600 = vmatprep.subr.mxu0 0.0
    %601 = vmatpush1.msra.mxu0 0.0
    %602 = vmatprep.subr.mxu0 0.0
    %603 = vmatpush1.msra.mxu0 0.0
    %604 = vmatprep.subr.mxu0 0.0
    %605 = vmatpush1.msra.mxu0 0.0
    %606 = vmatprep.subr.mxu0 0.0
    %607 = vmatpush1.msra.mxu0 0.0
    %608 = vmatprep.subr.mxu0 0.0
    %609 = vmatpush1.msra.mxu0 0.0
    %610 = vmatprep.subr.mxu0 0.0
    %611 = vmatpush1.msra.mxu0 0.0
    %612 = vmatprep.subr.mxu0 0.0
    %613 = vmatpush1.msra.mxu0 0.0
    %614 = vmatprep.subr.mxu0 0.0
    %615 = vmatpush1.msra.mxu0 0.0
    %616 = vmatprep.subr.mxu0 0.0
    %617 = vmatpush1.msra.mxu0 0.0
    %618 = vmatprep.subr.mxu0 0.0
    %619 = vmatpush1.msra.mxu0 0.0
    %620 = vmatprep.subr.mxu0 0.0
    %621 = vmatpush1.msra.mxu0 0.0
    %622 = vmatprep.subr.mxu0 0.0
    %623 = vmatpush1.msra.mxu0 0.0
    %624 = vmatprep.subr.mxu0 0.0
    %625 = vmatpush1.msra.mxu0 0.0
    %626 = vmatprep.subr.mxu0 0.0
    %627 = vmatpush1.msra.mxu0 0.0
    %628 = vmatprep.subr.mxu0 0.0
    %629 = vmatpush1.msra.mxu0 0.0
    %630 = vmatprep.subr.mxu0 0.0
    %631 = vmatpush1.msra.mxu0 0.0
    %632 = vmatprep.subr.mxu0 0.0
    %633 = vmatpush1.msra.mxu0 0.0
    %634 = vmatprep.subr.mxu0 0.0
    %635 = vmatpush1.msra.mxu0 0.0
    %636 = vmatprep.subr.mxu0 0.0
    %637 = vmatpush1.msra.mxu0 0.0
    %638 = vmatprep.subr.mxu0 0.0
    %639 = vmatpush1.msra.mxu0 0.0
    %640 = vmatprep.mubr.f32.mxu0 0.0
    %641 = vmatmul.mubr.f32.gmra.mrb[0].mxu0 %v574
    %v642 = vpop.f32.mrb[0].mxu0
    %v643 = vadd.f32 %v568, %v642
    %v644 = vpop.f32.mrb[0].mxu0
    %645 = vdwg.mxu0
    %v646 = vadd.f32 %v643, %v366
    %v647 = vtanh.pop %v646
    %v648 = vxor.u32 %v646, 2147483648
    %v649 = vmul.f32 %v648, 1.442695
    %v650 = vpow.pop %v649
    %v651 = vadd.f32 %v650, 1.0
    %v652 = vrcp.pop %v651
    %v653 = vmul.f32 1.0, %v652
    %v654 = vsel %vm97, %v647, %v653
    %v655 = vmul.f32 %v654, %v387
    %657 = vrot.lane.b32.xlu0 %v654, 64
    %v658 = vpop.permute.xlu0 %657
    %v660 = vmul.f32 %v654, %v658
    %662 = vrot.lane.b32.xlu0 %v660, 32
    %v663 = vpop.permute.xlu0 %662
    %v665 = vadd.f32 %v655, %v663
    %v666 = vtanh.pop %v665
    %668 = vrot.lane.b32.xlu0 %v666, 64
    %v669 = vpop.permute.xlu0 %668
    %v671 = vmul.f32 %v654, %v669
    %672 = vset.pattern.permute.xlu0 2
    %673 = vperm.xlu0 %672, %v75
    %v674 = vpop.permute.xlu0 %673
    %v676 = vmul.f32 %v674, %v107
    %677 = vmatprep.subr.mxu0 0.0
    %678 = vmatpush1.msra.mxu0 %v77
    %679 = vmatprep.subr.mxu0 0.0
    %680 = vmatpush1.msra.mxu0 %v78
    %681 = vmatprep.subr.mxu0 0.0
    %682 = vmatpush1.msra.mxu0 %v79
    %683 = vmatprep.subr.mxu0 0.0
    %684 = vmatpush1.msra.mxu0 %v80
    %685 = vmatprep.subr.mxu0 0.0
    %686 = vmatpush1.msra.mxu0 0.0
    %687 = vmatprep.subr.mxu0 0.0
    %688 = vmatpush1.msra.mxu0 0.0
    %689 = vmatprep.subr.mxu0 0.0
    %690 = vmatpush1.msra.mxu0 0.0
    %691 = vmatprep.subr.mxu0 0.0
    %692 = vmatpush1.msra.mxu0 0.0
    %693 = vmatprep.subr.mxu0 0.0
    %694 = vmatpush1.msra.mxu0 0.0
    %695 = vmatprep.subr.mxu0 0.0
    %696 = vmatpush1.msra.mxu0 0.0
    %697 = vmatprep.subr.mxu0 0.0
    %698 = vmatpush1.msra.mxu0 0.0
    %699 = vmatprep.subr.mxu0 0.0
    %700 = vmatpush1.msra.mxu0 0.0
    %701 = vmatprep.subr.mxu0 0.0
    %702 = vmatpush1.msra.mxu0 0.0
    %703 = vmatprep.subr.mxu0 0.0
    %704 = vmatpush1.msra.mxu0 0.0
    %705 = vmatprep.subr.mxu0 0.0
    %706 = vmatpush1.msra.mxu0 0.0
    %707 = vmatprep.subr.mxu0 0.0
    %708 = vmatpush1.msra.mxu0 0.0
    %709 = vmatprep.subr.mxu0 0.0
    %710 = vmatpush1.msra.mxu0 0.0
    %711 = vmatprep.subr.mxu0 0.0
    %712 = vmatpush1.msra.mxu0 0.0
    %713 = vmatprep.subr.mxu0 0.0
    %714 = vmatpush1.msra.mxu0 0.0
    %715 = vmatprep.subr.mxu0 0.0
    %716 = vmatpush1.msra.mxu0 0.0
    %717 = vmatprep.subr.mxu0 0.0
    %718 = vmatpush1.msra.mxu0 0.0
    %719 = vmatprep.subr.mxu0 0.0
    %720 = vmatpush1.msra.mxu0 0.0
    %721 = vmatprep.subr.mxu0 0.0
    %722 = vmatpush1.msra.mxu0 0.0
    %723 = vmatprep.subr.mxu0 0.0
    %724 = vmatpush1.msra.mxu0 0.0
    %725 = vmatprep.subr.mxu0 0.0
    %726 = vmatpush1.msra.mxu0 0.0
    %727 = vmatprep.subr.mxu0 0.0
    %728 = vmatpush1.msra.mxu0 0.0
    %729 = vmatprep.subr.mxu0 0.0
    %730 = vmatpush1.msra.mxu0 0.0
    %731 = vmatprep.subr.mxu0 0.0
    %732 = vmatpush1.msra.mxu0 0.0
    %733 = vmatprep.subr.mxu0 0.0
    %734 = vmatpush1.msra.mxu0 0.0
    %735 = vmatprep.subr.mxu0 0.0
    %736 = vmatpush1.msra.mxu0 0.0
    %737 = vmatprep.subr.mxu0 0.0
    %738 = vmatpush1.msra.mxu0 0.0
    %739 = vmatprep.subr.mxu0 0.0
    %740 = vmatpush1.msra.mxu0 0.0
    %741 = vmatprep.mubr.f32.mxu0 0.0
    %742 = vmatmul.mubr.f32.gmra.mrb[0].mxu0 %v574
    %v743 = vpop.f32.mrb[0].mxu0
    %v744 = vadd.f32 0.0, %v743
    %v745 = vpop.f32.mrb[0].mxu0
    %746 = vdwg.mxu0
    %v747 = vadd.f32 %v676, %v744
    %v748 = vadd.f32 %v747, %v189
    %v749 = vtanh.pop %v748
    %v750 = vxor.u32 %v748, 2147483648
    %v751 = vmul.f32 %v750, 1.442695
    %v752 = vpow.pop %v751
    %v753 = vadd.f32 %v752, 1.0
    %v754 = vrcp.pop %v753
    %v755 = vmul.f32 1.0, %v754
    %v756 = vsel %vm97, %v749, %v755
    %v757 = vmul.f32 %v756, %v489
    %759 = vrot.lane.b32.xlu0 %v756, 64
    %v760 = vpop.permute.xlu0 %759
    %v762 = vmul.f32 %v756, %v760
    %764 = vrot.lane.b32.xlu0 %v762, 32
    %v765 = vpop.permute.xlu0 %764
    %v767 = vadd.f32 %v757, %v765
    %v768 = vtanh.pop %v767
    %770 = vrot.lane.b32.xlu0 %v768, 64
    %v771 = vpop.permute.xlu0 %770
    %v773 = vmul.f32 %v756, %v771
    %775 = vrot.lane.b32.xlu0 %v671, 32
    %v776 = vpop.permute.xlu0 %775
    %v777 = vsel %vm110, %v776, 0
    %779 = vmatprep.subr.mxu0 0.0
    %780 = vmatpush1.msra.mxu0 %v86
    %781 = vmatprep.subr.mxu0 0.0
    %782 = vmatpush1.msra.mxu0 %v87
    %783 = vmatprep.subr.mxu0 0.0
    %784 = vmatpush1.msra.mxu0 %v88
    %785 = vmatprep.subr.mxu0 0.0
    %786 = vmatpush1.msra.mxu0 %v89
    %787 = vmatprep.subr.mxu0 0.0
    %788 = vmatpush1.msra.mxu0 0.0
    %789 = vmatprep.subr.mxu0 0.0
    %790 = vmatpush1.msra.mxu0 0.0
    %791 = vmatprep.subr.mxu0 0.0
    %792 = vmatpush1.msra.mxu0 0.0
    %793 = vmatprep.subr.mxu0 0.0
    %794 = vmatpush1.msra.mxu0 0.0
    %795 = vmatprep.subr.mxu0 0.0
    %796 = vmatpush1.msra.mxu0 0.0
    %797 = vmatprep.subr.mxu0 0.0
    %798 = vmatpush1.msra.mxu0 0.0
    %799 = vmatprep.subr.mxu0 0.0
    %800 = vmatpush1.msra.mxu0 0.0
    %801 = vmatprep.subr.mxu0 0.0
    %802 = vmatpush1.msra.mxu0 0.0
    %803 = vmatprep.subr.mxu0 0.0
    %804 = vmatpush1.msra.mxu0 0.0
    %805 = vmatprep.subr.mxu0 0.0
    %806 = vmatpush1.msra.mxu0 0.0
    %807 = vmatprep.subr.mxu0 0.0
    %808 = vmatpush1.msra.mxu0 0.0
    %809 = vmatprep.subr.mxu0 0.0
    %810 = vmatpush1.msra.mxu0 0.0
    %811 = vmatprep.subr.mxu0 0.0
    %812 = vmatpush1.msra.mxu0 0.0
    %813 = vmatprep.subr.mxu0 0.0
    %814 = vmatpush1.msra.mxu0 0.0
    %815 = vmatprep.subr.mxu0 0.0
    %816 = vmatpush1.msra.mxu0 0.0
    %817 = vmatprep.subr.mxu0 0.0
    %818 = vmatpush1.msra.mxu0 0.0
    %819 = vmatprep.subr.mxu0 0.0
    %820 = vmatpush1.msra.mxu0 0.0
    %821 = vmatprep.subr.mxu0 0.0
    %822 = vmatpush1.msra.mxu0 0.0
    %823 = vmatprep.subr.mxu0 0.0
    %824 = vmatpush1.msra.mxu0 0.0
    %825 = vmatprep.subr.mxu0 0.0
    %826 = vmatpush1.msra.mxu0 0.0
    %827 = vmatprep.subr.mxu0 0.0
    %828 = vmatpush1.msra.mxu0 0.0
    %829 = vmatprep.subr.mxu0 0.0
    %830 = vmatpush1.msra.mxu0 0.0
    %831 = vmatprep.subr.mxu0 0.0
    %832 = vmatpush1.msra.mxu0 0.0
    %833 = vmatprep.subr.mxu0 0.0
    %834 = vmatpush1.msra.mxu0 0.0
    %835 = vmatprep.subr.mxu0 0.0
    %836 = vmatpush1.msra.mxu0 0.0
    %837 = vmatprep.subr.mxu0 0.0
    %838 = vmatpush1.msra.mxu0 0.0
    %839 = vmatprep.subr.mxu0 0.0
    %840 = vmatpush1.msra.mxu0 0.0
    %841 = vmatprep.subr.mxu0 0.0
    %842 = vmatpush1.msra.mxu0 0.0
    %843 = vmatprep.mubr.f32.mxu0 0.0
    %844 = vmatmul.mubr.f32.gmra.mrb[0].mxu0 %v777
    %v845 = vpop.f32.mrb[0].mxu0
    %v846 = vadd.f32 0.0, %v845
    %v847 = vpop.f32.mrb[0].mxu0
    %848 = vdwg.mxu0
    %850 = vrot.lane.b32.xlu0 %v773, 32
    %v851 = vpop.permute.xlu0 %850
    %v852 = vsel %vm110, %v851, 0
    %854 = vmatprep.subr.mxu0 0.0
    %855 = vmatpush1.msra.mxu0 %v82
    %856 = vmatprep.subr.mxu0 0.0
    %857 = vmatpush1.msra.mxu0 %v83
    %858 = vmatprep.subr.mxu0 0.0
    %859 = vmatpush1.msra.mxu0 %v84
    %860 = vmatprep.subr.mxu0 0.0
    %861 = vmatpush1.msra.mxu0 %v85
    %862 = vmatprep.subr.mxu0 0.0
    %863 = vmatpush1.msra.mxu0 0.0
    %864 = vmatprep.subr.mxu0 0.0
    %865 = vmatpush1.msra.mxu0 0.0
    %866 = vmatprep.subr.mxu0 0.0
    %867 = vmatpush1.msra.mxu0 0.0
    %868 = vmatprep.subr.mxu0 0.0
    %869 = vmatpush1.msra.mxu0 0.0
    %870 = vmatprep.subr.mxu0 0.0
    %871 = vmatpush1.msra.mxu0 0.0
    %872 = vmatprep.subr.mxu0 0.0
    %873 = vmatpush1.msra.mxu0 0.0
    %874 = vmatprep.subr.mxu0 0.0
    %875 = vmatpush1.msra.mxu0 0.0
    %876 = vmatprep.subr.mxu0 0.0
    %877 = vmatpush1.msra.mxu0 0.0
    %878 = vmatprep.subr.mxu0 0.0
    %879 = vmatpush1.msra.mxu0 0.0
    %880 = vmatprep.subr.mxu0 0.0
    %881 = vmatpush1.msra.mxu0 0.0
    %882 = vmatprep.subr.mxu0 0.0
    %883 = vmatpush1.msra.mxu0 0.0
    %884 = vmatprep.subr.mxu0 0.0
    %885 = vmatpush1.msra.mxu0 0.0
    %886 = vmatprep.subr.mxu0 0.0
    %887 = vmatpush1.msra.mxu0 0.0
    %888 = vmatprep.subr.mxu0 0.0
    %889 = vmatpush1.msra.mxu0 0.0
    %890 = vmatprep.subr.mxu0 0.0
    %891 = vmatpush1.msra.mxu0 0.0
    %892 = vmatprep.subr.mxu0 0.0
    %893 = vmatpush1.msra.mxu0 0.0
    %894 = vmatprep.subr.mxu0 0.0
    %895 = vmatpush1.msra.mxu0 0.0
    %896 = vmatprep.subr.mxu0 0.0
    %897 = vmatpush1.msra.mxu0 0.0
    %898 = vmatprep.subr.mxu0 0.0
    %899 = vmatpush1.msra.mxu0 0.0
    %900 = vmatprep.subr.mxu0 0.0
    %901 = vmatpush1.msra.mxu0 0.0
    %902 = vmatprep.subr.mxu0 0.0
    %903 = vmatpush1.msra.mxu0 0.0
    %904 = vmatprep.subr.mxu0 0.0
    %905 = vmatpush1.msra.mxu0 0.0
    %906 = vmatprep.subr.mxu0 0.0
    %907 = vmatpush1.msra.mxu0 0.0
    %908 = vmatprep.subr.mxu0 0.0
    %909 = vmatpush1.msra.mxu0 0.0
    %910 = vmatprep.subr.mxu0 0.0
    %911 = vmatpush1.msra.mxu0 0.0
    %912 = vmatprep.subr.mxu0 0.0
    %913 = vmatpush1.msra.mxu0 0.0
    %914 = vmatprep.subr.mxu0 0.0
    %915 = vmatpush1.msra.mxu0 0.0
    %916 = vmatprep.subr.mxu0 0.0
    %917 = vmatpush1.msra.mxu0 0.0
    %918 = vmatprep.mubr.f32.mxu0 0.0
    %919 = vmatmul.mubr.f32.gmra.mrb[0].mxu0 %v852
    %v920 = vpop.f32.mrb[0].mxu0
    %v921 = vadd.f32 %v846, %v920
    %v922 = vpop.f32.mrb[0].mxu0
    %923 = vdwg.mxu0
    %v924 = vadd.f32 %v921, %v366
    %v925 = vtanh.pop %v924
    %v926 = vxor.u32 %v924, 2147483648
    %v927 = vmul.f32 %v926, 1.442695
    %v928 = vpow.pop %v927
    %v929 = vadd.f32 %v928, 1.0
    %v930 = vrcp.pop %v929
    %v931 = vmul.f32 1.0, %v930
    %v932 = vsel %vm97, %v925, %v931
    %v933 = vmul.f32 %v932, %v665
    %935 = vrot.lane.b32.xlu0 %v932, 64
    %v936 = vpop.permute.xlu0 %935
    %v938 = vmul.f32 %v932, %v936
    %940 = vrot.lane.b32.xlu0 %v938, 32
    %v941 = vpop.permute.xlu0 %940
    %v943 = vadd.f32 %v933, %v941
    %v944 = vtanh.pop %v943
    %946 = vrot.lane.b32.xlu0 %v944, 64
    %v947 = vpop.permute.xlu0 %946
    %v949 = vmul.f32 %v932, %v947
    %950 = vset.pattern.permute.xlu0 3
    %951 = vperm.xlu0 %950, %v75
    %v952 = vpop.permute.xlu0 %951
    %v954 = vmul.f32 %v952, %v107
    %955 = vmatprep.subr.mxu0 0.0
    %956 = vmatpush1.msra.mxu0 %v77
    %957 = vmatprep.subr.mxu0 0.0
    %958 = vmatpush1.msra.mxu0 %v78
    %959 = vmatprep.subr.mxu0 0.0
    %960 = vmatpush1.msra.mxu0 %v79
    %961 = vmatprep.subr.mxu0 0.0
    %962 = vmatpush1.msra.mxu0 %v80
    %963 = vmatprep.subr.mxu0 0.0
    %964 = vmatpush1.msra.mxu0 0.0
    %965 = vmatprep.subr.mxu0 0.0
    %966 = vmatpush1.msra.mxu0 0.0
    %967 = vmatprep.subr.mxu0 0.0
    %968 = vmatpush1.msra.mxu0 0.0
    %969 = vmatprep.subr.mxu0 0.0
    %970 = vmatpush1.msra.mxu0 0.0
    %971 = vmatprep.subr.mxu0 0.0
    %972 = vmatpush1.msra.mxu0 0.0
    %973 = vmatprep.subr.mxu0 0.0
    %974 = vmatpush1.msra.mxu0 0.0
    %975 = vmatprep.subr.mxu0 0.0
    %976 = vmatpush1.msra.mxu0 0.0
    %977 = vmatprep.subr.mxu0 0.0
    %978 = vmatpush1.msra.mxu0 0.0
    %979 = vmatprep.subr.mxu0 0.0
    %980 = vmatpush1.msra.mxu0 0.0
    %981 = vmatprep.subr.mxu0 0.0
    %982 = vmatpush1.msra.mxu0 0.0
    %983 = vmatprep.subr.mxu0 0.0
    %984 = vmatpush1.msra.mxu0 0.0
    %985 = vmatprep.subr.mxu0 0.0
    %986 = vmatpush1.msra.mxu0 0.0
    %987 = vmatprep.subr.mxu0 0.0
    %988 = vmatpush1.msra.mxu0 0.0
    %989 = vmatprep.subr.mxu0 0.0
    %990 = vmatpush1.msra.mxu0 0.0
    %991 = vmatprep.subr.mxu0 0.0
    %992 = vmatpush1.msra.mxu0 0.0
    %993 = vmatprep.subr.mxu0 0.0
    %994 = vmatpush1.msra.mxu0 0.0
    %995 = vmatprep.subr.mxu0 0.0
    %996 = vmatpush1.msra.mxu0 0.0
    %997 = vmatprep.subr.mxu0 0.0
    %998 = vmatpush1.msra.mxu0 0.0
    %999 = vmatprep.subr.mxu0 0.0
    %1000 = vmatpush1.msra.mxu0 0.0
    %1001 = vmatprep.subr.mxu0 0.0
    %1002 = vmatpush1.msra.mxu0 0.0
    %1003 = vmatprep.subr.mxu0 0.0
    %1004 = vmatpush1.msra.mxu0 0.0
    %1005 = vmatprep.subr.mxu0 0.0
    %1006 = vmatpush1.msra.mxu0 0.0
    %1007 = vmatprep.subr.mxu0 0.0
    %1008 = vmatpush1.msra.mxu0 0.0
    %1009 = vmatprep.subr.mxu0 0.0
    %1010 = vmatpush1.msra.mxu0 0.0
    %1011 = vmatprep.subr.mxu0 0.0
    %1012 = vmatpush1.msra.mxu0 0.0
    %1013 = vmatprep.subr.mxu0 0.0
    %1014 = vmatpush1.msra.mxu0 0.0
    %1015 = vmatprep.subr.mxu0 0.0
    %1016 = vmatpush1.msra.mxu0 0.0
    %1017 = vmatprep.subr.mxu0 0.0
    %1018 = vmatpush1.msra.mxu0 0.0
    %1019 = vmatprep.mubr.f32.mxu0 0.0
    %1020 = vmatmul.mubr.f32.gmra.mrb[0].mxu0 %v852
    %v1021 = vpop.f32.mrb[0].mxu0
    %v1022 = vadd.f32 0.0, %v1021
    %v1023 = vpop.f32.mrb[0].mxu0
    %1024 = vdwg.mxu0
    %v1025 = vadd.f32 %v954, %v1022
    %v1026 = vadd.f32 %v1025, %v189
    %v1027 = vtanh.pop %v1026
    %v1028 = vxor.u32 %v1026, 2147483648
    %v1029 = vmul.f32 %v1028, 1.442695
    %v1030 = vpow.pop %v1029
    %v1031 = vadd.f32 %v1030, 1.0
    %v1032 = vrcp.pop %v1031
    %v1033 = vmul.f32 1.0, %v1032
    %v1034 = vsel %vm97, %v1027, %v1033
    %v1035 = vmul.f32 %v1034, %v767
    %1037 = vrot.lane.b32.xlu0 %v1034, 64
    %v1038 = vpop.permute.xlu0 %1037
    %v1040 = vmul.f32 %v1034, %v1038
    %1042 = vrot.lane.b32.xlu0 %v1040, 32
    %v1043 = vpop.permute.xlu0 %1042
    %v1045 = vadd.f32 %v1035, %v1043
    %v1046 = vtanh.pop %v1045
    %1048 = vrot.lane.b32.xlu0 %v1046, 64
    %v1049 = vpop.permute.xlu0 %1048
    %v1051 = vmul.f32 %v1034, %v1049
    %1053 = vrot.lane.b32.xlu0 %v949, 32
    %v1054 = vpop.permute.xlu0 %1053
    %v1055 = vsel %vm110, %v1054, 0
    %1057 = vmatprep.subr.mxu0 0.0
    %1058 = vmatpush1.msra.mxu0 %v86
    %1059 = vmatprep.subr.mxu0 0.0
    %1060 = vmatpush1.msra.mxu0 %v87
    %1061 = vmatprep.subr.mxu0 0.0
    %1062 = vmatpush1.msra.mxu0 %v88
    %1063 = vmatprep.subr.mxu0 0.0
    %1064 = vmatpush1.msra.mxu0 %v89
    %1065 = vmatprep.subr.mxu0 0.0
    %1066 = vmatpush1.msra.mxu0 0.0
    %1067 = vmatprep.subr.mxu0 0.0
    %1068 = vmatpush1.msra.mxu0 0.0
    %1069 = vmatprep.subr.mxu0 0.0
    %1070 = vmatpush1.msra.mxu0 0.0
    %1071 = vmatprep.subr.mxu0 0.0
    %1072 = vmatpush1.msra.mxu0 0.0
    %1073 = vmatprep.subr.mxu0 0.0
    %1074 = vmatpush1.msra.mxu0 0.0
    %1075 = vmatprep.subr.mxu0 0.0
    %1076 = vmatpush1.msra.mxu0 0.0
    %1077 = vmatprep.subr.mxu0 0.0
    %1078 = vmatpush1.msra.mxu0 0.0
    %1079 = vmatprep.subr.mxu0 0.0
    %1080 = vmatpush1.msra.mxu0 0.0
    %1081 = vmatprep.subr.mxu0 0.0
    %1082 = vmatpush1.msra.mxu0 0.0
    %1083 = vmatprep.subr.mxu0 0.0
    %1084 = vmatpush1.msra.mxu0 0.0
    %1085 = vmatprep.subr.mxu0 0.0
    %1086 = vmatpush1.msra.mxu0 0.0
    %1087 = vmatprep.subr.mxu0 0.0
    %1088 = vmatpush1.msra.mxu0 0.0
    %1089 = vmatprep.subr.mxu0 0.0
    %1090 = vmatpush1.msra.mxu0 0.0
    %1091 = vmatprep.subr.mxu0 0.0
    %1092 = vmatpush1.msra.mxu0 0.0
    %1093 = vmatprep.subr.mxu0 0.0
    %1094 = vmatpush1.msra.mxu0 0.0
    %1095 = vmatprep.subr.mxu0 0.0
    %1096 = vmatpush1.msra.mxu0 0.0
    %1097 = vmatprep.subr.mxu0 0.0
    %1098 = vmatpush1.msra.mxu0 0.0
    %1099 = vmatprep.subr.mxu0 0.0
    %1100 = vmatpush1.msra.mxu0 0.0
    %1101 = vmatprep.subr.mxu0 0.0
    %1102 = vmatpush1.msra.mxu0 0.0
    %1103 = vmatprep.subr.mxu0 0.0
    %1104 = vmatpush1.msra.mxu0 0.0
    %1105 = vmatprep.subr.mxu0 0.0
    %1106 = vmatpush1.msra.mxu0 0.0
    %1107 = vmatprep.subr.mxu0 0.0
    %1108 = vmatpush1.msra.mxu0 0.0
    %1109 = vmatprep.subr.mxu0 0.0
    %1110 = vmatpush1.msra.mxu0 0.0
    %1111 = vmatprep.subr.mxu0 0.0
    %1112 = vmatpush1.msra.mxu0 0.0
    %1113 = vmatprep.subr.mxu0 0.0
    %1114 = vmatpush1.msra.mxu0 0.0
    %1115 = vmatprep.subr.mxu0 0.0
    %1116 = vmatpush1.msra.mxu0 0.0
    %1117 = vmatprep.subr.mxu0 0.0
    %1118 = vmatpush1.msra.mxu0 0.0
    %1119 = vmatprep.subr.mxu0 0.0
    %1120 = vmatpush1.msra.mxu0 0.0
    %1121 = vmatprep.mubr.f32.mxu0 0.0
    %1122 = vmatmul.mubr.f32.gmra.mrb[0].mxu0 %v1055
    %v1123 = vpop.f32.mrb[0].mxu0
    %v1124 = vadd.f32 0.0, %v1123
    %v1125 = vpop.f32.mrb[0].mxu0
    %1126 = vdwg.mxu0
    %1128 = vrot.lane.b32.xlu0 %v1051, 32
    %v1129 = vpop.permute.xlu0 %1128
    %v1130 = vsel %vm110, %v1129, 0
    %1132 = vmatprep.subr.mxu0 0.0
    %1133 = vmatpush1.msra.mxu0 %v82
    %1134 = vmatprep.subr.mxu0 0.0
    %1135 = vmatpush1.msra.mxu0 %v83
    %1136 = vmatprep.subr.mxu0 0.0
    %1137 = vmatpush1.msra.mxu0 %v84
    %1138 = vmatprep.subr.mxu0 0.0
    %1139 = vmatpush1.msra.mxu0 %v85
    %1140 = vmatprep.subr.mxu0 0.0
    %1141 = vmatpush1.msra.mxu0 0.0
    %1142 = vmatprep.subr.mxu0 0.0
    %1143 = vmatpush1.msra.mxu0 0.0
    %1144 = vmatprep.subr.mxu0 0.0
    %1145 = vmatpush1.msra.mxu0 0.0
    %1146 = vmatprep.subr.mxu0 0.0
    %1147 = vmatpush1.msra.mxu0 0.0
    %1148 = vmatprep.subr.mxu0 0.0
    %1149 = vmatpush1.msra.mxu0 0.0
    %1150 = vmatprep.subr.mxu0 0.0
    %1151 = vmatpush1.msra.mxu0 0.0
    %1152 = vmatprep.subr.mxu0 0.0
    %1153 = vmatpush1.msra.mxu0 0.0
    %1154 = vmatprep.subr.mxu0 0.0
    %1155 = vmatpush1.msra.mxu0 0.0
    %1156 = vmatprep.subr.mxu0 0.0
    %1157 = vmatpush1.msra.mxu0 0.0
    %1158 = vmatprep.subr.mxu0 0.0
    %1159 = vmatpush1.msra.mxu0 0.0
    %1160 = vmatprep.subr.mxu0 0.0
    %1161 = vmatpush1.msra.mxu0 0.0
    %1162 = vmatprep.subr.mxu0 0.0
    %1163 = vmatpush1.msra.mxu0 0.0
    %1164 = vmatprep.subr.mxu0 0.0
    %1165 = vmatpush1.msra.mxu0 0.0
    %1166 = vmatprep.subr.mxu0 0.0
    %1167 = vmatpush1.msra.mxu0 0.0
    %1168 = vmatprep.subr.mxu0 0.0
    %1169 = vmatpush1.msra.mxu0 0.0
    %1170 = vmatprep.subr.mxu0 0.0
    %1171 = vmatpush1.msra.mxu0 0.0
    %1172 = vmatprep.subr.mxu0 0.0
    %1173 = vmatpush1.msra.mxu0 0.0
    %1174 = vmatprep.subr.mxu0 0.0
    %1175 = vmatpush1.msra.mxu0 0.0
    %1176 = vmatprep.subr.mxu0 0.0
    %1177 = vmatpush1.msra.mxu0 0.0
    %1178 = vmatprep.subr.mxu0 0.0
    %1179 = vmatpush1.msra.mxu0 0.0
    %1180 = vmatprep.subr.mxu0 0.0
    %1181 = vmatpush1.msra.mxu0 0.0
    %1182 = vmatprep.subr.mxu0 0.0
    %1183 = vmatpush1.msra.mxu0 0.0
    %1184 = vmatprep.subr.mxu0 0.0
    %1185 = vmatpush1.msra.mxu0 0.0
    %1186 = vmatprep.subr.mxu0 0.0
    %1187 = vmatpush1.msra.mxu0 0.0
    %1188 = vmatprep.subr.mxu0 0.0
    %1189 = vmatpush1.msra.mxu0 0.0
    %1190 = vmatprep.subr.mxu0 0.0
    %1191 = vmatpush1.msra.mxu0 0.0
    %1192 = vmatprep.subr.mxu0 0.0
    %1193 = vmatpush1.msra.mxu0 0.0
    %1194 = vmatprep.subr.mxu0 0.0
    %1195 = vmatpush1.msra.mxu0 0.0
    %1196 = vmatprep.mubr.f32.mxu0 0.0
    %1197 = vmatmul.mubr.f32.gmra.mrb[0].mxu0 %v1130
    %v1198 = vpop.f32.mrb[0].mxu0
    %v1199 = vadd.f32 %v1124, %v1198
    %v1200 = vpop.f32.mrb[0].mxu0
    %1201 = vdwg.mxu0
    %v1202 = vadd.f32 %v1199, %v366
    %v1203 = vtanh.pop %v1202
    %v1204 = vxor.u32 %v1202, 2147483648
    %v1205 = vmul.f32 %v1204, 1.442695
    %v1206 = vpow.pop %v1205
    %v1207 = vadd.f32 %v1206, 1.0
    %v1208 = vrcp.pop %v1207
    %v1209 = vmul.f32 1.0, %v1208
    %v1210 = vsel %vm97, %v1203, %v1209
    %v1211 = vmul.f32 %v1210, %v943
    %1213 = vrot.lane.b32.xlu0 %v1210, 64
    %v1214 = vpop.permute.xlu0 %1213
    %v1216 = vmul.f32 %v1210, %v1214
    %1218 = vrot.lane.b32.xlu0 %v1216, 32
    %v1219 = vpop.permute.xlu0 %1218
    %v1221 = vadd.f32 %v1211, %v1219
    %v1222 = vtanh.pop %v1221
    %1224 = vrot.lane.b32.xlu0 %v1222, 64
    %v1225 = vpop.permute.xlu0 %1224
    %v1227 = vmul.f32 %v1210, %v1225
    %1228 = vset.pattern.permute.xlu0 4
    %1229 = vperm.xlu0 %1228, %v75
    %v1230 = vpop.permute.xlu0 %1229
    %v1232 = vmul.f32 %v1230, %v107
    %1233 = vmatprep.subr.mxu0 0.0
    %1234 = vmatpush1.msra.mxu0 %v77
    %1235 = vmatprep.subr.mxu0 0.0
    %1236 = vmatpush1.msra.mxu0 %v78
    %1237 = vmatprep.subr.mxu0 0.0
    %1238 = vmatpush1.msra.mxu0 %v79
    %1239 = vmatprep.subr.mxu0 0.0
    %1240 = vmatpush1.msra.mxu0 %v80
    %1241 = vmatprep.subr.mxu0 0.0
    %1242 = vmatpush1.msra.mxu0 0.0
    %1243 = vmatprep.subr.mxu0 0.0
    %1244 = vmatpush1.msra.mxu0 0.0
    %1245 = vmatprep.subr.mxu0 0.0
    %1246 = vmatpush1.msra.mxu0 0.0
    %1247 = vmatprep.subr.mxu0 0.0
    %1248 = vmatpush1.msra.mxu0 0.0
    %1249 = vmatprep.subr.mxu0 0.0
    %1250 = vmatpush1.msra.mxu0 0.0
    %1251 = vmatprep.subr.mxu0 0.0
    %1252 = vmatpush1.msra.mxu0 0.0
    %1253 = vmatprep.subr.mxu0 0.0
    %1254 = vmatpush1.msra.mxu0 0.0
    %1255 = vmatprep.subr.mxu0 0.0
    %1256 = vmatpush1.msra.mxu0 0.0
    %1257 = vmatprep.subr.mxu0 0.0
    %1258 = vmatpush1.msra.mxu0 0.0
    %1259 = vmatprep.subr.mxu0 0.0
    %1260 = vmatpush1.msra.mxu0 0.0
    %1261 = vmatprep.subr.mxu0 0.0
    %1262 = vmatpush1.msra.mxu0 0.0
    %1263 = vmatprep.subr.mxu0 0.0
    %1264 = vmatpush1.msra.mxu0 0.0
    %1265 = vmatprep.subr.mxu0 0.0
    %1266 = vmatpush1.msra.mxu0 0.0
    %1267 = vmatprep.subr.mxu0 0.0
    %1268 = vmatpush1.msra.mxu0 0.0
    %1269 = vmatprep.subr.mxu0 0.0
    %1270 = vmatpush1.msra.mxu0 0.0
    %1271 = vmatprep.subr.mxu0 0.0
    %1272 = vmatpush1.msra.mxu0 0.0
    %1273 = vmatprep.subr.mxu0 0.0
    %1274 = vmatpush1.msra.mxu0 0.0
    %1275 = vmatprep.subr.mxu0 0.0
    %1276 = vmatpush1.msra.mxu0 0.0
    %1277 = vmatprep.subr.mxu0 0.0
    %1278 = vmatpush1.msra.mxu0 0.0
    %1279 = vmatprep.subr.mxu0 0.0
    %1280 = vmatpush1.msra.mxu0 0.0
    %1281 = vmatprep.subr.mxu0 0.0
    %1282 = vmatpush1.msra.mxu0 0.0
    %1283 = vmatprep.subr.mxu0 0.0
    %1284 = vmatpush1.msra.mxu0 0.0
    %1285 = vmatprep.subr.mxu0 0.0
    %1286 = vmatpush1.msra.mxu0 0.0
    %1287 = vmatprep.subr.mxu0 0.0
    %1288 = vmatpush1.msra.mxu0 0.0
    %1289 = vmatprep.subr.mxu0 0.0
    %1290 = vmatpush1.msra.mxu0 0.0
    %1291 = vmatprep.subr.mxu0 0.0
    %1292 = vmatpush1.msra.mxu0 0.0
    %1293 = vmatprep.subr.mxu0 0.0
    %1294 = vmatpush1.msra.mxu0 0.0
    %1295 = vmatprep.subr.mxu0 0.0
    %1296 = vmatpush1.msra.mxu0 0.0
    %1297 = vmatprep.mubr.f32.mxu0 0.0
    %1298 = vmatmul.mubr.f32.gmra.mrb[0].mxu0 %v1130
    %v1299 = vpop.f32.mrb[0].mxu0
    %v1300 = vadd.f32 0.0, %v1299
    %v1301 = vpop.f32.mrb[0].mxu0
    %1302 = vdwg.mxu0
    %v1303 = vadd.f32 %v1232, %v1300
    %v1304 = vadd.f32 %v1303, %v189
    %v1305 = vtanh.pop %v1304
    %v1306 = vxor.u32 %v1304, 2147483648
    %v1307 = vmul.f32 %v1306, 1.442695
    %v1308 = vpow.pop %v1307
    %v1309 = vadd.f32 %v1308, 1.0
    %v1310 = vrcp.pop %v1309
    %v1311 = vmul.f32 1.0, %v1310
    %v1312 = vsel %vm97, %v1305, %v1311
    %v1313 = vmul.f32 %v1312, %v1045
    %1315 = vrot.lane.b32.xlu0 %v1312, 64
    %v1316 = vpop.permute.xlu0 %1315
    %v1318 = vmul.f32 %v1312, %v1316
    %1320 = vrot.lane.b32.xlu0 %v1318, 32
    %v1321 = vpop.permute.xlu0 %1320
    %v1323 = vadd.f32 %v1313, %v1321
    %v1324 = vtanh.pop %v1323
    %1326 = vrot.lane.b32.xlu0 %v1324, 64
    %v1327 = vpop.permute.xlu0 %1326
    %v1329 = vmul.f32 %v1312, %v1327
    %1331 = vrot.lane.b32.xlu0 %v1227, 32
    %v1332 = vpop.permute.xlu0 %1331
    %v1333 = vsel %vm110, %v1332, 0
    %1335 = vmatprep.subr.mxu0 0.0
    %1336 = vmatpush1.msra.mxu0 %v86
    %1337 = vmatprep.subr.mxu0 0.0
    %1338 = vmatpush1.msra.mxu0 %v87
    %1339 = vmatprep.subr.mxu0 0.0
    %1340 = vmatpush1.msra.mxu0 %v88
    %1341 = vmatprep.subr.mxu0 0.0
    %1342 = vmatpush1.msra.mxu0 %v89
    %1343 = vmatprep.subr.mxu0 0.0
    %1344 = vmatpush1.msra.mxu0 0.0
    %1345 = vmatprep.subr.mxu0 0.0
    %1346 = vmatpush1.msra.mxu0 0.0
    %1347 = vmatprep.subr.mxu0 0.0
    %1348 = vmatpush1.msra.mxu0 0.0
    %1349 = vmatprep.subr.mxu0 0.0
    %1350 = vmatpush1.msra.mxu0 0.0
    %1351 = vmatprep.subr.mxu0 0.0
    %1352 = vmatpush1.msra.mxu0 0.0
    %1353 = vmatprep.subr.mxu0 0.0
    %1354 = vmatpush1.msra.mxu0 0.0
    %1355 = vmatprep.subr.mxu0 0.0
    %1356 = vmatpush1.msra.mxu0 0.0
    %1357 = vmatprep.subr.mxu0 0.0
    %1358 = vmatpush1.msra.mxu0 0.0
    %1359 = vmatprep.subr.mxu0 0.0
    %1360 = vmatpush1.msra.mxu0 0.0
    %1361 = vmatprep.subr.mxu0 0.0
    %1362 = vmatpush1.msra.mxu0 0.0
    %1363 = vmatprep.subr.mxu0 0.0
    %1364 = vmatpush1.msra.mxu0 0.0
    %1365 = vmatprep.subr.mxu0 0.0
    %1366 = vmatpush1.msra.mxu0 0.0
    %1367 = vmatprep.subr.mxu0 0.0
    %1368 = vmatpush1.msra.mxu0 0.0
    %1369 = vmatprep.subr.mxu0 0.0
    %1370 = vmatpush1.msra.mxu0 0.0
    %1371 = vmatprep.subr.mxu0 0.0
    %1372 = vmatpush1.msra.mxu0 0.0
    %1373 = vmatprep.subr.mxu0 0.0
    %1374 = vmatpush1.msra.mxu0 0.0
    %1375 = vmatprep.subr.mxu0 0.0
    %1376 = vmatpush1.msra.mxu0 0.0
    %1377 = vmatprep.subr.mxu0 0.0
    %1378 = vmatpush1.msra.mxu0 0.0
    %1379 = vmatprep.subr.mxu0 0.0
    %1380 = vmatpush1.msra.mxu0 0.0
    %1381 = vmatprep.subr.mxu0 0.0
    %1382 = vmatpush1.msra.mxu0 0.0
    %1383 = vmatprep.subr.mxu0 0.0
    %1384 = vmatpush1.msra.mxu0 0.0
    %1385 = vmatprep.subr.mxu0 0.0
    %1386 = vmatpush1.msra.mxu0 0.0
    %1387 = vmatprep.subr.mxu0 0.0
    %1388 = vmatpush1.msra.mxu0 0.0
    %1389 = vmatprep.subr.mxu0 0.0
    %1390 = vmatpush1.msra.mxu0 0.0
    %1391 = vmatprep.subr.mxu0 0.0
    %1392 = vmatpush1.msra.mxu0 0.0
    %1393 = vmatprep.subr.mxu0 0.0
    %1394 = vmatpush1.msra.mxu0 0.0
    %1395 = vmatprep.subr.mxu0 0.0
    %1396 = vmatpush1.msra.mxu0 0.0
    %1397 = vmatprep.subr.mxu0 0.0
    %1398 = vmatpush1.msra.mxu0 0.0
    %1399 = vmatprep.mubr.f32.mxu0 0.0
    %1400 = vmatmul.mubr.f32.gmra.mrb[0].mxu0 %v1333
    %v1401 = vpop.f32.mrb[0].mxu0
    %v1402 = vadd.f32 0.0, %v1401
    %v1403 = vpop.f32.mrb[0].mxu0
    %1404 = vdwg.mxu0
    %1406 = vrot.lane.b32.xlu0 %v1329, 32
    %v1407 = vpop.permute.xlu0 %1406
    %v1408 = vsel %vm110, %v1407, 0
    %1410 = vmatprep.subr.mxu0 0.0
    %1411 = vmatpush1.msra.mxu0 %v82
    %1412 = vmatprep.subr.mxu0 0.0
    %1413 = vmatpush1.msra.mxu0 %v83
    %1414 = vmatprep.subr.mxu0 0.0
    %1415 = vmatpush1.msra.mxu0 %v84
    %1416 = vmatprep.subr.mxu0 0.0
    %1417 = vmatpush1.msra.mxu0 %v85
    %1418 = vmatprep.subr.mxu0 0.0
    %1419 = vmatpush1.msra.mxu0 0.0
    %1420 = vmatprep.subr.mxu0 0.0
    %1421 = vmatpush1.msra.mxu0 0.0
    %1422 = vmatprep.subr.mxu0 0.0
    %1423 = vmatpush1.msra.mxu0 0.0
    %1424 = vmatprep.subr.mxu0 0.0
    %1425 = vmatpush1.msra.mxu0 0.0
    %1426 = vmatprep.subr.mxu0 0.0
    %1427 = vmatpush1.msra.mxu0 0.0
    %1428 = vmatprep.subr.mxu0 0.0
    %1429 = vmatpush1.msra.mxu0 0.0
    %1430 = vmatprep.subr.mxu0 0.0
    %1431 = vmatpush1.msra.mxu0 0.0
    %1432 = vmatprep.subr.mxu0 0.0
    %1433 = vmatpush1.msra.mxu0 0.0
    %1434 = vmatprep.subr.mxu0 0.0
    %1435 = vmatpush1.msra.mxu0 0.0
    %1436 = vmatprep.subr.mxu0 0.0
    %1437 = vmatpush1.msra.mxu0 0.0
    %1438 = vmatprep.subr.mxu0 0.0
    %1439 = vmatpush1.msra.mxu0 0.0
    %1440 = vmatprep.subr.mxu0 0.0
    %1441 = vmatpush1.msra.mxu0 0.0
    %1442 = vmatprep.subr.mxu0 0.0
    %1443 = vmatpush1.msra.mxu0 0.0
    %1444 = vmatprep.subr.mxu0 0.0
    %1445 = vmatpush1.msra.mxu0 0.0
    %1446 = vmatprep.subr.mxu0 0.0
    %1447 = vmatpush1.msra.mxu0 0.0
    %1448 = vmatprep.subr.mxu0 0.0
    %1449 = vmatpush1.msra.mxu0 0.0
    %1450 = vmatprep.subr.mxu0 0.0
    %1451 = vmatpush1.msra.mxu0 0.0
    %1452 = vmatprep.subr.mxu0 0.0
    %1453 = vmatpush1.msra.mxu0 0.0
    %1454 = vmatprep.subr.mxu0 0.0
    %1455 = vmatpush1.msra.mxu0 0.0
    %1456 = vmatprep.subr.mxu0 0.0
    %1457 = vmatpush1.msra.mxu0 0.0
    %1458 = vmatprep.subr.mxu0 0.0
    %1459 = vmatpush1.msra.mxu0 0.0
    %1460 = vmatprep.subr.mxu0 0.0
    %1461 = vmatpush1.msra.mxu0 0.0
    %1462 = vmatprep.subr.mxu0 0.0
    %1463 = vmatpush1.msra.mxu0 0.0
    %1464 = vmatprep.subr.mxu0 0.0
    %1465 = vmatpush1.msra.mxu0 0.0
    %1466 = vmatprep.subr.mxu0 0.0
    %1467 = vmatpush1.msra.mxu0 0.0
    %1468 = vmatprep.subr.mxu0 0.0
    %1469 = vmatpush1.msra.mxu0 0.0
    %1470 = vmatprep.subr.mxu0 0.0
    %1471 = vmatpush1.msra.mxu0 0.0
    %1472 = vmatprep.subr.mxu0 0.0
    %1473 = vmatpush1.msra.mxu0 0.0
    %1474 = vmatprep.mubr.f32.mxu0 0.0
    %1475 = vmatmul.mubr.f32.gmra.mrb[0].mxu0 %v1408
    %v1476 = vpop.f32.mrb[0].mxu0
    %v1477 = vadd.f32 %v1402, %v1476
    %v1478 = vpop.f32.mrb[0].mxu0
    %1479 = vdwg.mxu0
    %v1480 = vadd.f32 %v1477, %v366
    %v1481 = vtanh.pop %v1480
    %v1482 = vxor.u32 %v1480, 2147483648
    %v1483 = vmul.f32 %v1482, 1.442695
    %v1484 = vpow.pop %v1483
    %v1485 = vadd.f32 %v1484, 1.0
    %v1486 = vrcp.pop %v1485
    %v1487 = vmul.f32 1.0, %v1486
    %v1488 = vsel %vm97, %v1481, %v1487
    %v1489 = vmul.f32 %v1488, %v1221
    %1491 = vrot.lane.b32.xlu0 %v1488, 64
    %v1492 = vpop.permute.xlu0 %1491
    %v1494 = vmul.f32 %v1488, %v1492
    %1496 = vrot.lane.b32.xlu0 %v1494, 32
    %v1497 = vpop.permute.xlu0 %1496
    %v1499 = vadd.f32 %v1489, %v1497
    %v1500 = vtanh.pop %v1499
    %1502 = vrot.lane.b32.xlu0 %v1500, 64
    %v1503 = vpop.permute.xlu0 %1502
    %v1505 = vmul.f32 %v1488, %v1503
    %1506 = vset.pattern.permute.xlu0 5
    %1507 = vperm.xlu0 %1506, %v75
    %v1508 = vpop.permute.xlu0 %1507
    %v1510 = vmul.f32 %v1508, %v107
    %1511 = vmatprep.subr.mxu0 0.0
    %1512 = vmatpush1.msra.mxu0 %v77
    %1513 = vmatprep.subr.mxu0 0.0
    %1514 = vmatpush1.msra.mxu0 %v78
    %1515 = vmatprep.subr.mxu0 0.0
    %1516 = vmatpush1.msra.mxu0 %v79
    %1517 = vmatprep.subr.mxu0 0.0
    %1518 = vmatpush1.msra.mxu0 %v80
    %1519 = vmatprep.subr.mxu0 0.0
    %1520 = vmatpush1.msra.mxu0 0.0
    %1521 = vmatprep.subr.mxu0 0.0
    %1522 = vmatpush1.msra.mxu0 0.0
    %1523 = vmatprep.subr.mxu0 0.0
    %1524 = vmatpush1.msra.mxu0 0.0
    %1525 = vmatprep.subr.mxu0 0.0
    %1526 = vmatpush1.msra.mxu0 0.0
    %1527 = vmatprep.subr.mxu0 0.0
    %1528 = vmatpush1.msra.mxu0 0.0
    %1529 = vmatprep.subr.mxu0 0.0
    %1530 = vmatpush1.msra.mxu0 0.0
    %1531 = vmatprep.subr.mxu0 0.0
    %1532 = vmatpush1.msra.mxu0 0.0
    %1533 = vmatprep.subr.mxu0 0.0
    %1534 = vmatpush1.msra.mxu0 0.0
    %1535 = vmatprep.subr.mxu0 0.0
    %1536 = vmatpush1.msra.mxu0 0.0
    %1537 = vmatprep.subr.mxu0 0.0
    %1538 = vmatpush1.msra.mxu0 0.0
    %1539 = vmatprep.subr.mxu0 0.0
    %1540 = vmatpush1.msra.mxu0 0.0
    %1541 = vmatprep.subr.mxu0 0.0
    %1542 = vmatpush1.msra.mxu0 0.0
    %1543 = vmatprep.subr.mxu0 0.0
    %1544 = vmatpush1.msra.mxu0 0.0
    %1545 = vmatprep.subr.mxu0 0.0
    %1546 = vmatpush1.msra.mxu0 0.0
    %1547 = vmatprep.subr.mxu0 0.0
    %1548 = vmatpush1.msra.mxu0 0.0
    %1549 = vmatprep.subr.mxu0 0.0
    %1550 = vmatpush1.msra.mxu0 0.0
    %1551 = vmatprep.subr.mxu0 0.0
    %1552 = vmatpush1.msra.mxu0 0.0
    %1553 = vmatprep.subr.mxu0 0.0
    %1554 = vmatpush1.msra.mxu0 0.0
    %1555 = vmatprep.subr.mxu0 0.0
    %1556 = vmatpush1.msra.mxu0 0.0
    %1557 = vmatprep.subr.mxu0 0.0
    %1558 = vmatpush1.msra.mxu0 0.0
    %1559 = vmatprep.subr.mxu0 0.0
    %1560 = vmatpush1.msra.mxu0 0.0
    %1561 = vmatprep.subr.mxu0 0.0
    %1562 = vmatpush1.msra.mxu0 0.0
    %1563 = vmatprep.subr.mxu0 0.0
    %1564 = vmatpush1.msra.mxu0 0.0
    %1565 = vmatprep.subr.mxu0 0.0
    %1566 = vmatpush1.msra.mxu0 0.0
    %1567 = vmatprep.subr.mxu0 0.0
    %1568 = vmatpush1.msra.mxu0 0.0
    %1569 = vmatprep.subr.mxu0 0.0
    %1570 = vmatpush1.msra.mxu0 0.0
    %1571 = vmatprep.subr.mxu0 0.0
    %1572 = vmatpush1.msra.mxu0 0.0
    %1573 = vmatprep.subr.mxu0 0.0
    %1574 = vmatpush1.msra.mxu0 0.0
    %1575 = vmatprep.mubr.f32.mxu0 0.0
    %1576 = vmatmul.mubr.f32.gmra.mrb[0].mxu0 %v1408
    %v1577 = vpop.f32.mrb[0].mxu0
    %v1578 = vadd.f32 0.0, %v1577
    %v1579 = vpop.f32.mrb[0].mxu0
    %1580 = vdwg.mxu0
    %v1581 = vadd.f32 %v1510, %v1578
    %v1582 = vadd.f32 %v1581, %v189
    %v1583 = vtanh.pop %v1582
    %v1584 = vxor.u32 %v1582, 2147483648
    %v1585 = vmul.f32 %v1584, 1.442695
    %v1586 = vpow.pop %v1585
    %v1587 = vadd.f32 %v1586, 1.0
    %v1588 = vrcp.pop %v1587
    %v1589 = vmul.f32 1.0, %v1588
    %v1590 = vsel %vm97, %v1583, %v1589
    %v1591 = vmul.f32 %v1590, %v1323
    %1593 = vrot.lane.b32.xlu0 %v1590, 64
    %v1594 = vpop.permute.xlu0 %1593
    %v1596 = vmul.f32 %v1590, %v1594
    %1598 = vrot.lane.b32.xlu0 %v1596, 32
    %v1599 = vpop.permute.xlu0 %1598
    %v1601 = vadd.f32 %v1591, %v1599
    %v1602 = vtanh.pop %v1601
    %1604 = vrot.lane.b32.xlu0 %v1602, 64
    %v1605 = vpop.permute.xlu0 %1604
    %v1607 = vmul.f32 %v1590, %v1605
    %1609 = vrot.lane.b32.xlu0 %v1505, 32
    %v1610 = vpop.permute.xlu0 %1609
    %v1611 = vsel %vm110, %v1610, 0
    %1613 = vmatprep.subr.mxu0 0.0
    %1614 = vmatpush1.msra.mxu0 %v86
    %1615 = vmatprep.subr.mxu0 0.0
    %1616 = vmatpush1.msra.mxu0 %v87
    %1617 = vmatprep.subr.mxu0 0.0
    %1618 = vmatpush1.msra.mxu0 %v88
    %1619 = vmatprep.subr.mxu0 0.0
    %1620 = vmatpush1.msra.mxu0 %v89
    %1621 = vmatprep.subr.mxu0 0.0
    %1622 = vmatpush1.msra.mxu0 0.0
    %1623 = vmatprep.subr.mxu0 0.0
    %1624 = vmatpush1.msra.mxu0 0.0
    %1625 = vmatprep.subr.mxu0 0.0
    %1626 = vmatpush1.msra.mxu0 0.0
    %1627 = vmatprep.subr.mxu0 0.0
    %1628 = vmatpush1.msra.mxu0 0.0
    %1629 = vmatprep.subr.mxu0 0.0
    %1630 = vmatpush1.msra.mxu0 0.0
    %1631 = vmatprep.subr.mxu0 0.0
    %1632 = vmatpush1.msra.mxu0 0.0
    %1633 = vmatprep.subr.mxu0 0.0
    %1634 = vmatpush1.msra.mxu0 0.0
    %1635 = vmatprep.subr.mxu0 0.0
    %1636 = vmatpush1.msra.mxu0 0.0
    %1637 = vmatprep.subr.mxu0 0.0
    %1638 = vmatpush1.msra.mxu0 0.0
    %1639 = vmatprep.subr.mxu0 0.0
    %1640 = vmatpush1.msra.mxu0 0.0
    %1641 = vmatprep.subr.mxu0 0.0
    %1642 = vmatpush1.msra.mxu0 0.0
    %1643 = vmatprep.subr.mxu0 0.0
    %1644 = vmatpush1.msra.mxu0 0.0
    %1645 = vmatprep.subr.mxu0 0.0
    %1646 = vmatpush1.msra.mxu0 0.0
    %1647 = vmatprep.subr.mxu0 0.0
    %1648 = vmatpush1.msra.mxu0 0.0
    %1649 = vmatprep.subr.mxu0 0.0
    %1650 = vmatpush1.msra.mxu0 0.0
    %1651 = vmatprep.subr.mxu0 0.0
    %1652 = vmatpush1.msra.mxu0 0.0
    %1653 = vmatprep.subr.mxu0 0.0
    %1654 = vmatpush1.msra.mxu0 0.0
    %1655 = vmatprep.subr.mxu0 0.0
    %1656 = vmatpush1.msra.mxu0 0.0
    %1657 = vmatprep.subr.mxu0 0.0
    %1658 = vmatpush1.msra.mxu0 0.0
    %1659 = vmatprep.subr.mxu0 0.0
    %1660 = vmatpush1.msra.mxu0 0.0
    %1661 = vmatprep.subr.mxu0 0.0
    %1662 = vmatpush1.msra.mxu0 0.0
    %1663 = vmatprep.subr.mxu0 0.0
    %1664 = vmatpush1.msra.mxu0 0.0
    %1665 = vmatprep.subr.mxu0 0.0
    %1666 = vmatpush1.msra.mxu0 0.0
    %1667 = vmatprep.subr.mxu0 0.0
    %1668 = vmatpush1.msra.mxu0 0.0
    %1669 = vmatprep.subr.mxu0 0.0
    %1670 = vmatpush1.msra.mxu0 0.0
    %1671 = vmatprep.subr.mxu0 0.0
    %1672 = vmatpush1.msra.mxu0 0.0
    %1673 = vmatprep.subr.mxu0 0.0
    %1674 = vmatpush1.msra.mxu0 0.0
    %1675 = vmatprep.subr.mxu0 0.0
    %1676 = vmatpush1.msra.mxu0 0.0
    %1677 = vmatprep.mubr.f32.mxu0 0.0
    %1678 = vmatmul.mubr.f32.gmra.mrb[0].mxu0 %v1611
    %v1679 = vpop.f32.mrb[0].mxu0
    %v1680 = vadd.f32 0.0, %v1679
    %v1681 = vpop.f32.mrb[0].mxu0
    %1682 = vdwg.mxu0
    %1684 = vrot.lane.b32.xlu0 %v1607, 32
    %v1685 = vpop.permute.xlu0 %1684
    %v1686 = vsel %vm110, %v1685, 0
    %1688 = vmatprep.subr.mxu0 0.0
    %1689 = vmatpush1.msra.mxu0 %v82
    %1690 = vmatprep.subr.mxu0 0.0
    %1691 = vmatpush1.msra.mxu0 %v83
    %1692 = vmatprep.subr.mxu0 0.0
    %1693 = vmatpush1.msra.mxu0 %v84
    %1694 = vmatprep.subr.mxu0 0.0
    %1695 = vmatpush1.msra.mxu0 %v85
    %1696 = vmatprep.subr.mxu0 0.0
    %1697 = vmatpush1.msra.mxu0 0.0
    %1698 = vmatprep.subr.mxu0 0.0
    %1699 = vmatpush1.msra.mxu0 0.0
    %1700 = vmatprep.subr.mxu0 0.0
    %1701 = vmatpush1.msra.mxu0 0.0
    %1702 = vmatprep.subr.mxu0 0.0
    %1703 = vmatpush1.msra.mxu0 0.0
    %1704 = vmatprep.subr.mxu0 0.0
    %1705 = vmatpush1.msra.mxu0 0.0
    %1706 = vmatprep.subr.mxu0 0.0
    %1707 = vmatpush1.msra.mxu0 0.0
    %1708 = vmatprep.subr.mxu0 0.0
    %1709 = vmatpush1.msra.mxu0 0.0
    %1710 = vmatprep.subr.mxu0 0.0
    %1711 = vmatpush1.msra.mxu0 0.0
    %1712 = vmatprep.subr.mxu0 0.0
    %1713 = vmatpush1.msra.mxu0 0.0
    %1714 = vmatprep.subr.mxu0 0.0
    %1715 = vmatpush1.msra.mxu0 0.0
    %1716 = vmatprep.subr.mxu0 0.0
    %1717 = vmatpush1.msra.mxu0 0.0
    %1718 = vmatprep.subr.mxu0 0.0
    %1719 = vmatpush1.msra.mxu0 0.0
    %1720 = vmatprep.subr.mxu0 0.0
    %1721 = vmatpush1.msra.mxu0 0.0
    %1722 = vmatprep.subr.mxu0 0.0
    %1723 = vmatpush1.msra.mxu0 0.0
    %1724 = vmatprep.subr.mxu0 0.0
    %1725 = vmatpush1.msra.mxu0 0.0
    %1726 = vmatprep.subr.mxu0 0.0
    %1727 = vmatpush1.msra.mxu0 0.0
    %1728 = vmatprep.subr.mxu0 0.0
    %1729 = vmatpush1.msra.mxu0 0.0
    %1730 = vmatprep.subr.mxu0 0.0
    %1731 = vmatpush1.msra.mxu0 0.0
    %1732 = vmatprep.subr.mxu0 0.0
    %1733 = vmatpush1.msra.mxu0 0.0
    %1734 = vmatprep.subr.mxu0 0.0
    %1735 = vmatpush1.msra.mxu0 0.0
    %1736 = vmatprep.subr.mxu0 0.0
    %1737 = vmatpush1.msra.mxu0 0.0
    %1738 = vmatprep.subr.mxu0 0.0
    %1739 = vmatpush1.msra.mxu0 0.0
    %1740 = vmatprep.subr.mxu0 0.0
    %1741 = vmatpush1.msra.mxu0 0.0
    %1742 = vmatprep.subr.mxu0 0.0
    %1743 = vmatpush1.msra.mxu0 0.0
    %1744 = vmatprep.subr.mxu0 0.0
    %1745 = vmatpush1.msra.mxu0 0.0
    %1746 = vmatprep.subr.mxu0 0.0
    %1747 = vmatpush1.msra.mxu0 0.0
    %1748 = vmatprep.subr.mxu0 0.0
    %1749 = vmatpush1.msra.mxu0 0.0
    %1750 = vmatprep.subr.mxu0 0.0
    %1751 = vmatpush1.msra.mxu0 0.0
    %1752 = vmatprep.mubr.f32.mxu0 0.0
    %1753 = vmatmul.mubr.f32.gmra.mrb[0].mxu0 %v1686
    %v1754 = vpop.f32.mrb[0].mxu0
    %v1755 = vadd.f32 %v1680, %v1754
    %v1756 = vpop.f32.mrb[0].mxu0
    %1757 = vdwg.mxu0
    %v1758 = vadd.f32 %v1755, %v366
    %v1759 = vtanh.pop %v1758
    %v1760 = vxor.u32 %v1758, 2147483648
    %v1761 = vmul.f32 %v1760, 1.442695
    %v1762 = vpow.pop %v1761
    %v1763 = vadd.f32 %v1762, 1.0
    %v1764 = vrcp.pop %v1763
    %v1765 = vmul.f32 1.0, %v1764
    %v1766 = vsel %vm97, %v1759, %v1765
    %v1767 = vmul.f32 %v1766, %v1499
    %1769 = vrot.lane.b32.xlu0 %v1766, 64
    %v1770 = vpop.permute.xlu0 %1769
    %v1772 = vmul.f32 %v1766, %v1770
    %1774 = vrot.lane.b32.xlu0 %v1772, 32
    %v1775 = vpop.permute.xlu0 %1774
    %v1777 = vadd.f32 %v1767, %v1775
    %v1778 = vtanh.pop %v1777
    %1780 = vrot.lane.b32.xlu0 %v1778, 64
    %v1781 = vpop.permute.xlu0 %1780
    %v1783 = vmul.f32 %v1766, %v1781
    %1784 = vset.pattern.permute.xlu0 6
    %1785 = vperm.xlu0 %1784, %v75
    %v1786 = vpop.permute.xlu0 %1785
    %v1788 = vmul.f32 %v1786, %v107
    %1789 = vmatprep.subr.mxu0 0.0
    %1790 = vmatpush1.msra.mxu0 %v77
    %1791 = vmatprep.subr.mxu0 0.0
    %1792 = vmatpush1.msra.mxu0 %v78
    %1793 = vmatprep.subr.mxu0 0.0
    %1794 = vmatpush1.msra.mxu0 %v79
    %1795 = vmatprep.subr.mxu0 0.0
    %1796 = vmatpush1.msra.mxu0 %v80
    %1797 = vmatprep.subr.mxu0 0.0
    %1798 = vmatpush1.msra.mxu0 0.0
    %1799 = vmatprep.subr.mxu0 0.0
    %1800 = vmatpush1.msra.mxu0 0.0
    %1801 = vmatprep.subr.mxu0 0.0
    %1802 = vmatpush1.msra.mxu0 0.0
    %1803 = vmatprep.subr.mxu0 0.0
    %1804 = vmatpush1.msra.mxu0 0.0
    %1805 = vmatprep.subr.mxu0 0.0
    %1806 = vmatpush1.msra.mxu0 0.0
    %1807 = vmatprep.subr.mxu0 0.0
    %1808 = vmatpush1.msra.mxu0 0.0
    %1809 = vmatprep.subr.mxu0 0.0
    %1810 = vmatpush1.msra.mxu0 0.0
    %1811 = vmatprep.subr.mxu0 0.0
    %1812 = vmatpush1.msra.mxu0 0.0
    %1813 = vmatprep.subr.mxu0 0.0
    %1814 = vmatpush1.msra.mxu0 0.0
    %1815 = vmatprep.subr.mxu0 0.0
    %1816 = vmatpush1.msra.mxu0 0.0
    %1817 = vmatprep.subr.mxu0 0.0
    %1818 = vmatpush1.msra.mxu0 0.0
    %1819 = vmatprep.subr.mxu0 0.0
    %1820 = vmatpush1.msra.mxu0 0.0
    %1821 = vmatprep.subr.mxu0 0.0
    %1822 = vmatpush1.msra.mxu0 0.0
    %1823 = vmatprep.subr.mxu0 0.0
    %1824 = vmatpush1.msra.mxu0 0.0
    %1825 = vmatprep.subr.mxu0 0.0
    %1826 = vmatpush1.msra.mxu0 0.0
    %1827 = vmatprep.subr.mxu0 0.0
    %1828 = vmatpush1.msra.mxu0 0.0
    %1829 = vmatprep.subr.mxu0 0.0
    %1830 = vmatpush1.msra.mxu0 0.0
    %1831 = vmatprep.subr.mxu0 0.0
    %1832 = vmatpush1.msra.mxu0 0.0
    %1833 = vmatprep.subr.mxu0 0.0
    %1834 = vmatpush1.msra.mxu0 0.0
    %1835 = vmatprep.subr.mxu0 0.0
    %1836 = vmatpush1.msra.mxu0 0.0
    %1837 = vmatprep.subr.mxu0 0.0
    %1838 = vmatpush1.msra.mxu0 0.0
    %1839 = vmatprep.subr.mxu0 0.0
    %1840 = vmatpush1.msra.mxu0 0.0
    %1841 = vmatprep.subr.mxu0 0.0
    %1842 = vmatpush1.msra.mxu0 0.0
    %1843 = vmatprep.subr.mxu0 0.0
    %1844 = vmatpush1.msra.mxu0 0.0
    %1845 = vmatprep.subr.mxu0 0.0
    %1846 = vmatpush1.msra.mxu0 0.0
    %1847 = vmatprep.subr.mxu0 0.0
    %1848 = vmatpush1.msra.mxu0 0.0
    %1849 = vmatprep.subr.mxu0 0.0
    %1850 = vmatpush1.msra.mxu0 0.0
    %1851 = vmatprep.subr.mxu0 0.0
    %1852 = vmatpush1.msra.mxu0 0.0
    %1853 = vmatprep.mubr.f32.mxu0 0.0
    %1854 = vmatmul.mubr.f32.gmra.mrb[0].mxu0 %v1686
    %v1855 = vpop.f32.mrb[0].mxu0
    %v1856 = vadd.f32 0.0, %v1855
    %v1857 = vpop.f32.mrb[0].mxu0
    %1858 = vdwg.mxu0
    %v1859 = vadd.f32 %v1788, %v1856
    %v1860 = vadd.f32 %v1859, %v189
    %v1861 = vtanh.pop %v1860
    %v1862 = vxor.u32 %v1860, 2147483648
    %v1863 = vmul.f32 %v1862, 1.442695
    %v1864 = vpow.pop %v1863
    %v1865 = vadd.f32 %v1864, 1.0
    %v1866 = vrcp.pop %v1865
    %v1867 = vmul.f32 1.0, %v1866
    %v1868 = vsel %vm97, %v1861, %v1867
    %v1869 = vmul.f32 %v1868, %v1601
    %1871 = vrot.lane.b32.xlu0 %v1868, 64
    %v1872 = vpop.permute.xlu0 %1871
    %v1874 = vmul.f32 %v1868, %v1872
    %1876 = vrot.lane.b32.xlu0 %v1874, 32
    %v1877 = vpop.permute.xlu0 %1876
    %v1879 = vadd.f32 %v1869, %v1877
    %v1880 = vtanh.pop %v1879
    %1882 = vrot.lane.b32.xlu0 %v1880, 64
    %v1883 = vpop.permute.xlu0 %1882
    %v1885 = vmul.f32 %v1868, %v1883
    %1887 = vrot.lane.b32.xlu0 %v1783, 32
    %v1888 = vpop.permute.xlu0 %1887
    %v1889 = vsel %vm110, %v1888, 0
    %1891 = vmatprep.subr.mxu0 0.0
    %1892 = vmatpush1.msra.mxu0 %v86
    %1893 = vmatprep.subr.mxu0 0.0
    %1894 = vmatpush1.msra.mxu0 %v87
    %1895 = vmatprep.subr.mxu0 0.0
    %1896 = vmatpush1.msra.mxu0 %v88
    %1897 = vmatprep.subr.mxu0 0.0
    %1898 = vmatpush1.msra.mxu0 %v89
    %1899 = vmatprep.subr.mxu0 0.0
    %1900 = vmatpush1.msra.mxu0 0.0
    %1901 = vmatprep.subr.mxu0 0.0
    %1902 = vmatpush1.msra.mxu0 0.0
    %1903 = vmatprep.subr.mxu0 0.0
    %1904 = vmatpush1.msra.mxu0 0.0
    %1905 = vmatprep.subr.mxu0 0.0
    %1906 = vmatpush1.msra.mxu0 0.0
    %1907 = vmatprep.subr.mxu0 0.0
    %1908 = vmatpush1.msra.mxu0 0.0
    %1909 = vmatprep.subr.mxu0 0.0
    %1910 = vmatpush1.msra.mxu0 0.0
    %1911 = vmatprep.subr.mxu0 0.0
    %1912 = vmatpush1.msra.mxu0 0.0
    %1913 = vmatprep.subr.mxu0 0.0
    %1914 = vmatpush1.msra.mxu0 0.0
    %1915 = vmatprep.subr.mxu0 0.0
    %1916 = vmatpush1.msra.mxu0 0.0
    %1917 = vmatprep.subr.mxu0 0.0
    %1918 = vmatpush1.msra.mxu0 0.0
    %1919 = vmatprep.subr.mxu0 0.0
    %1920 = vmatpush1.msra.mxu0 0.0
    %1921 = vmatprep.subr.mxu0 0.0
    %1922 = vmatpush1.msra.mxu0 0.0
    %1923 = vmatprep.subr.mxu0 0.0
    %1924 = vmatpush1.msra.mxu0 0.0
    %1925 = vmatprep.subr.mxu0 0.0
    %1926 = vmatpush1.msra.mxu0 0.0
    %1927 = vmatprep.subr.mxu0 0.0
    %1928 = vmatpush1.msra.mxu0 0.0
    %1929 = vmatprep.subr.mxu0 0.0
    %1930 = vmatpush1.msra.mxu0 0.0
    %1931 = vmatprep.subr.mxu0 0.0
    %1932 = vmatpush1.msra.mxu0 0.0
    %1933 = vmatprep.subr.mxu0 0.0
    %1934 = vmatpush1.msra.mxu0 0.0
    %1935 = vmatprep.subr.mxu0 0.0
    %1936 = vmatpush1.msra.mxu0 0.0
    %1937 = vmatprep.subr.mxu0 0.0
    %1938 = vmatpush1.msra.mxu0 0.0
    %1939 = vmatprep.subr.mxu0 0.0
    %1940 = vmatpush1.msra.mxu0 0.0
    %1941 = vmatprep.subr.mxu0 0.0
    %1942 = vmatpush1.msra.mxu0 0.0
    %1943 = vmatprep.subr.mxu0 0.0
    %1944 = vmatpush1.msra.mxu0 0.0
    %1945 = vmatprep.subr.mxu0 0.0
    %1946 = vmatpush1.msra.mxu0 0.0
    %1947 = vmatprep.subr.mxu0 0.0
    %1948 = vmatpush1.msra.mxu0 0.0
    %1949 = vmatprep.subr.mxu0 0.0
    %1950 = vmatpush1.msra.mxu0 0.0
    %1951 = vmatprep.subr.mxu0 0.0
    %1952 = vmatpush1.msra.mxu0 0.0
    %1953 = vmatprep.subr.mxu0 0.0
    %1954 = vmatpush1.msra.mxu0 0.0
    %1955 = vmatprep.mubr.f32.mxu0 0.0
    %1956 = vmatmul.mubr.f32.gmra.mrb[0].mxu0 %v1889
    %v1957 = vpop.f32.mrb[0].mxu0
    %v1958 = vadd.f32 0.0, %v1957
    %v1959 = vpop.f32.mrb[0].mxu0
    %1960 = vdwg.mxu0
    %1962 = vrot.lane.b32.xlu0 %v1885, 32
    %v1963 = vpop.permute.xlu0 %1962
    %v1964 = vsel %vm110, %v1963, 0
    %1966 = vmatprep.subr.mxu0 0.0
    %1967 = vmatpush1.msra.mxu0 %v82
    %1968 = vmatprep.subr.mxu0 0.0
    %1969 = vmatpush1.msra.mxu0 %v83
    %1970 = vmatprep.subr.mxu0 0.0
    %1971 = vmatpush1.msra.mxu0 %v84
    %1972 = vmatprep.subr.mxu0 0.0
    %1973 = vmatpush1.msra.mxu0 %v85
    %1974 = vmatprep.subr.mxu0 0.0
    %1975 = vmatpush1.msra.mxu0 0.0
    %1976 = vmatprep.subr.mxu0 0.0
    %1977 = vmatpush1.msra.mxu0 0.0
    %1978 = vmatprep.subr.mxu0 0.0
    %1979 = vmatpush1.msra.mxu0 0.0
    %1980 = vmatprep.subr.mxu0 0.0
    %1981 = vmatpush1.msra.mxu0 0.0
    %1982 = vmatprep.subr.mxu0 0.0
    %1983 = vmatpush1.msra.mxu0 0.0
    %1984 = vmatprep.subr.mxu0 0.0
    %1985 = vmatpush1.msra.mxu0 0.0
    %1986 = vmatprep.subr.mxu0 0.0
    %1987 = vmatpush1.msra.mxu0 0.0
    %1988 = vmatprep.subr.mxu0 0.0
    %1989 = vmatpush1.msra.mxu0 0.0
    %1990 = vmatprep.subr.mxu0 0.0
    %1991 = vmatpush1.msra.mxu0 0.0
    %1992 = vmatprep.subr.mxu0 0.0
    %1993 = vmatpush1.msra.mxu0 0.0
    %1994 = vmatprep.subr.mxu0 0.0
    %1995 = vmatpush1.msra.mxu0 0.0
    %1996 = vmatprep.subr.mxu0 0.0
    %1997 = vmatpush1.msra.mxu0 0.0
    %1998 = vmatprep.subr.mxu0 0.0
    %1999 = vmatpush1.msra.mxu0 0.0
    %2000 = vmatprep.subr.mxu0 0.0
    %2001 = vmatpush1.msra.mxu0 0.0
    %2002 = vmatprep.subr.mxu0 0.0
    %2003 = vmatpush1.msra.mxu0 0.0
    %2004 = vmatprep.subr.mxu0 0.0
    %2005 = vmatpush1.msra.mxu0 0.0
    %2006 = vmatprep.subr.mxu0 0.0
    %2007 = vmatpush1.msra.mxu0 0.0
    %2008 = vmatprep.subr.mxu0 0.0
    %2009 = vmatpush1.msra.mxu0 0.0
    %2010 = vmatprep.subr.mxu0 0.0
    %2011 = vmatpush1.msra.mxu0 0.0
    %2012 = vmatprep.subr.mxu0 0.0
    %2013 = vmatpush1.msra.mxu0 0.0
    %2014 = vmatprep.subr.mxu0 0.0
    %2015 = vmatpush1.msra.mxu0 0.0
    %2016 = vmatprep.subr.mxu0 0.0
    %2017 = vmatpush1.msra.mxu0 0.0
    %2018 = vmatprep.subr.mxu0 0.0
    %2019 = vmatpush1.msra.mxu0 0.0
    %2020 = vmatprep.subr.mxu0 0.0
    %2021 = vmatpush1.msra.mxu0 0.0
    %2022 = vmatprep.subr.mxu0 0.0
    %2023 = vmatpush1.msra.mxu0 0.0
    %2024 = vmatprep.subr.mxu0 0.0
    %2025 = vmatpush1.msra.mxu0 0.0
    %2026 = vmatprep.subr.mxu0 0.0
    %2027 = vmatpush1.msra.mxu0 0.0
    %2028 = vmatprep.subr.mxu0 0.0
    %2029 = vmatpush1.msra.mxu0 0.0
    %2030 = vmatprep.mubr.f32.mxu0 0.0
    %2031 = vmatmul.mubr.f32.gmra.mrb[0].mxu0 %v1964
    %v2032 = vpop.f32.mrb[0].mxu0
    %v2033 = vadd.f32 %v1958, %v2032
    %v2034 = vpop.f32.mrb[0].mxu0
    %2035 = vdwg.mxu0
    %v2036 = vadd.f32 %v2033, %v366
    %v2037 = vtanh.pop %v2036
    %v2038 = vxor.u32 %v2036, 2147483648
    %v2039 = vmul.f32 %v2038, 1.442695
    %v2040 = vpow.pop %v2039
    %v2041 = vadd.f32 %v2040, 1.0
    %v2042 = vrcp.pop %v2041
    %v2043 = vmul.f32 1.0, %v2042
    %v2044 = vsel %vm97, %v2037, %v2043
    %v2045 = vmul.f32 %v2044, %v1777
    %2047 = vrot.lane.b32.xlu0 %v2044, 64
    %v2048 = vpop.permute.xlu0 %2047
    %v2050 = vmul.f32 %v2044, %v2048
    %2052 = vrot.lane.b32.xlu0 %v2050, 32
    %v2053 = vpop.permute.xlu0 %2052
    %v2055 = vadd.f32 %v2045, %v2053
    %v2056 = vtanh.pop %v2055
    %2058 = vrot.lane.b32.xlu0 %v2056, 64
    %v2059 = vpop.permute.xlu0 %2058
    %v2061 = vmul.f32 %v2044, %v2059
    %2062 = vset.pattern.permute.xlu0 7
    %2063 = vperm.xlu0 %2062, %v75
    %v2064 = vpop.permute.xlu0 %2063
    %v2066 = vmul.f32 %v2064, %v107
    %2067 = vmatprep.subr.mxu0 0.0
    %2068 = vmatpush1.msra.mxu0 %v77
    %2069 = vmatprep.subr.mxu0 0.0
    %2070 = vmatpush1.msra.mxu0 %v78
    %2071 = vmatprep.subr.mxu0 0.0
    %2072 = vmatpush1.msra.mxu0 %v79
    %2073 = vmatprep.subr.mxu0 0.0
    %2074 = vmatpush1.msra.mxu0 %v80
    %2075 = vmatprep.subr.mxu0 0.0
    %2076 = vmatpush1.msra.mxu0 0.0
    %2077 = vmatprep.subr.mxu0 0.0
    %2078 = vmatpush1.msra.mxu0 0.0
    %2079 = vmatprep.subr.mxu0 0.0
    %2080 = vmatpush1.msra.mxu0 0.0
    %2081 = vmatprep.subr.mxu0 0.0
    %2082 = vmatpush1.msra.mxu0 0.0
    %2083 = vmatprep.subr.mxu0 0.0
    %2084 = vmatpush1.msra.mxu0 0.0
    %2085 = vmatprep.subr.mxu0 0.0
    %2086 = vmatpush1.msra.mxu0 0.0
    %2087 = vmatprep.subr.mxu0 0.0
    %2088 = vmatpush1.msra.mxu0 0.0
    %2089 = vmatprep.subr.mxu0 0.0
    %2090 = vmatpush1.msra.mxu0 0.0
    %2091 = vmatprep.subr.mxu0 0.0
    %2092 = vmatpush1.msra.mxu0 0.0
    %2093 = vmatprep.subr.mxu0 0.0
    %2094 = vmatpush1.msra.mxu0 0.0
    %2095 = vmatprep.subr.mxu0 0.0
    %2096 = vmatpush1.msra.mxu0 0.0
    %2097 = vmatprep.subr.mxu0 0.0
    %2098 = vmatpush1.msra.mxu0 0.0
    %2099 = vmatprep.subr.mxu0 0.0
    %2100 = vmatpush1.msra.mxu0 0.0
    %2101 = vmatprep.subr.mxu0 0.0
    %2102 = vmatpush1.msra.mxu0 0.0
    %2103 = vmatprep.subr.mxu0 0.0
    %2104 = vmatpush1.msra.mxu0 0.0
    %2105 = vmatprep.subr.mxu0 0.0
    %2106 = vmatpush1.msra.mxu0 0.0
    %2107 = vmatprep.subr.mxu0 0.0
    %2108 = vmatpush1.msra.mxu0 0.0
    %2109 = vmatprep.subr.mxu0 0.0
    %2110 = vmatpush1.msra.mxu0 0.0
    %2111 = vmatprep.subr.mxu0 0.0
    %2112 = vmatpush1.msra.mxu0 0.0
    %2113 = vmatprep.subr.mxu0 0.0
    %2114 = vmatpush1.msra.mxu0 0.0
    %2115 = vmatprep.subr.mxu0 0.0
    %2116 = vmatpush1.msra.mxu0 0.0
    %2117 = vmatprep.subr.mxu0 0.0
    %2118 = vmatpush1.msra.mxu0 0.0
    %2119 = vmatprep.subr.mxu0 0.0
    %2120 = vmatpush1.msra.mxu0 0.0
    %2121 = vmatprep.subr.mxu0 0.0
    %2122 = vmatpush1.msra.mxu0 0.0
    %2123 = vmatprep.subr.mxu0 0.0
    %2124 = vmatpush1.msra.mxu0 0.0
    %2125 = vmatprep.subr.mxu0 0.0
    %2126 = vmatpush1.msra.mxu0 0.0
    %2127 = vmatprep.subr.mxu0 0.0
    %2128 = vmatpush1.msra.mxu0 0.0
    %2129 = vmatprep.subr.mxu0 0.0
    %2130 = vmatpush1.msra.mxu0 0.0
    %2131 = vmatprep.mubr.f32.mxu0 0.0
    %2132 = vmatmul.mubr.f32.gmra.mrb[0].mxu0 %v1964
    %v2133 = vpop.f32.mrb[0].mxu0
    %v2134 = vadd.f32 0.0, %v2133
    %v2135 = vpop.f32.mrb[0].mxu0
    %2136 = vdwg.mxu0
    %v2137 = vadd.f32 %v2066, %v2134
    %v2138 = vadd.f32 %v2137, %v189
    %v2139 = vtanh.pop %v2138
    %v2140 = vxor.u32 %v2138, 2147483648
    %v2141 = vmul.f32 %v2140, 1.442695
    %v2142 = vpow.pop %v2141
    %v2143 = vadd.f32 %v2142, 1.0
    %v2144 = vrcp.pop %v2143
    %v2145 = vmul.f32 1.0, %v2144
    %v2146 = vsel %vm97, %v2139, %v2145
    %v2147 = vmul.f32 %v2146, %v1879
    %2149 = vrot.lane.b32.xlu0 %v2146, 64
    %v2150 = vpop.permute.xlu0 %2149
    %v2152 = vmul.f32 %v2146, %v2150
    %2154 = vrot.lane.b32.xlu0 %v2152, 32
    %v2155 = vpop.permute.xlu0 %2154
    %v2157 = vadd.f32 %v2147, %v2155
    %v2158 = vtanh.pop %v2157
    %2160 = vrot.lane.b32.xlu0 %v2158, 64
    %v2161 = vpop.permute.xlu0 %2160
    %v2163 = vmul.f32 %v2146, %v2161
    %2165 = vrot.lane.b32.xlu0 %v2061, 32
    %v2166 = vpop.permute.xlu0 %2165
    %v2167 = vsel %vm110, %v2166, 0
    %2169 = vmatprep.subr.mxu0 0.0
    %2170 = vmatpush1.msra.mxu0 %v86
    %2171 = vmatprep.subr.mxu0 0.0
    %2172 = vmatpush1.msra.mxu0 %v87
    %2173 = vmatprep.subr.mxu0 0.0
    %2174 = vmatpush1.msra.mxu0 %v88
    %2175 = vmatprep.subr.mxu0 0.0
    %2176 = vmatpush1.msra.mxu0 %v89
    %2177 = vmatprep.subr.mxu0 0.0
    %2178 = vmatpush1.msra.mxu0 0.0
    %2179 = vmatprep.subr.mxu0 0.0
    %2180 = vmatpush1.msra.mxu0 0.0
    %2181 = vmatprep.subr.mxu0 0.0
    %2182 = vmatpush1.msra.mxu0 0.0
    %2183 = vmatprep.subr.mxu0 0.0
    %2184 = vmatpush1.msra.mxu0 0.0
    %2185 = vmatprep.subr.mxu0 0.0
    %2186 = vmatpush1.msra.mxu0 0.0
    %2187 = vmatprep.subr.mxu0 0.0
    %2188 = vmatpush1.msra.mxu0 0.0
    %2189 = vmatprep.subr.mxu0 0.0
    %2190 = vmatpush1.msra.mxu0 0.0
    %2191 = vmatprep.subr.mxu0 0.0
    %2192 = vmatpush1.msra.mxu0 0.0
    %2193 = vmatprep.subr.mxu0 0.0
    %2194 = vmatpush1.msra.mxu0 0.0
    %2195 = vmatprep.subr.mxu0 0.0
    %2196 = vmatpush1.msra.mxu0 0.0
    %2197 = vmatprep.subr.mxu0 0.0
    %2198 = vmatpush1.msra.mxu0 0.0
    %2199 = vmatprep.subr.mxu0 0.0
    %2200 = vmatpush1.msra.mxu0 0.0
    %2201 = vmatprep.subr.mxu0 0.0
    %2202 = vmatpush1.msra.mxu0 0.0
    %2203 = vmatprep.subr.mxu0 0.0
    %2204 = vmatpush1.msra.mxu0 0.0
    %2205 = vmatprep.subr.mxu0 0.0
    %2206 = vmatpush1.msra.mxu0 0.0
    %2207 = vmatprep.subr.mxu0 0.0
    %2208 = vmatpush1.msra.mxu0 0.0
    %2209 = vmatprep.subr.mxu0 0.0
    %2210 = vmatpush1.msra.mxu0 0.0
    %2211 = vmatprep.subr.mxu0 0.0
    %2212 = vmatpush1.msra.mxu0 0.0
    %2213 = vmatprep.subr.mxu0 0.0
    %2214 = vmatpush1.msra.mxu0 0.0
    %2215 = vmatprep.subr.mxu0 0.0
    %2216 = vmatpush1.msra.mxu0 0.0
    %2217 = vmatprep.subr.mxu0 0.0
    %2218 = vmatpush1.msra.mxu0 0.0
    %2219 = vmatprep.subr.mxu0 0.0
    %2220 = vmatpush1.msra.mxu0 0.0
    %2221 = vmatprep.subr.mxu0 0.0
    %2222 = vmatpush1.msra.mxu0 0.0
    %2223 = vmatprep.subr.mxu0 0.0
    %2224 = vmatpush1.msra.mxu0 0.0
    %2225 = vmatprep.subr.mxu0 0.0
    %2226 = vmatpush1.msra.mxu0 0.0
    %2227 = vmatprep.subr.mxu0 0.0
    %2228 = vmatpush1.msra.mxu0 0.0
    %2229 = vmatprep.subr.mxu0 0.0
    %2230 = vmatpush1.msra.mxu0 0.0
    %2231 = vmatprep.subr.mxu0 0.0
    %2232 = vmatpush1.msra.mxu0 0.0
    %2233 = vmatprep.mubr.f32.mxu0 0.0
    %2234 = vmatmul.mubr.f32.gmra.mrb[0].mxu0 %v2167
    %v2235 = vpop.f32.mrb[0].mxu0
    %v2236 = vadd.f32 0.0, %v2235
    %v2237 = vpop.f32.mrb[0].mxu0
    %2238 = vdwg.mxu0
    %2240 = vrot.lane.b32.xlu0 %v2163, 32
    %v2241 = vpop.permute.xlu0 %2240
    %v2242 = vsel %vm110, %v2241, 0
    %2244 = vmatprep.subr.mxu0 0.0
    %2245 = vmatpush1.msra.mxu0 %v82
    %2246 = vmatprep.subr.mxu0 0.0
    %2247 = vmatpush1.msra.mxu0 %v83
    %2248 = vmatprep.subr.mxu0 0.0
    %2249 = vmatpush1.msra.mxu0 %v84
    %2250 = vmatprep.subr.mxu0 0.0
    %2251 = vmatpush1.msra.mxu0 %v85
    %2252 = vmatprep.subr.mxu0 0.0
    %2253 = vmatpush1.msra.mxu0 0.0
    %2254 = vmatprep.subr.mxu0 0.0
    %2255 = vmatpush1.msra.mxu0 0.0
    %2256 = vmatprep.subr.mxu0 0.0
    %2257 = vmatpush1.msra.mxu0 0.0
    %2258 = vmatprep.subr.mxu0 0.0
    %2259 = vmatpush1.msra.mxu0 0.0
    %2260 = vmatprep.subr.mxu0 0.0
    %2261 = vmatpush1.msra.mxu0 0.0
    %2262 = vmatprep.subr.mxu0 0.0
    %2263 = vmatpush1.msra.mxu0 0.0
    %2264 = vmatprep.subr.mxu0 0.0
    %2265 = vmatpush1.msra.mxu0 0.0
    %2266 = vmatprep.subr.mxu0 0.0
    %2267 = vmatpush1.msra.mxu0 0.0
    %2268 = vmatprep.subr.mxu0 0.0
    %2269 = vmatpush1.msra.mxu0 0.0
    %2270 = vmatprep.subr.mxu0 0.0
    %2271 = vmatpush1.msra.mxu0 0.0
    %2272 = vmatprep.subr.mxu0 0.0
    %2273 = vmatpush1.msra.mxu0 0.0
    %2274 = vmatprep.subr.mxu0 0.0
    %2275 = vmatpush1.msra.mxu0 0.0
    %2276 = vmatprep.subr.mxu0 0.0
    %2277 = vmatpush1.msra.mxu0 0.0
    %2278 = vmatprep.subr.mxu0 0.0
    %2279 = vmatpush1.msra.mxu0 0.0
    %2280 = vmatprep.subr.mxu0 0.0
    %2281 = vmatpush1.msra.mxu0 0.0
    %2282 = vmatprep.subr.mxu0 0.0
    %2283 = vmatpush1.msra.mxu0 0.0
    %2284 = vmatprep.subr.mxu0 0.0
    %2285 = vmatpush1.msra.mxu0 0.0
    %2286 = vmatprep.subr.mxu0 0.0
    %2287 = vmatpush1.msra.mxu0 0.0
    %2288 = vmatprep.subr.mxu0 0.0
    %2289 = vmatpush1.msra.mxu0 0.0
    %2290 = vmatprep.subr.mxu0 0.0
    %2291 = vmatpush1.msra.mxu0 0.0
    %2292 = vmatprep.subr.mxu0 0.0
    %2293 = vmatpush1.msra.mxu0 0.0
    %2294 = vmatprep.subr.mxu0 0.0
    %2295 = vmatpush1.msra.mxu0 0.0
    %2296 = vmatprep.subr.mxu0 0.0
    %2297 = vmatpush1.msra.mxu0 0.0
    %2298 = vmatprep.subr.mxu0 0.0
    %2299 = vmatpush1.msra.mxu0 0.0
    %2300 = vmatprep.subr.mxu0 0.0
    %2301 = vmatpush1.msra.mxu0 0.0
    %2302 = vmatprep.subr.mxu0 0.0
    %2303 = vmatpush1.msra.mxu0 0.0
    %2304 = vmatprep.subr.mxu0 0.0
    %2305 = vmatpush1.msra.mxu0 0.0
    %2306 = vmatprep.subr.mxu0 0.0
    %2307 = vmatpush1.msra.mxu0 0.0
    %2308 = vmatprep.mubr.f32.mxu0 0.0
    %2309 = vmatmul.mubr.f32.gmra.mrb[0].mxu0 %v2242
    %v2310 = vpop.f32.mrb[0].mxu0
    %v2311 = vadd.f32 %v2236, %v2310
    %v2312 = vpop.f32.mrb[0].mxu0
    %2313 = vdwg.mxu0
    %v2314 = vadd.f32 %v2311, %v366
    %v2315 = vtanh.pop %v2314
    %v2316 = vxor.u32 %v2314, 2147483648
    %v2317 = vmul.f32 %v2316, 1.442695
    %v2318 = vpow.pop %v2317
    %v2319 = vadd.f32 %v2318, 1.0
    %v2320 = vrcp.pop %v2319
    %v2321 = vmul.f32 1.0, %v2320
    %v2322 = vsel %vm97, %v2315, %v2321
    %v2323 = vmul.f32 %v2322, %v2055
    %2325 = vrot.lane.b32.xlu0 %v2322, 64
    %v2326 = vpop.permute.xlu0 %2325
    %v2328 = vmul.f32 %v2322, %v2326
    %2330 = vrot.lane.b32.xlu0 %v2328, 32
    %v2331 = vpop.permute.xlu0 %2330
    %v2333 = vadd.f32 %v2323, %v2331
    %v2334 = vtanh.pop %v2333
    %2336 = vrot.lane.b32.xlu0 %v2334, 64
    %v2337 = vpop.permute.xlu0 %2336
    %v2339 = vmul.f32 %v2322, %v2337
    %2340 = vset.pattern.permute.xlu0 8
    %2341 = vperm.xlu0 %2340, %v75
    %v2342 = vpop.permute.xlu0 %2341
    %v2344 = vmul.f32 %v2342, %v107
    %2345 = vmatprep.subr.mxu0 0.0
    %2346 = vmatpush1.msra.mxu0 %v77
    %2347 = vmatprep.subr.mxu0 0.0
    %2348 = vmatpush1.msra.mxu0 %v78
    %2349 = vmatprep.subr.mxu0 0.0
    %2350 = vmatpush1.msra.mxu0 %v79
    %2351 = vmatprep.subr.mxu0 0.0
    %2352 = vmatpush1.msra.mxu0 %v80
    %2353 = vmatprep.subr.mxu0 0.0
    %2354 = vmatpush1.msra.mxu0 0.0
    %2355 = vmatprep.subr.mxu0 0.0
    %2356 = vmatpush1.msra.mxu0 0.0
    %2357 = vmatprep.subr.mxu0 0.0
    %2358 = vmatpush1.msra.mxu0 0.0
    %2359 = vmatprep.subr.mxu0 0.0
    %2360 = vmatpush1.msra.mxu0 0.0
    %2361 = vmatprep.subr.mxu0 0.0
    %2362 = vmatpush1.msra.mxu0 0.0
    %2363 = vmatprep.subr.mxu0 0.0
    %2364 = vmatpush1.msra.mxu0 0.0
    %2365 = vmatprep.subr.mxu0 0.0
    %2366 = vmatpush1.msra.mxu0 0.0
    %2367 = vmatprep.subr.mxu0 0.0
    %2368 = vmatpush1.msra.mxu0 0.0
    %2369 = vmatprep.subr.mxu0 0.0
    %2370 = vmatpush1.msra.mxu0 0.0
    %2371 = vmatprep.subr.mxu0 0.0
    %2372 = vmatpush1.msra.mxu0 0.0
    %2373 = vmatprep.subr.mxu0 0.0
    %2374 = vmatpush1.msra.mxu0 0.0
    %2375 = vmatprep.subr.mxu0 0.0
    %2376 = vmatpush1.msra.mxu0 0.0
    %2377 = vmatprep.subr.mxu0 0.0
    %2378 = vmatpush1.msra.mxu0 0.0
    %2379 = vmatprep.subr.mxu0 0.0
    %2380 = vmatpush1.msra.mxu0 0.0
    %2381 = vmatprep.subr.mxu0 0.0
    %2382 = vmatpush1.msra.mxu0 0.0
    %2383 = vmatprep.subr.mxu0 0.0
    %2384 = vmatpush1.msra.mxu0 0.0
    %2385 = vmatprep.subr.mxu0 0.0
    %2386 = vmatpush1.msra.mxu0 0.0
    %2387 = vmatprep.subr.mxu0 0.0
    %2388 = vmatpush1.msra.mxu0 0.0
    %2389 = vmatprep.subr.mxu0 0.0
    %2390 = vmatpush1.msra.mxu0 0.0
    %2391 = vmatprep.subr.mxu0 0.0
    %2392 = vmatpush1.msra.mxu0 0.0
    %2393 = vmatprep.subr.mxu0 0.0
    %2394 = vmatpush1.msra.mxu0 0.0
    %2395 = vmatprep.subr.mxu0 0.0
    %2396 = vmatpush1.msra.mxu0 0.0
    %2397 = vmatprep.subr.mxu0 0.0
    %2398 = vmatpush1.msra.mxu0 0.0
    %2399 = vmatprep.subr.mxu0 0.0
    %2400 = vmatpush1.msra.mxu0 0.0
    %2401 = vmatprep.subr.mxu0 0.0
    %2402 = vmatpush1.msra.mxu0 0.0
    %2403 = vmatprep.subr.mxu0 0.0
    %2404 = vmatpush1.msra.mxu0 0.0
    %2405 = vmatprep.subr.mxu0 0.0
    %2406 = vmatpush1.msra.mxu0 0.0
    %2407 = vmatprep.subr.mxu0 0.0
    %2408 = vmatpush1.msra.mxu0 0.0
    %2409 = vmatprep.mubr.f32.mxu0 0.0
    %2410 = vmatmul.mubr.f32.gmra.mrb[0].mxu0 %v2242
    %v2411 = vpop.f32.mrb[0].mxu0
    %v2412 = vadd.f32 0.0, %v2411
    %v2413 = vpop.f32.mrb[0].mxu0
    %2414 = vdwg.mxu0
    %v2415 = vadd.f32 %v2344, %v2412
    %v2416 = vadd.f32 %v2415, %v189
    %v2417 = vtanh.pop %v2416
    %v2418 = vxor.u32 %v2416, 2147483648
    %v2419 = vmul.f32 %v2418, 1.442695
    %v2420 = vpow.pop %v2419
    %v2421 = vadd.f32 %v2420, 1.0
    %v2422 = vrcp.pop %v2421
    %v2423 = vmul.f32 1.0, %v2422
    %v2424 = vsel %vm97, %v2417, %v2423
    %v2425 = vmul.f32 %v2424, %v2157
    %2427 = vrot.lane.b32.xlu0 %v2424, 64
    %v2428 = vpop.permute.xlu0 %2427
    %v2430 = vmul.f32 %v2424, %v2428
    %2432 = vrot.lane.b32.xlu0 %v2430, 32
    %v2433 = vpop.permute.xlu0 %2432
    %v2435 = vadd.f32 %v2425, %v2433
    %v2436 = vtanh.pop %v2435
    %2438 = vrot.lane.b32.xlu0 %v2436, 64
    %v2439 = vpop.permute.xlu0 %2438
    %v2441 = vmul.f32 %v2424, %v2439
    %2443 = vrot.lane.b32.xlu0 %v2339, 32
    %v2444 = vpop.permute.xlu0 %2443
    %v2445 = vsel %vm110, %v2444, 0
    %2447 = vmatprep.subr.mxu0 0.0
    %2448 = vmatpush1.msra.mxu0 %v86
    %2449 = vmatprep.subr.mxu0 0.0
    %2450 = vmatpush1.msra.mxu0 %v87
    %2451 = vmatprep.subr.mxu0 0.0
    %2452 = vmatpush1.msra.mxu0 %v88
    %2453 = vmatprep.subr.mxu0 0.0
    %2454 = vmatpush1.msra.mxu0 %v89
    %2455 = vmatprep.subr.mxu0 0.0
    %2456 = vmatpush1.msra.mxu0 0.0
    %2457 = vmatprep.subr.mxu0 0.0
    %2458 = vmatpush1.msra.mxu0 0.0
    %2459 = vmatprep.subr.mxu0 0.0
    %2460 = vmatpush1.msra.mxu0 0.0
    %2461 = vmatprep.subr.mxu0 0.0
    %2462 = vmatpush1.msra.mxu0 0.0
    %2463 = vmatprep.subr.mxu0 0.0
    %2464 = vmatpush1.msra.mxu0 0.0
    %2465 = vmatprep.subr.mxu0 0.0
    %2466 = vmatpush1.msra.mxu0 0.0
    %2467 = vmatprep.subr.mxu0 0.0
    %2468 = vmatpush1.msra.mxu0 0.0
    %2469 = vmatprep.subr.mxu0 0.0
    %2470 = vmatpush1.msra.mxu0 0.0
    %2471 = vmatprep.subr.mxu0 0.0
    %2472 = vmatpush1.msra.mxu0 0.0
    %2473 = vmatprep.subr.mxu0 0.0
    %2474 = vmatpush1.msra.mxu0 0.0
    %2475 = vmatprep.subr.mxu0 0.0
    %2476 = vmatpush1.msra.mxu0 0.0
    %2477 = vmatprep.subr.mxu0 0.0
    %2478 = vmatpush1.msra.mxu0 0.0
    %2479 = vmatprep.subr.mxu0 0.0
    %2480 = vmatpush1.msra.mxu0 0.0
    %2481 = vmatprep.subr.mxu0 0.0
    %2482 = vmatpush1.msra.mxu0 0.0
    %2483 = vmatprep.subr.mxu0 0.0
    %2484 = vmatpush1.msra.mxu0 0.0
    %2485 = vmatprep.subr.mxu0 0.0
    %2486 = vmatpush1.msra.mxu0 0.0
    %2487 = vmatprep.subr.mxu0 0.0
    %2488 = vmatpush1.msra.mxu0 0.0
    %2489 = vmatprep.subr.mxu0 0.0
    %2490 = vmatpush1.msra.mxu0 0.0
    %2491 = vmatprep.subr.mxu0 0.0
    %2492 = vmatpush1.msra.mxu0 0.0
    %2493 = vmatprep.subr.mxu0 0.0
    %2494 = vmatpush1.msra.mxu0 0.0
    %2495 = vmatprep.subr.mxu0 0.0
    %2496 = vmatpush1.msra.mxu0 0.0
    %2497 = vmatprep.subr.mxu0 0.0
    %2498 = vmatpush1.msra.mxu0 0.0
    %2499 = vmatprep.subr.mxu0 0.0
    %2500 = vmatpush1.msra.mxu0 0.0
    %2501 = vmatprep.subr.mxu0 0.0
    %2502 = vmatpush1.msra.mxu0 0.0
    %2503 = vmatprep.subr.mxu0 0.0
    %2504 = vmatpush1.msra.mxu0 0.0
    %2505 = vmatprep.subr.mxu0 0.0
    %2506 = vmatpush1.msra.mxu0 0.0
    %2507 = vmatprep.subr.mxu0 0.0
    %2508 = vmatpush1.msra.mxu0 0.0
    %2509 = vmatprep.subr.mxu0 0.0
    %2510 = vmatpush1.msra.mxu0 0.0
    %2511 = vmatprep.mubr.f32.mxu0 0.0
    %2512 = vmatmul.mubr.f32.gmra.mrb[0].mxu0 %v2445
    %v2513 = vpop.f32.mrb[0].mxu0
    %v2514 = vadd.f32 0.0, %v2513
    %v2515 = vpop.f32.mrb[0].mxu0
    %2516 = vdwg.mxu0
    %2518 = vrot.lane.b32.xlu0 %v2441, 32
    %v2519 = vpop.permute.xlu0 %2518
    %v2520 = vsel %vm110, %v2519, 0
    %2522 = vmatprep.subr.mxu0 0.0
    %2523 = vmatpush1.msra.mxu0 %v82
    %2524 = vmatprep.subr.mxu0 0.0
    %2525 = vmatpush1.msra.mxu0 %v83
    %2526 = vmatprep.subr.mxu0 0.0
    %2527 = vmatpush1.msra.mxu0 %v84
    %2528 = vmatprep.subr.mxu0 0.0
    %2529 = vmatpush1.msra.mxu0 %v85
    %2530 = vmatprep.subr.mxu0 0.0
    %2531 = vmatpush1.msra.mxu0 0.0
    %2532 = vmatprep.subr.mxu0 0.0
    %2533 = vmatpush1.msra.mxu0 0.0
    %2534 = vmatprep.subr.mxu0 0.0
    %2535 = vmatpush1.msra.mxu0 0.0
    %2536 = vmatprep.subr.mxu0 0.0
    %2537 = vmatpush1.msra.mxu0 0.0
    %2538 = vmatprep.subr.mxu0 0.0
    %2539 = vmatpush1.msra.mxu0 0.0
    %2540 = vmatprep.subr.mxu0 0.0
    %2541 = vmatpush1.msra.mxu0 0.0
    %2542 = vmatprep.subr.mxu0 0.0
    %2543 = vmatpush1.msra.mxu0 0.0
    %2544 = vmatprep.subr.mxu0 0.0
    %2545 = vmatpush1.msra.mxu0 0.0
    %2546 = vmatprep.subr.mxu0 0.0
    %2547 = vmatpush1.msra.mxu0 0.0
    %2548 = vmatprep.subr.mxu0 0.0
    %2549 = vmatpush1.msra.mxu0 0.0
    %2550 = vmatprep.subr.mxu0 0.0
    %2551 = vmatpush1.msra.mxu0 0.0
    %2552 = vmatprep.subr.mxu0 0.0
    %2553 = vmatpush1.msra.mxu0 0.0
    %2554 = vmatprep.subr.mxu0 0.0
    %2555 = vmatpush1.msra.mxu0 0.0
    %2556 = vmatprep.subr.mxu0 0.0
    %2557 = vmatpush1.msra.mxu0 0.0
    %2558 = vmatprep.subr.mxu0 0.0
    %2559 = vmatpush1.msra.mxu0 0.0
    %2560 = vmatprep.subr.mxu0 0.0
    %2561 = vmatpush1.msra.mxu0 0.0
    %2562 = vmatprep.subr.mxu0 0.0
    %2563 = vmatpush1.msra.mxu0 0.0
    %2564 = vmatprep.subr.mxu0 0.0
    %2565 = vmatpush1.msra.mxu0 0.0
    %2566 = vmatprep.subr.mxu0 0.0
    %2567 = vmatpush1.msra.mxu0 0.0
    %2568 = vmatprep.subr.mxu0 0.0
    %2569 = vmatpush1.msra.mxu0 0.0
    %2570 = vmatprep.subr.mxu0 0.0
    %2571 = vmatpush1.msra.mxu0 0.0
    %2572 = vmatprep.subr.mxu0 0.0
    %2573 = vmatpush1.msra.mxu0 0.0
    %2574 = vmatprep.subr.mxu0 0.0
    %2575 = vmatpush1.msra.mxu0 0.0
    %2576 = vmatprep.subr.mxu0 0.0
    %2577 = vmatpush1.msra.mxu0 0.0
    %2578 = vmatprep.subr.mxu0 0.0
    %2579 = vmatpush1.msra.mxu0 0.0
    %2580 = vmatprep.subr.mxu0 0.0
    %2581 = vmatpush1.msra.mxu0 0.0
    %2582 = vmatprep.subr.mxu0 0.0
    %2583 = vmatpush1.msra.mxu0 0.0
    %2584 = vmatprep.subr.mxu0 0.0
    %2585 = vmatpush1.msra.mxu0 0.0
    %2586 = vmatprep.mubr.f32.mxu0 0.0
    %2587 = vmatmul.mubr.f32.gmra.mrb[0].mxu0 %v2520
    %v2588 = vpop.f32.mrb[0].mxu0
    %v2589 = vadd.f32 %v2514, %v2588
    %v2590 = vpop.f32.mrb[0].mxu0
    %2591 = vdwg.mxu0
    %v2592 = vadd.f32 %v2589, %v366
    %v2593 = vtanh.pop %v2592
    %v2594 = vxor.u32 %v2592, 2147483648
    %v2595 = vmul.f32 %v2594, 1.442695
    %v2596 = vpow.pop %v2595
    %v2597 = vadd.f32 %v2596, 1.0
    %v2598 = vrcp.pop %v2597
    %v2599 = vmul.f32 1.0, %v2598
    %v2600 = vsel %vm97, %v2593, %v2599
    %v2601 = vmul.f32 %v2600, %v2333
    %2603 = vrot.lane.b32.xlu0 %v2600, 64
    %v2604 = vpop.permute.xlu0 %2603
    %v2606 = vmul.f32 %v2600, %v2604
    %2608 = vrot.lane.b32.xlu0 %v2606, 32
    %v2609 = vpop.permute.xlu0 %2608
    %v2611 = vadd.f32 %v2601, %v2609
    %v2612 = vtanh.pop %v2611
    %2614 = vrot.lane.b32.xlu0 %v2612, 64
    %v2615 = vpop.permute.xlu0 %2614
    %v2617 = vmul.f32 %v2600, %v2615
    %2618 = vset.pattern.permute.xlu0 9
    %2619 = vperm.xlu0 %2618, %v75
    %v2620 = vpop.permute.xlu0 %2619
    %v2622 = vmul.f32 %v2620, %v107
    %2623 = vmatprep.subr.mxu0 0.0
    %2624 = vmatpush1.msra.mxu0 %v77
    %2625 = vmatprep.subr.mxu0 0.0
    %2626 = vmatpush1.msra.mxu0 %v78
    %2627 = vmatprep.subr.mxu0 0.0
    %2628 = vmatpush1.msra.mxu0 %v79
    %2629 = vmatprep.subr.mxu0 0.0
    %2630 = vmatpush1.msra.mxu0 %v80
    %2631 = vmatprep.subr.mxu0 0.0
    %2632 = vmatpush1.msra.mxu0 0.0
    %2633 = vmatprep.subr.mxu0 0.0
    %2634 = vmatpush1.msra.mxu0 0.0
    %2635 = vmatprep.subr.mxu0 0.0
    %2636 = vmatpush1.msra.mxu0 0.0
    %2637 = vmatprep.subr.mxu0 0.0
    %2638 = vmatpush1.msra.mxu0 0.0
    %2639 = vmatprep.subr.mxu0 0.0
    %2640 = vmatpush1.msra.mxu0 0.0
    %2641 = vmatprep.subr.mxu0 0.0
    %2642 = vmatpush1.msra.mxu0 0.0
    %2643 = vmatprep.subr.mxu0 0.0
    %2644 = vmatpush1.msra.mxu0 0.0
    %2645 = vmatprep.subr.mxu0 0.0
    %2646 = vmatpush1.msra.mxu0 0.0
    %2647 = vmatprep.subr.mxu0 0.0
    %2648 = vmatpush1.msra.mxu0 0.0
    %2649 = vmatprep.subr.mxu0 0.0
    %2650 = vmatpush1.msra.mxu0 0.0
    %2651 = vmatprep.subr.mxu0 0.0
    %2652 = vmatpush1.msra.mxu0 0.0
    %2653 = vmatprep.subr.mxu0 0.0
    %2654 = vmatpush1.msra.mxu0 0.0
    %2655 = vmatprep.subr.mxu0 0.0
    %2656 = vmatpush1.msra.mxu0 0.0
    %2657 = vmatprep.subr.mxu0 0.0
    %2658 = vmatpush1.msra.mxu0 0.0
    %2659 = vmatprep.subr.mxu0 0.0
    %2660 = vmatpush1.msra.mxu0 0.0
    %2661 = vmatprep.subr.mxu0 0.0
    %2662 = vmatpush1.msra.mxu0 0.0
    %2663 = vmatprep.subr.mxu0 0.0
    %2664 = vmatpush1.msra.mxu0 0.0
    %2665 = vmatprep.subr.mxu0 0.0
    %2666 = vmatpush1.msra.mxu0 0.0
    %2667 = vmatprep.subr.mxu0 0.0
    %2668 = vmatpush1.msra.mxu0 0.0
    %2669 = vmatprep.subr.mxu0 0.0
    %2670 = vmatpush1.msra.mxu0 0.0
    %2671 = vmatprep.subr.mxu0 0.0
    %2672 = vmatpush1.msra.mxu0 0.0
    %2673 = vmatprep.subr.mxu0 0.0
    %2674 = vmatpush1.msra.mxu0 0.0
    %2675 = vmatprep.subr.mxu0 0.0
    %2676 = vmatpush1.msra.mxu0 0.0
    %2677 = vmatprep.subr.mxu0 0.0
    %2678 = vmatpush1.msra.mxu0 0.0
    %2679 = vmatprep.subr.mxu0 0.0
    %2680 = vmatpush1.msra.mxu0 0.0
    %2681 = vmatprep.subr.mxu0 0.0
    %2682 = vmatpush1.msra.mxu0 0.0
    %2683 = vmatprep.subr.mxu0 0.0
    %2684 = vmatpush1.msra.mxu0 0.0
    %2685 = vmatprep.subr.mxu0 0.0
    %2686 = vmatpush1.msra.mxu0 0.0
    %2687 = vmatprep.mubr.f32.mxu0 0.0
    %2688 = vmatmul.mubr.f32.gmra.mrb[0].mxu0 %v2520
    %v2689 = vpop.f32.mrb[0].mxu0
    %v2690 = vadd.f32 0.0, %v2689
    %v2691 = vpop.f32.mrb[0].mxu0
    %2692 = vdwg.mxu0
    %v2693 = vadd.f32 %v2622, %v2690
    %v2694 = vadd.f32 %v2693, %v189
    %v2695 = vtanh.pop %v2694
    %v2696 = vxor.u32 %v2694, 2147483648
    %v2697 = vmul.f32 %v2696, 1.442695
    %v2698 = vpow.pop %v2697
    %v2699 = vadd.f32 %v2698, 1.0
    %v2700 = vrcp.pop %v2699
    %v2701 = vmul.f32 1.0, %v2700
    %v2702 = vsel %vm97, %v2695, %v2701
    %v2703 = vmul.f32 %v2702, %v2435
    %2705 = vrot.lane.b32.xlu0 %v2702, 64
    %v2706 = vpop.permute.xlu0 %2705
    %v2708 = vmul.f32 %v2702, %v2706
    %2710 = vrot.lane.b32.xlu0 %v2708, 32
    %v2711 = vpop.permute.xlu0 %2710
    %v2713 = vadd.f32 %v2703, %v2711
    %v2714 = vtanh.pop %v2713
    %2716 = vrot.lane.b32.xlu0 %v2714, 64
    %v2717 = vpop.permute.xlu0 %2716
    %v2719 = vmul.f32 %v2702, %v2717
    %2721 = vrot.lane.b32.xlu0 %v2617, 32
    %v2722 = vpop.permute.xlu0 %2721
    %v2723 = vsel %vm110, %v2722, 0
    %2725 = vmatprep.subr.mxu0 0.0
    %2726 = vmatpush1.msra.mxu0 %v86
    %2727 = vmatprep.subr.mxu0 0.0
    %2728 = vmatpush1.msra.mxu0 %v87
    %2729 = vmatprep.subr.mxu0 0.0
    %2730 = vmatpush1.msra.mxu0 %v88
    %2731 = vmatprep.subr.mxu0 0.0
    %2732 = vmatpush1.msra.mxu0 %v89
    %2733 = vmatprep.subr.mxu0 0.0
    %2734 = vmatpush1.msra.mxu0 0.0
    %2735 = vmatprep.subr.mxu0 0.0
    %2736 = vmatpush1.msra.mxu0 0.0
    %2737 = vmatprep.subr.mxu0 0.0
    %2738 = vmatpush1.msra.mxu0 0.0
    %2739 = vmatprep.subr.mxu0 0.0
    %2740 = vmatpush1.msra.mxu0 0.0
    %2741 = vmatprep.subr.mxu0 0.0
    %2742 = vmatpush1.msra.mxu0 0.0
    %2743 = vmatprep.subr.mxu0 0.0
    %2744 = vmatpush1.msra.mxu0 0.0
    %2745 = vmatprep.subr.mxu0 0.0
    %2746 = vmatpush1.msra.mxu0 0.0
    %2747 = vmatprep.subr.mxu0 0.0
    %2748 = vmatpush1.msra.mxu0 0.0
    %2749 = vmatprep.subr.mxu0 0.0
    %2750 = vmatpush1.msra.mxu0 0.0
    %2751 = vmatprep.subr.mxu0 0.0
    %2752 = vmatpush1.msra.mxu0 0.0
    %2753 = vmatprep.subr.mxu0 0.0
    %2754 = vmatpush1.msra.mxu0 0.0
    %2755 = vmatprep.subr.mxu0 0.0
    %2756 = vmatpush1.msra.mxu0 0.0
    %2757 = vmatprep.subr.mxu0 0.0
    %2758 = vmatpush1.msra.mxu0 0.0
    %2759 = vmatprep.subr.mxu0 0.0
    %2760 = vmatpush1.msra.mxu0 0.0
    %2761 = vmatprep.subr.mxu0 0.0
    %2762 = vmatpush1.msra.mxu0 0.0
    %2763 = vmatprep.subr.mxu0 0.0
    %2764 = vmatpush1.msra.mxu0 0.0
    %2765 = vmatprep.subr.mxu0 0.0
    %2766 = vmatpush1.msra.mxu0 0.0
    %2767 = vmatprep.subr.mxu0 0.0
    %2768 = vmatpush1.msra.mxu0 0.0
    %2769 = vmatprep.subr.mxu0 0.0
    %2770 = vmatpush1.msra.mxu0 0.0
    %2771 = vmatprep.subr.mxu0 0.0
    %2772 = vmatpush1.msra.mxu0 0.0
    %2773 = vmatprep.subr.mxu0 0.0
    %2774 = vmatpush1.msra.mxu0 0.0
    %2775 = vmatprep.subr.mxu0 0.0
    %2776 = vmatpush1.msra.mxu0 0.0
    %2777 = vmatprep.subr.mxu0 0.0
    %2778 = vmatpush1.msra.mxu0 0.0
    %2779 = vmatprep.subr.mxu0 0.0
    %2780 = vmatpush1.msra.mxu0 0.0
    %2781 = vmatprep.subr.mxu0 0.0
    %2782 = vmatpush1.msra.mxu0 0.0
    %2783 = vmatprep.subr.mxu0 0.0
    %2784 = vmatpush1.msra.mxu0 0.0
    %2785 = vmatprep.subr.mxu0 0.0
    %2786 = vmatpush1.msra.mxu0 0.0
    %2787 = vmatprep.subr.mxu0 0.0
    %2788 = vmatpush1.msra.mxu0 0.0
    %2789 = vmatprep.mubr.f32.mxu0 0.0
    %2790 = vmatmul.mubr.f32.gmra.mrb[0].mxu0 %v2723
    %v2791 = vpop.f32.mrb[0].mxu0
    %v2792 = vadd.f32 0.0, %v2791
    %v2793 = vpop.f32.mrb[0].mxu0
    %2794 = vdwg.mxu0
    %2796 = vrot.lane.b32.xlu0 %v2719, 32
    %v2797 = vpop.permute.xlu0 %2796
    %v2798 = vsel %vm110, %v2797, 0
    %2800 = vmatprep.subr.mxu0 0.0
    %2801 = vmatpush1.msra.mxu0 %v82
    %2802 = vmatprep.subr.mxu0 0.0
    %2803 = vmatpush1.msra.mxu0 %v83
    %2804 = vmatprep.subr.mxu0 0.0
    %2805 = vmatpush1.msra.mxu0 %v84
    %2806 = vmatprep.subr.mxu0 0.0
    %2807 = vmatpush1.msra.mxu0 %v85
    %2808 = vmatprep.subr.mxu0 0.0
    %2809 = vmatpush1.msra.mxu0 0.0
    %2810 = vmatprep.subr.mxu0 0.0
    %2811 = vmatpush1.msra.mxu0 0.0
    %2812 = vmatprep.subr.mxu0 0.0
    %2813 = vmatpush1.msra.mxu0 0.0
    %2814 = vmatprep.subr.mxu0 0.0
    %2815 = vmatpush1.msra.mxu0 0.0
    %2816 = vmatprep.subr.mxu0 0.0
    %2817 = vmatpush1.msra.mxu0 0.0
    %2818 = vmatprep.subr.mxu0 0.0
    %2819 = vmatpush1.msra.mxu0 0.0
    %2820 = vmatprep.subr.mxu0 0.0
    %2821 = vmatpush1.msra.mxu0 0.0
    %2822 = vmatprep.subr.mxu0 0.0
    %2823 = vmatpush1.msra.mxu0 0.0
    %2824 = vmatprep.subr.mxu0 0.0
    %2825 = vmatpush1.msra.mxu0 0.0
    %2826 = vmatprep.subr.mxu0 0.0
    %2827 = vmatpush1.msra.mxu0 0.0
    %2828 = vmatprep.subr.mxu0 0.0
    %2829 = vmatpush1.msra.mxu0 0.0
    %2830 = vmatprep.subr.mxu0 0.0
    %2831 = vmatpush1.msra.mxu0 0.0
    %2832 = vmatprep.subr.mxu0 0.0
    %2833 = vmatpush1.msra.mxu0 0.0
    %2834 = vmatprep.subr.mxu0 0.0
    %2835 = vmatpush1.msra.mxu0 0.0
    %2836 = vmatprep.subr.mxu0 0.0
    %2837 = vmatpush1.msra.mxu0 0.0
    %2838 = vmatprep.subr.mxu0 0.0
    %2839 = vmatpush1.msra.mxu0 0.0
    %2840 = vmatprep.subr.mxu0 0.0
    %2841 = vmatpush1.msra.mxu0 0.0
    %2842 = vmatprep.subr.mxu0 0.0
    %2843 = vmatpush1.msra.mxu0 0.0
    %2844 = vmatprep.subr.mxu0 0.0
    %2845 = vmatpush1.msra.mxu0 0.0
    %2846 = vmatprep.subr.mxu0 0.0
    %2847 = vmatpush1.msra.mxu0 0.0
    %2848 = vmatprep.subr.mxu0 0.0
    %2849 = vmatpush1.msra.mxu0 0.0
    %2850 = vmatprep.subr.mxu0 0.0
    %2851 = vmatpush1.msra.mxu0 0.0
    %2852 = vmatprep.subr.mxu0 0.0
    %2853 = vmatpush1.msra.mxu0 0.0
    %2854 = vmatprep.subr.mxu0 0.0
    %2855 = vmatpush1.msra.mxu0 0.0
    %2856 = vmatprep.subr.mxu0 0.0
    %2857 = vmatpush1.msra.mxu0 0.0
    %2858 = vmatprep.subr.mxu0 0.0
    %2859 = vmatpush1.msra.mxu0 0.0
    %2860 = vmatprep.subr.mxu0 0.0
    %2861 = vmatpush1.msra.mxu0 0.0
    %2862 = vmatprep.subr.mxu0 0.0
    %2863 = vmatpush1.msra.mxu0 0.0
    %2864 = vmatprep.mubr.f32.mxu0 0.0
    %2865 = vmatmul.mubr.f32.gmra.mrb[0].mxu0 %v2798
    %v2866 = vpop.f32.mrb[0].mxu0
    %v2867 = vadd.f32 %v2792, %v2866
    %v2868 = vpop.f32.mrb[0].mxu0
    %2869 = vdwg.mxu0
    %v2870 = vadd.f32 %v2867, %v366
    %v2871 = vtanh.pop %v2870
    %v2872 = vxor.u32 %v2870, 2147483648
    %v2873 = vmul.f32 %v2872, 1.442695
    %v2874 = vpow.pop %v2873
    %v2875 = vadd.f32 %v2874, 1.0
    %v2876 = vrcp.pop %v2875
    %v2877 = vmul.f32 1.0, %v2876
    %v2878 = vsel %vm97, %v2871, %v2877
    %v2879 = vmul.f32 %v2878, %v2611
    %2881 = vrot.lane.b32.xlu0 %v2878, 64
    %v2882 = vpop.permute.xlu0 %2881
    %v2884 = vmul.f32 %v2878, %v2882
    %2886 = vrot.lane.b32.xlu0 %v2884, 32
    %v2887 = vpop.permute.xlu0 %2886
    %v2889 = vadd.f32 %v2879, %v2887
    %v2890 = vtanh.pop %v2889
    %2892 = vrot.lane.b32.xlu0 %v2890, 64
    %v2893 = vpop.permute.xlu0 %2892
    %v2895 = vmul.f32 %v2878, %v2893
    %2896 = vset.pattern.permute.xlu0 10
    %2897 = vperm.xlu0 %2896, %v75
    %v2898 = vpop.permute.xlu0 %2897
    %v2900 = vmul.f32 %v2898, %v107
    %2901 = vmatprep.subr.mxu0 0.0
    %2902 = vmatpush1.msra.mxu0 %v77
    %2903 = vmatprep.subr.mxu0 0.0
    %2904 = vmatpush1.msra.mxu0 %v78
    %2905 = vmatprep.subr.mxu0 0.0
    %2906 = vmatpush1.msra.mxu0 %v79
    %2907 = vmatprep.subr.mxu0 0.0
    %2908 = vmatpush1.msra.mxu0 %v80
    %2909 = vmatprep.subr.mxu0 0.0
    %2910 = vmatpush1.msra.mxu0 0.0
    %2911 = vmatprep.subr.mxu0 0.0
    %2912 = vmatpush1.msra.mxu0 0.0
    %2913 = vmatprep.subr.mxu0 0.0
    %2914 = vmatpush1.msra.mxu0 0.0
    %2915 = vmatprep.subr.mxu0 0.0
    %2916 = vmatpush1.msra.mxu0 0.0
    %2917 = vmatprep.subr.mxu0 0.0
    %2918 = vmatpush1.msra.mxu0 0.0
    %2919 = vmatprep.subr.mxu0 0.0
    %2920 = vmatpush1.msra.mxu0 0.0
    %2921 = vmatprep.subr.mxu0 0.0
    %2922 = vmatpush1.msra.mxu0 0.0
    %2923 = vmatprep.subr.mxu0 0.0
    %2924 = vmatpush1.msra.mxu0 0.0
    %2925 = vmatprep.subr.mxu0 0.0
    %2926 = vmatpush1.msra.mxu0 0.0
    %2927 = vmatprep.subr.mxu0 0.0
    %2928 = vmatpush1.msra.mxu0 0.0
    %2929 = vmatprep.subr.mxu0 0.0
    %2930 = vmatpush1.msra.mxu0 0.0
    %2931 = vmatprep.subr.mxu0 0.0
    %2932 = vmatpush1.msra.mxu0 0.0
    %2933 = vmatprep.subr.mxu0 0.0
    %2934 = vmatpush1.msra.mxu0 0.0
    %2935 = vmatprep.subr.mxu0 0.0
    %2936 = vmatpush1.msra.mxu0 0.0
    %2937 = vmatprep.subr.mxu0 0.0
    %2938 = vmatpush1.msra.mxu0 0.0
    %2939 = vmatprep.subr.mxu0 0.0
    %2940 = vmatpush1.msra.mxu0 0.0
    %2941 = vmatprep.subr.mxu0 0.0
    %2942 = vmatpush1.msra.mxu0 0.0
    %2943 = vmatprep.subr.mxu0 0.0
    %2944 = vmatpush1.msra.mxu0 0.0
    %2945 = vmatprep.subr.mxu0 0.0
    %2946 = vmatpush1.msra.mxu0 0.0
    %2947 = vmatprep.subr.mxu0 0.0
    %2948 = vmatpush1.msra.mxu0 0.0
    %2949 = vmatprep.subr.mxu0 0.0
    %2950 = vmatpush1.msra.mxu0 0.0
    %2951 = vmatprep.subr.mxu0 0.0
    %2952 = vmatpush1.msra.mxu0 0.0
    %2953 = vmatprep.subr.mxu0 0.0
    %2954 = vmatpush1.msra.mxu0 0.0
    %2955 = vmatprep.subr.mxu0 0.0
    %2956 = vmatpush1.msra.mxu0 0.0
    %2957 = vmatprep.subr.mxu0 0.0
    %2958 = vmatpush1.msra.mxu0 0.0
    %2959 = vmatprep.subr.mxu0 0.0
    %2960 = vmatpush1.msra.mxu0 0.0
    %2961 = vmatprep.subr.mxu0 0.0
    %2962 = vmatpush1.msra.mxu0 0.0
    %2963 = vmatprep.subr.mxu0 0.0
    %2964 = vmatpush1.msra.mxu0 0.0
    %2965 = vmatprep.mubr.f32.mxu0 0.0
    %2966 = vmatmul.mubr.f32.gmra.mrb[0].mxu0 %v2798
    %v2967 = vpop.f32.mrb[0].mxu0
    %v2968 = vadd.f32 0.0, %v2967
    %v2969 = vpop.f32.mrb[0].mxu0
    %2970 = vdwg.mxu0
    %v2971 = vadd.f32 %v2900, %v2968
    %v2972 = vadd.f32 %v2971, %v189
    %v2973 = vtanh.pop %v2972
    %v2974 = vxor.u32 %v2972, 2147483648
    %v2975 = vmul.f32 %v2974, 1.442695
    %v2976 = vpow.pop %v2975
    %v2977 = vadd.f32 %v2976, 1.0
    %v2978 = vrcp.pop %v2977
    %v2979 = vmul.f32 1.0, %v2978
    %v2980 = vsel %vm97, %v2973, %v2979
    %v2981 = vmul.f32 %v2980, %v2713
    %2983 = vrot.lane.b32.xlu0 %v2980, 64
    %v2984 = vpop.permute.xlu0 %2983
    %v2986 = vmul.f32 %v2980, %v2984
    %2988 = vrot.lane.b32.xlu0 %v2986, 32
    %v2989 = vpop.permute.xlu0 %2988
    %v2991 = vadd.f32 %v2981, %v2989
    %v2992 = vtanh.pop %v2991
    %2994 = vrot.lane.b32.xlu0 %v2992, 64
    %v2995 = vpop.permute.xlu0 %2994
    %v2997 = vmul.f32 %v2980, %v2995
    %2999 = vrot.lane.b32.xlu0 %v2895, 32
    %v3000 = vpop.permute.xlu0 %2999
    %v3001 = vsel %vm110, %v3000, 0
    %3003 = vmatprep.subr.mxu0 0.0
    %3004 = vmatpush1.msra.mxu0 %v86
    %3005 = vmatprep.subr.mxu0 0.0
    %3006 = vmatpush1.msra.mxu0 %v87
    %3007 = vmatprep.subr.mxu0 0.0
    %3008 = vmatpush1.msra.mxu0 %v88
    %3009 = vmatprep.subr.mxu0 0.0
    %3010 = vmatpush1.msra.mxu0 %v89
    %3011 = vmatprep.subr.mxu0 0.0
    %3012 = vmatpush1.msra.mxu0 0.0
    %3013 = vmatprep.subr.mxu0 0.0
    %3014 = vmatpush1.msra.mxu0 0.0
    %3015 = vmatprep.subr.mxu0 0.0
    %3016 = vmatpush1.msra.mxu0 0.0
    %3017 = vmatprep.subr.mxu0 0.0
    %3018 = vmatpush1.msra.mxu0 0.0
    %3019 = vmatprep.subr.mxu0 0.0
    %3020 = vmatpush1.msra.mxu0 0.0
    %3021 = vmatprep.subr.mxu0 0.0
    %3022 = vmatpush1.msra.mxu0 0.0
    %3023 = vmatprep.subr.mxu0 0.0
    %3024 = vmatpush1.msra.mxu0 0.0
    %3025 = vmatprep.subr.mxu0 0.0
    %3026 = vmatpush1.msra.mxu0 0.0
    %3027 = vmatprep.subr.mxu0 0.0
    %3028 = vmatpush1.msra.mxu0 0.0
    %3029 = vmatprep.subr.mxu0 0.0
    %3030 = vmatpush1.msra.mxu0 0.0
    %3031 = vmatprep.subr.mxu0 0.0
    %3032 = vmatpush1.msra.mxu0 0.0
    %3033 = vmatprep.subr.mxu0 0.0
    %3034 = vmatpush1.msra.mxu0 0.0
    %3035 = vmatprep.subr.mxu0 0.0
    %3036 = vmatpush1.msra.mxu0 0.0
    %3037 = vmatprep.subr.mxu0 0.0
    %3038 = vmatpush1.msra.mxu0 0.0
    %3039 = vmatprep.subr.mxu0 0.0
    %3040 = vmatpush1.msra.mxu0 0.0
    %3041 = vmatprep.subr.mxu0 0.0
    %3042 = vmatpush1.msra.mxu0 0.0
    %3043 = vmatprep.subr.mxu0 0.0
    %3044 = vmatpush1.msra.mxu0 0.0
    %3045 = vmatprep.subr.mxu0 0.0
    %3046 = vmatpush1.msra.mxu0 0.0
    %3047 = vmatprep.subr.mxu0 0.0
    %3048 = vmatpush1.msra.mxu0 0.0
    %3049 = vmatprep.subr.mxu0 0.0
    %3050 = vmatpush1.msra.mxu0 0.0
    %3051 = vmatprep.subr.mxu0 0.0
    %3052 = vmatpush1.msra.mxu0 0.0
    %3053 = vmatprep.subr.mxu0 0.0
    %3054 = vmatpush1.msra.mxu0 0.0
    %3055 = vmatprep.subr.mxu0 0.0
    %3056 = vmatpush1.msra.mxu0 0.0
    %3057 = vmatprep.subr.mxu0 0.0
    %3058 = vmatpush1.msra.mxu0 0.0
    %3059 = vmatprep.subr.mxu0 0.0
    %3060 = vmatpush1.msra.mxu0 0.0
    %3061 = vmatprep.subr.mxu0 0.0
    %3062 = vmatpush1.msra.mxu0 0.0
    %3063 = vmatprep.subr.mxu0 0.0
    %3064 = vmatpush1.msra.mxu0 0.0
    %3065 = vmatprep.subr.mxu0 0.0
    %3066 = vmatpush1.msra.mxu0 0.0
    %3067 = vmatprep.mubr.f32.mxu0 0.0
    %3068 = vmatmul.mubr.f32.gmra.mrb[0].mxu0 %v3001
    %v3069 = vpop.f32.mrb[0].mxu0
    %v3070 = vadd.f32 0.0, %v3069
    %v3071 = vpop.f32.mrb[0].mxu0
    %3072 = vdwg.mxu0
    %3074 = vrot.lane.b32.xlu0 %v2997, 32
    %v3075 = vpop.permute.xlu0 %3074
    %v3076 = vsel %vm110, %v3075, 0
    %3078 = vmatprep.subr.mxu0 0.0
    %3079 = vmatpush1.msra.mxu0 %v82
    %3080 = vmatprep.subr.mxu0 0.0
    %3081 = vmatpush1.msra.mxu0 %v83
    %3082 = vmatprep.subr.mxu0 0.0
    %3083 = vmatpush1.msra.mxu0 %v84
    %3084 = vmatprep.subr.mxu0 0.0
    %3085 = vmatpush1.msra.mxu0 %v85
    %3086 = vmatprep.subr.mxu0 0.0
    %3087 = vmatpush1.msra.mxu0 0.0
    %3088 = vmatprep.subr.mxu0 0.0
    %3089 = vmatpush1.msra.mxu0 0.0
    %3090 = vmatprep.subr.mxu0 0.0
    %3091 = vmatpush1.msra.mxu0 0.0
    %3092 = vmatprep.subr.mxu0 0.0
    %3093 = vmatpush1.msra.mxu0 0.0
    %3094 = vmatprep.subr.mxu0 0.0
    %3095 = vmatpush1.msra.mxu0 0.0
    %3096 = vmatprep.subr.mxu0 0.0
    %3097 = vmatpush1.msra.mxu0 0.0
    %3098 = vmatprep.subr.mxu0 0.0
    %3099 = vmatpush1.msra.mxu0 0.0
    %3100 = vmatprep.subr.mxu0 0.0
    %3101 = vmatpush1.msra.mxu0 0.0
    %3102 = vmatprep.subr.mxu0 0.0
    %3103 = vmatpush1.msra.mxu0 0.0
    %3104 = vmatprep.subr.mxu0 0.0
    %3105 = vmatpush1.msra.mxu0 0.0
    %3106 = vmatprep.subr.mxu0 0.0
    %3107 = vmatpush1.msra.mxu0 0.0
    %3108 = vmatprep.subr.mxu0 0.0
    %3109 = vmatpush1.msra.mxu0 0.0
    %3110 = vmatprep.subr.mxu0 0.0
    %3111 = vmatpush1.msra.mxu0 0.0
    %3112 = vmatprep.subr.mxu0 0.0
    %3113 = vmatpush1.msra.mxu0 0.0
    %3114 = vmatprep.subr.mxu0 0.0
    %3115 = vmatpush1.msra.mxu0 0.0
    %3116 = vmatprep.subr.mxu0 0.0
    %3117 = vmatpush1.msra.mxu0 0.0
    %3118 = vmatprep.subr.mxu0 0.0
    %3119 = vmatpush1.msra.mxu0 0.0
    %3120 = vmatprep.subr.mxu0 0.0
    %3121 = vmatpush1.msra.mxu0 0.0
    %3122 = vmatprep.subr.mxu0 0.0
    %3123 = vmatpush1.msra.mxu0 0.0
    %3124 = vmatprep.subr.mxu0 0.0
    %3125 = vmatpush1.msra.mxu0 0.0
    %3126 = vmatprep.subr.mxu0 0.0
    %3127 = vmatpush1.msra.mxu0 0.0
    %3128 = vmatprep.subr.mxu0 0.0
    %3129 = vmatpush1.msra.mxu0 0.0
    %3130 = vmatprep.subr.mxu0 0.0
    %3131 = vmatpush1.msra.mxu0 0.0
    %3132 = vmatprep.subr.mxu0 0.0
    %3133 = vmatpush1.msra.mxu0 0.0
    %3134 = vmatprep.subr.mxu0 0.0
    %3135 = vmatpush1.msra.mxu0 0.0
    %3136 = vmatprep.subr.mxu0 0.0
    %3137 = vmatpush1.msra.mxu0 0.0
    %3138 = vmatprep.subr.mxu0 0.0
    %3139 = vmatpush1.msra.mxu0 0.0
    %3140 = vmatprep.subr.mxu0 0.0
    %3141 = vmatpush1.msra.mxu0 0.0
    %3142 = vmatprep.mubr.f32.mxu0 0.0
    %3143 = vmatmul.mubr.f32.gmra.mrb[0].mxu0 %v3076
    %v3144 = vpop.f32.mrb[0].mxu0
    %v3145 = vadd.f32 %v3070, %v3144
    %v3146 = vpop.f32.mrb[0].mxu0
    %3147 = vdwg.mxu0
    %v3148 = vadd.f32 %v3145, %v366
    %v3149 = vtanh.pop %v3148
    %v3150 = vxor.u32 %v3148, 2147483648
    %v3151 = vmul.f32 %v3150, 1.442695
    %v3152 = vpow.pop %v3151
    %v3153 = vadd.f32 %v3152, 1.0
    %v3154 = vrcp.pop %v3153
    %v3155 = vmul.f32 1.0, %v3154
    %v3156 = vsel %vm97, %v3149, %v3155
    %v3157 = vmul.f32 %v3156, %v2889
    %3159 = vrot.lane.b32.xlu0 %v3156, 64
    %v3160 = vpop.permute.xlu0 %3159
    %v3162 = vmul.f32 %v3156, %v3160
    %3164 = vrot.lane.b32.xlu0 %v3162, 32
    %v3165 = vpop.permute.xlu0 %3164
    %v3167 = vadd.f32 %v3157, %v3165
    %v3168 = vtanh.pop %v3167
    %3170 = vrot.lane.b32.xlu0 %v3168, 64
    %v3171 = vpop.permute.xlu0 %3170
    %v3173 = vmul.f32 %v3156, %v3171
    %3174 = vset.pattern.permute.xlu0 11
    %3175 = vperm.xlu0 %3174, %v75
    %v3176 = vpop.permute.xlu0 %3175
    %v3178 = vmul.f32 %v3176, %v107
    %3179 = vmatprep.subr.mxu0 0.0
    %3180 = vmatpush1.msra.mxu0 %v77
    %3181 = vmatprep.subr.mxu0 0.0
    %3182 = vmatpush1.msra.mxu0 %v78
    %3183 = vmatprep.subr.mxu0 0.0
    %3184 = vmatpush1.msra.mxu0 %v79
    %3185 = vmatprep.subr.mxu0 0.0
    %3186 = vmatpush1.msra.mxu0 %v80
    %3187 = vmatprep.subr.mxu0 0.0
    %3188 = vmatpush1.msra.mxu0 0.0
    %3189 = vmatprep.subr.mxu0 0.0
    %3190 = vmatpush1.msra.mxu0 0.0
    %3191 = vmatprep.subr.mxu0 0.0
    %3192 = vmatpush1.msra.mxu0 0.0
    %3193 = vmatprep.subr.mxu0 0.0
    %3194 = vmatpush1.msra.mxu0 0.0
    %3195 = vmatprep.subr.mxu0 0.0
    %3196 = vmatpush1.msra.mxu0 0.0
    %3197 = vmatprep.subr.mxu0 0.0
    %3198 = vmatpush1.msra.mxu0 0.0
    %3199 = vmatprep.subr.mxu0 0.0
    %3200 = vmatpush1.msra.mxu0 0.0
    %3201 = vmatprep.subr.mxu0 0.0
    %3202 = vmatpush1.msra.mxu0 0.0
    %3203 = vmatprep.subr.mxu0 0.0
    %3204 = vmatpush1.msra.mxu0 0.0
    %3205 = vmatprep.subr.mxu0 0.0
    %3206 = vmatpush1.msra.mxu0 0.0
    %3207 = vmatprep.subr.mxu0 0.0
    %3208 = vmatpush1.msra.mxu0 0.0
    %3209 = vmatprep.subr.mxu0 0.0
    %3210 = vmatpush1.msra.mxu0 0.0
    %3211 = vmatprep.subr.mxu0 0.0
    %3212 = vmatpush1.msra.mxu0 0.0
    %3213 = vmatprep.subr.mxu0 0.0
    %3214 = vmatpush1.msra.mxu0 0.0
    %3215 = vmatprep.subr.mxu0 0.0
    %3216 = vmatpush1.msra.mxu0 0.0
    %3217 = vmatprep.subr.mxu0 0.0
    %3218 = vmatpush1.msra.mxu0 0.0
    %3219 = vmatprep.subr.mxu0 0.0
    %3220 = vmatpush1.msra.mxu0 0.0
    %3221 = vmatprep.subr.mxu0 0.0
    %3222 = vmatpush1.msra.mxu0 0.0
    %3223 = vmatprep.subr.mxu0 0.0
    %3224 = vmatpush1.msra.mxu0 0.0
    %3225 = vmatprep.subr.mxu0 0.0
    %3226 = vmatpush1.msra.mxu0 0.0
    %3227 = vmatprep.subr.mxu0 0.0
    %3228 = vmatpush1.msra.mxu0 0.0
    %3229 = vmatprep.subr.mxu0 0.0
    %3230 = vmatpush1.msra.mxu0 0.0
    %3231 = vmatprep.subr.mxu0 0.0
    %3232 = vmatpush1.msra.mxu0 0.0
    %3233 = vmatprep.subr.mxu0 0.0
    %3234 = vmatpush1.msra.mxu0 0.0
    %3235 = vmatprep.subr.mxu0 0.0
    %3236 = vmatpush1.msra.mxu0 0.0
    %3237 = vmatprep.subr.mxu0 0.0
    %3238 = vmatpush1.msra.mxu0 0.0
    %3239 = vmatprep.subr.mxu0 0.0
    %3240 = vmatpush1.msra.mxu0 0.0
    %3241 = vmatprep.subr.mxu0 0.0
    %3242 = vmatpush1.msra.mxu0 0.0
    %3243 = vmatprep.mubr.f32.mxu0 0.0
    %3244 = vmatmul.mubr.f32.gmra.mrb[0].mxu0 %v3076
    %v3245 = vpop.f32.mrb[0].mxu0
    %v3246 = vadd.f32 0.0, %v3245
    %v3247 = vpop.f32.mrb[0].mxu0
    %3248 = vdwg.mxu0
    %v3249 = vadd.f32 %v3178, %v3246
    %v3250 = vadd.f32 %v3249, %v189
    %v3251 = vtanh.pop %v3250
    %v3252 = vxor.u32 %v3250, 2147483648
    %v3253 = vmul.f32 %v3252, 1.442695
    %v3254 = vpow.pop %v3253
    %v3255 = vadd.f32 %v3254, 1.0
    %v3256 = vrcp.pop %v3255
    %v3257 = vmul.f32 1.0, %v3256
    %v3258 = vsel %vm97, %v3251, %v3257
    %v3259 = vmul.f32 %v3258, %v2991
    %3261 = vrot.lane.b32.xlu0 %v3258, 64
    %v3262 = vpop.permute.xlu0 %3261
    %v3264 = vmul.f32 %v3258, %v3262
    %3266 = vrot.lane.b32.xlu0 %v3264, 32
    %v3267 = vpop.permute.xlu0 %3266
    %v3269 = vadd.f32 %v3259, %v3267
    %v3270 = vtanh.pop %v3269
    %3272 = vrot.lane.b32.xlu0 %v3270, 64
    %v3273 = vpop.permute.xlu0 %3272
    %v3275 = vmul.f32 %v3258, %v3273
    %3277 = vrot.lane.b32.xlu0 %v3173, 32
    %v3278 = vpop.permute.xlu0 %3277
    %v3279 = vsel %vm110, %v3278, 0
    %3281 = vmatprep.subr.mxu0 0.0
    %3282 = vmatpush1.msra.mxu0 %v86
    %3283 = vmatprep.subr.mxu0 0.0
    %3284 = vmatpush1.msra.mxu0 %v87
    %3285 = vmatprep.subr.mxu0 0.0
    %3286 = vmatpush1.msra.mxu0 %v88
    %3287 = vmatprep.subr.mxu0 0.0
    %3288 = vmatpush1.msra.mxu0 %v89
    %3289 = vmatprep.subr.mxu0 0.0
    %3290 = vmatpush1.msra.mxu0 0.0
    %3291 = vmatprep.subr.mxu0 0.0
    %3292 = vmatpush1.msra.mxu0 0.0
    %3293 = vmatprep.subr.mxu0 0.0
    %3294 = vmatpush1.msra.mxu0 0.0
    %3295 = vmatprep.subr.mxu0 0.0
    %3296 = vmatpush1.msra.mxu0 0.0
    %3297 = vmatprep.subr.mxu0 0.0
    %3298 = vmatpush1.msra.mxu0 0.0
    %3299 = vmatprep.subr.mxu0 0.0
    %3300 = vmatpush1.msra.mxu0 0.0
    %3301 = vmatprep.subr.mxu0 0.0
    %3302 = vmatpush1.msra.mxu0 0.0
    %3303 = vmatprep.subr.mxu0 0.0
    %3304 = vmatpush1.msra.mxu0 0.0
    %3305 = vmatprep.subr.mxu0 0.0
    %3306 = vmatpush1.msra.mxu0 0.0
    %3307 = vmatprep.subr.mxu0 0.0
    %3308 = vmatpush1.msra.mxu0 0.0
    %3309 = vmatprep.subr.mxu0 0.0
    %3310 = vmatpush1.msra.mxu0 0.0
    %3311 = vmatprep.subr.mxu0 0.0
    %3312 = vmatpush1.msra.mxu0 0.0
    %3313 = vmatprep.subr.mxu0 0.0
    %3314 = vmatpush1.msra.mxu0 0.0
    %3315 = vmatprep.subr.mxu0 0.0
    %3316 = vmatpush1.msra.mxu0 0.0
    %3317 = vmatprep.subr.mxu0 0.0
    %3318 = vmatpush1.msra.mxu0 0.0
    %3319 = vmatprep.subr.mxu0 0.0
    %3320 = vmatpush1.msra.mxu0 0.0
    %3321 = vmatprep.subr.mxu0 0.0
    %3322 = vmatpush1.msra.mxu0 0.0
    %3323 = vmatprep.subr.mxu0 0.0
    %3324 = vmatpush1.msra.mxu0 0.0
    %3325 = vmatprep.subr.mxu0 0.0
    %3326 = vmatpush1.msra.mxu0 0.0
    %3327 = vmatprep.subr.mxu0 0.0
    %3328 = vmatpush1.msra.mxu0 0.0
    %3329 = vmatprep.subr.mxu0 0.0
    %3330 = vmatpush1.msra.mxu0 0.0
    %3331 = vmatprep.subr.mxu0 0.0
    %3332 = vmatpush1.msra.mxu0 0.0
    %3333 = vmatprep.subr.mxu0 0.0
    %3334 = vmatpush1.msra.mxu0 0.0
    %3335 = vmatprep.subr.mxu0 0.0
    %3336 = vmatpush1.msra.mxu0 0.0
    %3337 = vmatprep.subr.mxu0 0.0
    %3338 = vmatpush1.msra.mxu0 0.0
    %3339 = vmatprep.subr.mxu0 0.0
    %3340 = vmatpush1.msra.mxu0 0.0
    %3341 = vmatprep.subr.mxu0 0.0
    %3342 = vmatpush1.msra.mxu0 0.0
    %3343 = vmatprep.subr.mxu0 0.0
    %3344 = vmatpush1.msra.mxu0 0.0
    %3345 = vmatprep.mubr.f32.mxu0 0.0
    %3346 = vmatmul.mubr.f32.gmra.mrb[0].mxu0 %v3279
    %v3347 = vpop.f32.mrb[0].mxu0
    %v3348 = vadd.f32 0.0, %v3347
    %v3349 = vpop.f32.mrb[0].mxu0
    %3350 = vdwg.mxu0
    %3352 = vrot.lane.b32.xlu0 %v3275, 32
    %v3353 = vpop.permute.xlu0 %3352
    %v3354 = vsel %vm110, %v3353, 0
    %3356 = vmatprep.subr.mxu0 0.0
    %3357 = vmatpush1.msra.mxu0 %v82
    %3358 = vmatprep.subr.mxu0 0.0
    %3359 = vmatpush1.msra.mxu0 %v83
    %3360 = vmatprep.subr.mxu0 0.0
    %3361 = vmatpush1.msra.mxu0 %v84
    %3362 = vmatprep.subr.mxu0 0.0
    %3363 = vmatpush1.msra.mxu0 %v85
    %3364 = vmatprep.subr.mxu0 0.0
    %3365 = vmatpush1.msra.mxu0 0.0
    %3366 = vmatprep.subr.mxu0 0.0
    %3367 = vmatpush1.msra.mxu0 0.0
    %3368 = vmatprep.subr.mxu0 0.0
    %3369 = vmatpush1.msra.mxu0 0.0
    %3370 = vmatprep.subr.mxu0 0.0
    %3371 = vmatpush1.msra.mxu0 0.0
    %3372 = vmatprep.subr.mxu0 0.0
    %3373 = vmatpush1.msra.mxu0 0.0
    %3374 = vmatprep.subr.mxu0 0.0
    %3375 = vmatpush1.msra.mxu0 0.0
    %3376 = vmatprep.subr.mxu0 0.0
    %3377 = vmatpush1.msra.mxu0 0.0
    %3378 = vmatprep.subr.mxu0 0.0
    %3379 = vmatpush1.msra.mxu0 0.0
    %3380 = vmatprep.subr.mxu0 0.0
    %3381 = vmatpush1.msra.mxu0 0.0
    %3382 = vmatprep.subr.mxu0 0.0
    %3383 = vmatpush1.msra.mxu0 0.0
    %3384 = vmatprep.subr.mxu0 0.0
    %3385 = vmatpush1.msra.mxu0 0.0
    %3386 = vmatprep.subr.mxu0 0.0
    %3387 = vmatpush1.msra.mxu0 0.0
    %3388 = vmatprep.subr.mxu0 0.0
    %3389 = vmatpush1.msra.mxu0 0.0
    %3390 = vmatprep.subr.mxu0 0.0
    %3391 = vmatpush1.msra.mxu0 0.0
    %3392 = vmatprep.subr.mxu0 0.0
    %3393 = vmatpush1.msra.mxu0 0.0
    %3394 = vmatprep.subr.mxu0 0.0
    %3395 = vmatpush1.msra.mxu0 0.0
    %3396 = vmatprep.subr.mxu0 0.0
    %3397 = vmatpush1.msra.mxu0 0.0
    %3398 = vmatprep.subr.mxu0 0.0
    %3399 = vmatpush1.msra.mxu0 0.0
    %3400 = vmatprep.subr.mxu0 0.0
    %3401 = vmatpush1.msra.mxu0 0.0
    %3402 = vmatprep.subr.mxu0 0.0
    %3403 = vmatpush1.msra.mxu0 0.0
    %3404 = vmatprep.subr.mxu0 0.0
    %3405 = vmatpush1.msra.mxu0 0.0
    %3406 = vmatprep.subr.mxu0 0.0
    %3407 = vmatpush1.msra.mxu0 0.0
    %3408 = vmatprep.subr.mxu0 0.0
    %3409 = vmatpush1.msra.mxu0 0.0
    %3410 = vmatprep.subr.mxu0 0.0
    %3411 = vmatpush1.msra.mxu0 0.0
    %3412 = vmatprep.subr.mxu0 0.0
    %3413 = vmatpush1.msra.mxu0 0.0
    %3414 = vmatprep.subr.mxu0 0.0
    %3415 = vmatpush1.msra.mxu0 0.0
    %3416 = vmatprep.subr.mxu0 0.0
    %3417 = vmatpush1.msra.mxu0 0.0
    %3418 = vmatprep.subr.mxu0 0.0
    %3419 = vmatpush1.msra.mxu0 0.0
    %3420 = vmatprep.mubr.f32.mxu0 0.0
    %3421 = vmatmul.mubr.f32.gmra.mrb[0].mxu0 %v3354
    %v3422 = vpop.f32.mrb[0].mxu0
    %v3423 = vadd.f32 %v3348, %v3422
    %v3424 = vpop.f32.mrb[0].mxu0
    %3425 = vdwg.mxu0
    %v3426 = vadd.f32 %v3423, %v366
    %v3427 = vtanh.pop %v3426
    %v3428 = vxor.u32 %v3426, 2147483648
    %v3429 = vmul.f32 %v3428, 1.442695
    %v3430 = vpow.pop %v3429
    %v3431 = vadd.f32 %v3430, 1.0
    %v3432 = vrcp.pop %v3431
    %v3433 = vmul.f32 1.0, %v3432
    %v3434 = vsel %vm97, %v3427, %v3433
    %v3435 = vmul.f32 %v3434, %v3167
    %3437 = vrot.lane.b32.xlu0 %v3434, 64
    %v3438 = vpop.permute.xlu0 %3437
    %v3440 = vmul.f32 %v3434, %v3438
    %3442 = vrot.lane.b32.xlu0 %v3440, 32
    %v3443 = vpop.permute.xlu0 %3442
    %v3445 = vadd.f32 %v3435, %v3443
    %v3446 = vtanh.pop %v3445
    %3448 = vrot.lane.b32.xlu0 %v3446, 64
    %v3449 = vpop.permute.xlu0 %3448
    %v3451 = vmul.f32 %v3434, %v3449
    %3452 = vset.pattern.permute.xlu0 12
    %3453 = vperm.xlu0 %3452, %v75
    %v3454 = vpop.permute.xlu0 %3453
    %v3456 = vmul.f32 %v3454, %v107
    %3457 = vmatprep.subr.mxu0 0.0
    %3458 = vmatpush1.msra.mxu0 %v77
    %3459 = vmatprep.subr.mxu0 0.0
    %3460 = vmatpush1.msra.mxu0 %v78
    %3461 = vmatprep.subr.mxu0 0.0
    %3462 = vmatpush1.msra.mxu0 %v79
    %3463 = vmatprep.subr.mxu0 0.0
    %3464 = vmatpush1.msra.mxu0 %v80
    %3465 = vmatprep.subr.mxu0 0.0
    %3466 = vmatpush1.msra.mxu0 0.0
    %3467 = vmatprep.subr.mxu0 0.0
    %3468 = vmatpush1.msra.mxu0 0.0
    %3469 = vmatprep.subr.mxu0 0.0
    %3470 = vmatpush1.msra.mxu0 0.0
    %3471 = vmatprep.subr.mxu0 0.0
    %3472 = vmatpush1.msra.mxu0 0.0
    %3473 = vmatprep.subr.mxu0 0.0
    %3474 = vmatpush1.msra.mxu0 0.0
    %3475 = vmatprep.subr.mxu0 0.0
    %3476 = vmatpush1.msra.mxu0 0.0
    %3477 = vmatprep.subr.mxu0 0.0
    %3478 = vmatpush1.msra.mxu0 0.0
    %3479 = vmatprep.subr.mxu0 0.0
    %3480 = vmatpush1.msra.mxu0 0.0
    %3481 = vmatprep.subr.mxu0 0.0
    %3482 = vmatpush1.msra.mxu0 0.0
    %3483 = vmatprep.subr.mxu0 0.0
    %3484 = vmatpush1.msra.mxu0 0.0
    %3485 = vmatprep.subr.mxu0 0.0
    %3486 = vmatpush1.msra.mxu0 0.0
    %3487 = vmatprep.subr.mxu0 0.0
    %3488 = vmatpush1.msra.mxu0 0.0
    %3489 = vmatprep.subr.mxu0 0.0
    %3490 = vmatpush1.msra.mxu0 0.0
    %3491 = vmatprep.subr.mxu0 0.0
    %3492 = vmatpush1.msra.mxu0 0.0
    %3493 = vmatprep.subr.mxu0 0.0
    %3494 = vmatpush1.msra.mxu0 0.0
    %3495 = vmatprep.subr.mxu0 0.0
    %3496 = vmatpush1.msra.mxu0 0.0
    %3497 = vmatprep.subr.mxu0 0.0
    %3498 = vmatpush1.msra.mxu0 0.0
    %3499 = vmatprep.subr.mxu0 0.0
    %3500 = vmatpush1.msra.mxu0 0.0
    %3501 = vmatprep.subr.mxu0 0.0
    %3502 = vmatpush1.msra.mxu0 0.0
    %3503 = vmatprep.subr.mxu0 0.0
    %3504 = vmatpush1.msra.mxu0 0.0
    %3505 = vmatprep.subr.mxu0 0.0
    %3506 = vmatpush1.msra.mxu0 0.0
    %3507 = vmatprep.subr.mxu0 0.0
    %3508 = vmatpush1.msra.mxu0 0.0
    %3509 = vmatprep.subr.mxu0 0.0
    %3510 = vmatpush1.msra.mxu0 0.0
    %3511 = vmatprep.subr.mxu0 0.0
    %3512 = vmatpush1.msra.mxu0 0.0
    %3513 = vmatprep.subr.mxu0 0.0
    %3514 = vmatpush1.msra.mxu0 0.0
    %3515 = vmatprep.subr.mxu0 0.0
    %3516 = vmatpush1.msra.mxu0 0.0
    %3517 = vmatprep.subr.mxu0 0.0
    %3518 = vmatpush1.msra.mxu0 0.0
    %3519 = vmatprep.subr.mxu0 0.0
    %3520 = vmatpush1.msra.mxu0 0.0
    %3521 = vmatprep.mubr.f32.mxu0 0.0
    %3522 = vmatmul.mubr.f32.gmra.mrb[0].mxu0 %v3354
    %v3523 = vpop.f32.mrb[0].mxu0
    %v3524 = vadd.f32 0.0, %v3523
    %v3525 = vpop.f32.mrb[0].mxu0
    %3526 = vdwg.mxu0
    %v3527 = vadd.f32 %v3456, %v3524
    %v3528 = vadd.f32 %v3527, %v189
    %v3529 = vtanh.pop %v3528
    %v3530 = vxor.u32 %v3528, 2147483648
    %v3531 = vmul.f32 %v3530, 1.442695
    %v3532 = vpow.pop %v3531
    %v3533 = vadd.f32 %v3532, 1.0
    %v3534 = vrcp.pop %v3533
    %v3535 = vmul.f32 1.0, %v3534
    %v3536 = vsel %vm97, %v3529, %v3535
    %v3537 = vmul.f32 %v3536, %v3269
    %3539 = vrot.lane.b32.xlu0 %v3536, 64
    %v3540 = vpop.permute.xlu0 %3539
    %v3542 = vmul.f32 %v3536, %v3540
    %3544 = vrot.lane.b32.xlu0 %v3542, 32
    %v3545 = vpop.permute.xlu0 %3544
    %v3547 = vadd.f32 %v3537, %v3545
    %v3548 = vtanh.pop %v3547
    %3550 = vrot.lane.b32.xlu0 %v3548, 64
    %v3551 = vpop.permute.xlu0 %3550
    %v3553 = vmul.f32 %v3536, %v3551
    %3555 = vrot.lane.b32.xlu0 %v3451, 32
    %v3556 = vpop.permute.xlu0 %3555
    %v3557 = vsel %vm110, %v3556, 0
    %3559 = vmatprep.subr.mxu0 0.0
    %3560 = vmatpush1.msra.mxu0 %v86
    %3561 = vmatprep.subr.mxu0 0.0
    %3562 = vmatpush1.msra.mxu0 %v87
    %3563 = vmatprep.subr.mxu0 0.0
    %3564 = vmatpush1.msra.mxu0 %v88
    %3565 = vmatprep.subr.mxu0 0.0
    %3566 = vmatpush1.msra.mxu0 %v89
    %3567 = vmatprep.subr.mxu0 0.0
    %3568 = vmatpush1.msra.mxu0 0.0
    %3569 = vmatprep.subr.mxu0 0.0
    %3570 = vmatpush1.msra.mxu0 0.0
    %3571 = vmatprep.subr.mxu0 0.0
    %3572 = vmatpush1.msra.mxu0 0.0
    %3573 = vmatprep.subr.mxu0 0.0
    %3574 = vmatpush1.msra.mxu0 0.0
    %3575 = vmatprep.subr.mxu0 0.0
    %3576 = vmatpush1.msra.mxu0 0.0
    %3577 = vmatprep.subr.mxu0 0.0
    %3578 = vmatpush1.msra.mxu0 0.0
    %3579 = vmatprep.subr.mxu0 0.0
    %3580 = vmatpush1.msra.mxu0 0.0
    %3581 = vmatprep.subr.mxu0 0.0
    %3582 = vmatpush1.msra.mxu0 0.0
    %3583 = vmatprep.subr.mxu0 0.0
    %3584 = vmatpush1.msra.mxu0 0.0
    %3585 = vmatprep.subr.mxu0 0.0
    %3586 = vmatpush1.msra.mxu0 0.0
    %3587 = vmatprep.subr.mxu0 0.0
    %3588 = vmatpush1.msra.mxu0 0.0
    %3589 = vmatprep.subr.mxu0 0.0
    %3590 = vmatpush1.msra.mxu0 0.0
    %3591 = vmatprep.subr.mxu0 0.0
    %3592 = vmatpush1.msra.mxu0 0.0
    %3593 = vmatprep.subr.mxu0 0.0
    %3594 = vmatpush1.msra.mxu0 0.0
    %3595 = vmatprep.subr.mxu0 0.0
    %3596 = vmatpush1.msra.mxu0 0.0
    %3597 = vmatprep.subr.mxu0 0.0
    %3598 = vmatpush1.msra.mxu0 0.0
    %3599 = vmatprep.subr.mxu0 0.0
    %3600 = vmatpush1.msra.mxu0 0.0
    %3601 = vmatprep.subr.mxu0 0.0
    %3602 = vmatpush1.msra.mxu0 0.0
    %3603 = vmatprep.subr.mxu0 0.0
    %3604 = vmatpush1.msra.mxu0 0.0
    %3605 = vmatprep.subr.mxu0 0.0
    %3606 = vmatpush1.msra.mxu0 0.0
    %3607 = vmatprep.subr.mxu0 0.0
    %3608 = vmatpush1.msra.mxu0 0.0
    %3609 = vmatprep.subr.mxu0 0.0
    %3610 = vmatpush1.msra.mxu0 0.0
    %3611 = vmatprep.subr.mxu0 0.0
    %3612 = vmatpush1.msra.mxu0 0.0
    %3613 = vmatprep.subr.mxu0 0.0
    %3614 = vmatpush1.msra.mxu0 0.0
    %3615 = vmatprep.subr.mxu0 0.0
    %3616 = vmatpush1.msra.mxu0 0.0
    %3617 = vmatprep.subr.mxu0 0.0
    %3618 = vmatpush1.msra.mxu0 0.0
    %3619 = vmatprep.subr.mxu0 0.0
    %3620 = vmatpush1.msra.mxu0 0.0
    %3621 = vmatprep.subr.mxu0 0.0
    %3622 = vmatpush1.msra.mxu0 0.0
    %3623 = vmatprep.mubr.f32.mxu0 0.0
    %3624 = vmatmul.mubr.f32.gmra.mrb[0].mxu0 %v3557
    %v3625 = vpop.f32.mrb[0].mxu0
    %v3626 = vadd.f32 0.0, %v3625
    %v3627 = vpop.f32.mrb[0].mxu0
    %3628 = vdwg.mxu0
    %3630 = vrot.lane.b32.xlu0 %v3553, 32
    %v3631 = vpop.permute.xlu0 %3630
    %v3632 = vsel %vm110, %v3631, 0
    %3634 = vmatprep.subr.mxu0 0.0
    %3635 = vmatpush1.msra.mxu0 %v82
    %3636 = vmatprep.subr.mxu0 0.0
    %3637 = vmatpush1.msra.mxu0 %v83
    %3638 = vmatprep.subr.mxu0 0.0
    %3639 = vmatpush1.msra.mxu0 %v84
    %3640 = vmatprep.subr.mxu0 0.0
    %3641 = vmatpush1.msra.mxu0 %v85
    %3642 = vmatprep.subr.mxu0 0.0
    %3643 = vmatpush1.msra.mxu0 0.0
    %3644 = vmatprep.subr.mxu0 0.0
    %3645 = vmatpush1.msra.mxu0 0.0
    %3646 = vmatprep.subr.mxu0 0.0
    %3647 = vmatpush1.msra.mxu0 0.0
    %3648 = vmatprep.subr.mxu0 0.0
    %3649 = vmatpush1.msra.mxu0 0.0
    %3650 = vmatprep.subr.mxu0 0.0
    %3651 = vmatpush1.msra.mxu0 0.0
    %3652 = vmatprep.subr.mxu0 0.0
    %3653 = vmatpush1.msra.mxu0 0.0
    %3654 = vmatprep.subr.mxu0 0.0
    %3655 = vmatpush1.msra.mxu0 0.0
    %3656 = vmatprep.subr.mxu0 0.0
    %3657 = vmatpush1.msra.mxu0 0.0
    %3658 = vmatprep.subr.mxu0 0.0
    %3659 = vmatpush1.msra.mxu0 0.0
    %3660 = vmatprep.subr.mxu0 0.0
    %3661 = vmatpush1.msra.mxu0 0.0
    %3662 = vmatprep.subr.mxu0 0.0
    %3663 = vmatpush1.msra.mxu0 0.0
    %3664 = vmatprep.subr.mxu0 0.0
    %3665 = vmatpush1.msra.mxu0 0.0
    %3666 = vmatprep.subr.mxu0 0.0
    %3667 = vmatpush1.msra.mxu0 0.0
    %3668 = vmatprep.subr.mxu0 0.0
    %3669 = vmatpush1.msra.mxu0 0.0
    %3670 = vmatprep.subr.mxu0 0.0
    %3671 = vmatpush1.msra.mxu0 0.0
    %3672 = vmatprep.subr.mxu0 0.0
    %3673 = vmatpush1.msra.mxu0 0.0
    %3674 = vmatprep.subr.mxu0 0.0
    %3675 = vmatpush1.msra.mxu0 0.0
    %3676 = vmatprep.subr.mxu0 0.0
    %3677 = vmatpush1.msra.mxu0 0.0
    %3678 = vmatprep.subr.mxu0 0.0
    %3679 = vmatpush1.msra.mxu0 0.0
    %3680 = vmatprep.subr.mxu0 0.0
    %3681 = vmatpush1.msra.mxu0 0.0
    %3682 = vmatprep.subr.mxu0 0.0
    %3683 = vmatpush1.msra.mxu0 0.0
    %3684 = vmatprep.subr.mxu0 0.0
    %3685 = vmatpush1.msra.mxu0 0.0
    %3686 = vmatprep.subr.mxu0 0.0
    %3687 = vmatpush1.msra.mxu0 0.0
    %3688 = vmatprep.subr.mxu0 0.0
    %3689 = vmatpush1.msra.mxu0 0.0
    %3690 = vmatprep.subr.mxu0 0.0
    %3691 = vmatpush1.msra.mxu0 0.0
    %3692 = vmatprep.subr.mxu0 0.0
    %3693 = vmatpush1.msra.mxu0 0.0
    %3694 = vmatprep.subr.mxu0 0.0
    %3695 = vmatpush1.msra.mxu0 0.0
    %3696 = vmatprep.subr.mxu0 0.0
    %3697 = vmatpush1.msra.mxu0 0.0
    %3698 = vmatprep.mubr.f32.mxu0 0.0
    %3699 = vmatmul.mubr.f32.gmra.mrb[0].mxu0 %v3632
    %v3700 = vpop.f32.mrb[0].mxu0
    %v3701 = vadd.f32 %v3626, %v3700
    %v3702 = vpop.f32.mrb[0].mxu0
    %3703 = vdwg.mxu0
    %v3704 = vadd.f32 %v3701, %v366
    %v3705 = vtanh.pop %v3704
    %v3706 = vxor.u32 %v3704, 2147483648
    %v3707 = vmul.f32 %v3706, 1.442695
    %v3708 = vpow.pop %v3707
    %v3709 = vadd.f32 %v3708, 1.0
    %v3710 = vrcp.pop %v3709
    %v3711 = vmul.f32 1.0, %v3710
    %v3712 = vsel %vm97, %v3705, %v3711
    %v3713 = vmul.f32 %v3712, %v3445
    %3715 = vrot.lane.b32.xlu0 %v3712, 64
    %v3716 = vpop.permute.xlu0 %3715
    %v3718 = vmul.f32 %v3712, %v3716
    %3720 = vrot.lane.b32.xlu0 %v3718, 32
    %v3721 = vpop.permute.xlu0 %3720
    %v3723 = vadd.f32 %v3713, %v3721
    %v3724 = vtanh.pop %v3723
    %3726 = vrot.lane.b32.xlu0 %v3724, 64
    %v3727 = vpop.permute.xlu0 %3726
    %v3729 = vmul.f32 %v3712, %v3727
    %3730 = vset.pattern.permute.xlu0 13
    %3731 = vperm.xlu0 %3730, %v75
    %v3732 = vpop.permute.xlu0 %3731
    %v3734 = vmul.f32 %v3732, %v107
    %3735 = vmatprep.subr.mxu0 0.0
    %3736 = vmatpush1.msra.mxu0 %v77
    %3737 = vmatprep.subr.mxu0 0.0
    %3738 = vmatpush1.msra.mxu0 %v78
    %3739 = vmatprep.subr.mxu0 0.0
    %3740 = vmatpush1.msra.mxu0 %v79
    %3741 = vmatprep.subr.mxu0 0.0
    %3742 = vmatpush1.msra.mxu0 %v80
    %3743 = vmatprep.subr.mxu0 0.0
    %3744 = vmatpush1.msra.mxu0 0.0
    %3745 = vmatprep.subr.mxu0 0.0
    %3746 = vmatpush1.msra.mxu0 0.0
    %3747 = vmatprep.subr.mxu0 0.0
    %3748 = vmatpush1.msra.mxu0 0.0
    %3749 = vmatprep.subr.mxu0 0.0
    %3750 = vmatpush1.msra.mxu0 0.0
    %3751 = vmatprep.subr.mxu0 0.0
    %3752 = vmatpush1.msra.mxu0 0.0
    %3753 = vmatprep.subr.mxu0 0.0
    %3754 = vmatpush1.msra.mxu0 0.0
    %3755 = vmatprep.subr.mxu0 0.0
    %3756 = vmatpush1.msra.mxu0 0.0
    %3757 = vmatprep.subr.mxu0 0.0
    %3758 = vmatpush1.msra.mxu0 0.0
    %3759 = vmatprep.subr.mxu0 0.0
    %3760 = vmatpush1.msra.mxu0 0.0
    %3761 = vmatprep.subr.mxu0 0.0
    %3762 = vmatpush1.msra.mxu0 0.0
    %3763 = vmatprep.subr.mxu0 0.0
    %3764 = vmatpush1.msra.mxu0 0.0
    %3765 = vmatprep.subr.mxu0 0.0
    %3766 = vmatpush1.msra.mxu0 0.0
    %3767 = vmatprep.subr.mxu0 0.0
    %3768 = vmatpush1.msra.mxu0 0.0
    %3769 = vmatprep.subr.mxu0 0.0
    %3770 = vmatpush1.msra.mxu0 0.0
    %3771 = vmatprep.subr.mxu0 0.0
    %3772 = vmatpush1.msra.mxu0 0.0
    %3773 = vmatprep.subr.mxu0 0.0
    %3774 = vmatpush1.msra.mxu0 0.0
    %3775 = vmatprep.subr.mxu0 0.0
    %3776 = vmatpush1.msra.mxu0 0.0
    %3777 = vmatprep.subr.mxu0 0.0
    %3778 = vmatpush1.msra.mxu0 0.0
    %3779 = vmatprep.subr.mxu0 0.0
    %3780 = vmatpush1.msra.mxu0 0.0
    %3781 = vmatprep.subr.mxu0 0.0
    %3782 = vmatpush1.msra.mxu0 0.0
    %3783 = vmatprep.subr.mxu0 0.0
    %3784 = vmatpush1.msra.mxu0 0.0
    %3785 = vmatprep.subr.mxu0 0.0
    %3786 = vmatpush1.msra.mxu0 0.0
    %3787 = vmatprep.subr.mxu0 0.0
    %3788 = vmatpush1.msra.mxu0 0.0
    %3789 = vmatprep.subr.mxu0 0.0
    %3790 = vmatpush1.msra.mxu0 0.0
    %3791 = vmatprep.subr.mxu0 0.0
    %3792 = vmatpush1.msra.mxu0 0.0
    %3793 = vmatprep.subr.mxu0 0.0
    %3794 = vmatpush1.msra.mxu0 0.0
    %3795 = vmatprep.subr.mxu0 0.0
    %3796 = vmatpush1.msra.mxu0 0.0
    %3797 = vmatprep.subr.mxu0 0.0
    %3798 = vmatpush1.msra.mxu0 0.0
    %3799 = vmatprep.mubr.f32.mxu0 0.0
    %3800 = vmatmul.mubr.f32.gmra.mrb[0].mxu0 %v3632
    %v3801 = vpop.f32.mrb[0].mxu0
    %v3802 = vadd.f32 0.0, %v3801
    %v3803 = vpop.f32.mrb[0].mxu0
    %3804 = vdwg.mxu0
    %v3805 = vadd.f32 %v3734, %v3802
    %v3806 = vadd.f32 %v3805, %v189
    %v3807 = vtanh.pop %v3806
    %v3808 = vxor.u32 %v3806, 2147483648
    %v3809 = vmul.f32 %v3808, 1.442695
    %v3810 = vpow.pop %v3809
    %v3811 = vadd.f32 %v3810, 1.0
    %v3812 = vrcp.pop %v3811
    %v3813 = vmul.f32 1.0, %v3812
    %v3814 = vsel %vm97, %v3807, %v3813
    %v3815 = vmul.f32 %v3814, %v3547
    %3817 = vrot.lane.b32.xlu0 %v3814, 64
    %v3818 = vpop.permute.xlu0 %3817
    %v3820 = vmul.f32 %v3814, %v3818
    %3822 = vrot.lane.b32.xlu0 %v3820, 32
    %v3823 = vpop.permute.xlu0 %3822
    %v3825 = vadd.f32 %v3815, %v3823
    %v3826 = vtanh.pop %v3825
    %3828 = vrot.lane.b32.xlu0 %v3826, 64
    %v3829 = vpop.permute.xlu0 %3828
    %v3831 = vmul.f32 %v3814, %v3829
    %3833 = vrot.lane.b32.xlu0 %v3729, 32
    %v3834 = vpop.permute.xlu0 %3833
    %v3835 = vsel %vm110, %v3834, 0
    %3837 = vmatprep.subr.mxu0 0.0
    %3838 = vmatpush1.msra.mxu0 %v86
    %3839 = vmatprep.subr.mxu0 0.0
    %3840 = vmatpush1.msra.mxu0 %v87
    %3841 = vmatprep.subr.mxu0 0.0
    %3842 = vmatpush1.msra.mxu0 %v88
    %3843 = vmatprep.subr.mxu0 0.0
    %3844 = vmatpush1.msra.mxu0 %v89
    %3845 = vmatprep.subr.mxu0 0.0
    %3846 = vmatpush1.msra.mxu0 0.0
    %3847 = vmatprep.subr.mxu0 0.0
    %3848 = vmatpush1.msra.mxu0 0.0
    %3849 = vmatprep.subr.mxu0 0.0
    %3850 = vmatpush1.msra.mxu0 0.0
    %3851 = vmatprep.subr.mxu0 0.0
    %3852 = vmatpush1.msra.mxu0 0.0
    %3853 = vmatprep.subr.mxu0 0.0
    %3854 = vmatpush1.msra.mxu0 0.0
    %3855 = vmatprep.subr.mxu0 0.0
    %3856 = vmatpush1.msra.mxu0 0.0
    %3857 = vmatprep.subr.mxu0 0.0
    %3858 = vmatpush1.msra.mxu0 0.0
    %3859 = vmatprep.subr.mxu0 0.0
    %3860 = vmatpush1.msra.mxu0 0.0
    %3861 = vmatprep.subr.mxu0 0.0
    %3862 = vmatpush1.msra.mxu0 0.0
    %3863 = vmatprep.subr.mxu0 0.0
    %3864 = vmatpush1.msra.mxu0 0.0
    %3865 = vmatprep.subr.mxu0 0.0
    %3866 = vmatpush1.msra.mxu0 0.0
    %3867 = vmatprep.subr.mxu0 0.0
    %3868 = vmatpush1.msra.mxu0 0.0
    %3869 = vmatprep.subr.mxu0 0.0
    %3870 = vmatpush1.msra.mxu0 0.0
    %3871 = vmatprep.subr.mxu0 0.0
    %3872 = vmatpush1.msra.mxu0 0.0
    %3873 = vmatprep.subr.mxu0 0.0
    %3874 = vmatpush1.msra.mxu0 0.0
    %3875 = vmatprep.subr.mxu0 0.0
    %3876 = vmatpush1.msra.mxu0 0.0
    %3877 = vmatprep.subr.mxu0 0.0
    %3878 = vmatpush1.msra.mxu0 0.0
    %3879 = vmatprep.subr.mxu0 0.0
    %3880 = vmatpush1.msra.mxu0 0.0
    %3881 = vmatprep.subr.mxu0 0.0
    %3882 = vmatpush1.msra.mxu0 0.0
    %3883 = vmatprep.subr.mxu0 0.0
    %3884 = vmatpush1.msra.mxu0 0.0
    %3885 = vmatprep.subr.mxu0 0.0
    %3886 = vmatpush1.msra.mxu0 0.0
    %3887 = vmatprep.subr.mxu0 0.0
    %3888 = vmatpush1.msra.mxu0 0.0
    %3889 = vmatprep.subr.mxu0 0.0
    %3890 = vmatpush1.msra.mxu0 0.0
    %3891 = vmatprep.subr.mxu0 0.0
    %3892 = vmatpush1.msra.mxu0 0.0
    %3893 = vmatprep.subr.mxu0 0.0
    %3894 = vmatpush1.msra.mxu0 0.0
    %3895 = vmatprep.subr.mxu0 0.0
    %3896 = vmatpush1.msra.mxu0 0.0
    %3897 = vmatprep.subr.mxu0 0.0
    %3898 = vmatpush1.msra.mxu0 0.0
    %3899 = vmatprep.subr.mxu0 0.0
    %3900 = vmatpush1.msra.mxu0 0.0
    %3901 = vmatprep.mubr.f32.mxu0 0.0
    %3902 = vmatmul.mubr.f32.gmra.mrb[0].mxu0 %v3835
    %v3903 = vpop.f32.mrb[0].mxu0
    %v3904 = vadd.f32 0.0, %v3903
    %v3905 = vpop.f32.mrb[0].mxu0
    %3906 = vdwg.mxu0
    %3908 = vrot.lane.b32.xlu0 %v3831, 32
    %v3909 = vpop.permute.xlu0 %3908
    %v3910 = vsel %vm110, %v3909, 0
    %3912 = vmatprep.subr.mxu0 0.0
    %3913 = vmatpush1.msra.mxu0 %v82
    %3914 = vmatprep.subr.mxu0 0.0
    %3915 = vmatpush1.msra.mxu0 %v83
    %3916 = vmatprep.subr.mxu0 0.0
    %3917 = vmatpush1.msra.mxu0 %v84
    %3918 = vmatprep.subr.mxu0 0.0
    %3919 = vmatpush1.msra.mxu0 %v85
    %3920 = vmatprep.subr.mxu0 0.0
    %3921 = vmatpush1.msra.mxu0 0.0
    %3922 = vmatprep.subr.mxu0 0.0
    %3923 = vmatpush1.msra.mxu0 0.0
    %3924 = vmatprep.subr.mxu0 0.0
    %3925 = vmatpush1.msra.mxu0 0.0
    %3926 = vmatprep.subr.mxu0 0.0
    %3927 = vmatpush1.msra.mxu0 0.0
    %3928 = vmatprep.subr.mxu0 0.0
    %3929 = vmatpush1.msra.mxu0 0.0
    %3930 = vmatprep.subr.mxu0 0.0
    %3931 = vmatpush1.msra.mxu0 0.0
    %3932 = vmatprep.subr.mxu0 0.0
    %3933 = vmatpush1.msra.mxu0 0.0
    %3934 = vmatprep.subr.mxu0 0.0
    %3935 = vmatpush1.msra.mxu0 0.0
    %3936 = vmatprep.subr.mxu0 0.0
    %3937 = vmatpush1.msra.mxu0 0.0
    %3938 = vmatprep.subr.mxu0 0.0
    %3939 = vmatpush1.msra.mxu0 0.0
    %3940 = vmatprep.subr.mxu0 0.0
    %3941 = vmatpush1.msra.mxu0 0.0
    %3942 = vmatprep.subr.mxu0 0.0
    %3943 = vmatpush1.msra.mxu0 0.0
    %3944 = vmatprep.subr.mxu0 0.0
    %3945 = vmatpush1.msra.mxu0 0.0
    %3946 = vmatprep.subr.mxu0 0.0
    %3947 = vmatpush1.msra.mxu0 0.0
    %3948 = vmatprep.subr.mxu0 0.0
    %3949 = vmatpush1.msra.mxu0 0.0
    %3950 = vmatprep.subr.mxu0 0.0
    %3951 = vmatpush1.msra.mxu0 0.0
    %3952 = vmatprep.subr.mxu0 0.0
    %3953 = vmatpush1.msra.mxu0 0.0
    %3954 = vmatprep.subr.mxu0 0.0
    %3955 = vmatpush1.msra.mxu0 0.0
    %3956 = vmatprep.subr.mxu0 0.0
    %3957 = vmatpush1.msra.mxu0 0.0
    %3958 = vmatprep.subr.mxu0 0.0
    %3959 = vmatpush1.msra.mxu0 0.0
    %3960 = vmatprep.subr.mxu0 0.0
    %3961 = vmatpush1.msra.mxu0 0.0
    %3962 = vmatprep.subr.mxu0 0.0
    %3963 = vmatpush1.msra.mxu0 0.0
    %3964 = vmatprep.subr.mxu0 0.0
    %3965 = vmatpush1.msra.mxu0 0.0
    %3966 = vmatprep.subr.mxu0 0.0
    %3967 = vmatpush1.msra.mxu0 0.0
    %3968 = vmatprep.subr.mxu0 0.0
    %3969 = vmatpush1.msra.mxu0 0.0
    %3970 = vmatprep.subr.mxu0 0.0
    %3971 = vmatpush1.msra.mxu0 0.0
    %3972 = vmatprep.subr.mxu0 0.0
    %3973 = vmatpush1.msra.mxu0 0.0
    %3974 = vmatprep.subr.mxu0 0.0
    %3975 = vmatpush1.msra.mxu0 0.0
    %3976 = vmatprep.mubr.f32.mxu0 0.0
    %3977 = vmatmul.mubr.f32.gmra.mrb[0].mxu0 %v3910
    %v3978 = vpop.f32.mrb[0].mxu0
    %v3979 = vadd.f32 %v3904, %v3978
    %v3980 = vpop.f32.mrb[0].mxu0
    %3981 = vdwg.mxu0
    %v3982 = vadd.f32 %v3979, %v366
    %v3983 = vtanh.pop %v3982
    %v3984 = vxor.u32 %v3982, 2147483648
    %v3985 = vmul.f32 %v3984, 1.442695
    %v3986 = vpow.pop %v3985
    %v3987 = vadd.f32 %v3986, 1.0
    %v3988 = vrcp.pop %v3987
    %v3989 = vmul.f32 1.0, %v3988
    %v3990 = vsel %vm97, %v3983, %v3989
    %v3991 = vmul.f32 %v3990, %v3723
    %3993 = vrot.lane.b32.xlu0 %v3990, 64
    %v3994 = vpop.permute.xlu0 %3993
    %v3996 = vmul.f32 %v3990, %v3994
    %3998 = vrot.lane.b32.xlu0 %v3996, 32
    %v3999 = vpop.permute.xlu0 %3998
    %v4001 = vadd.f32 %v3991, %v3999
    %v4002 = vtanh.pop %v4001
    %4004 = vrot.lane.b32.xlu0 %v4002, 64
    %v4005 = vpop.permute.xlu0 %4004
    %v4007 = vmul.f32 %v3990, %v4005
    %4008 = vset.pattern.permute.xlu0 14
    %4009 = vperm.xlu0 %4008, %v75
    %v4010 = vpop.permute.xlu0 %4009
    %v4012 = vmul.f32 %v4010, %v107
    %4013 = vmatprep.subr.mxu0 0.0
    %4014 = vmatpush1.msra.mxu0 %v77
    %4015 = vmatprep.subr.mxu0 0.0
    %4016 = vmatpush1.msra.mxu0 %v78
    %4017 = vmatprep.subr.mxu0 0.0
    %4018 = vmatpush1.msra.mxu0 %v79
    %4019 = vmatprep.subr.mxu0 0.0
    %4020 = vmatpush1.msra.mxu0 %v80
    %4021 = vmatprep.subr.mxu0 0.0
    %4022 = vmatpush1.msra.mxu0 0.0
    %4023 = vmatprep.subr.mxu0 0.0
    %4024 = vmatpush1.msra.mxu0 0.0
    %4025 = vmatprep.subr.mxu0 0.0
    %4026 = vmatpush1.msra.mxu0 0.0
    %4027 = vmatprep.subr.mxu0 0.0
    %4028 = vmatpush1.msra.mxu0 0.0
    %4029 = vmatprep.subr.mxu0 0.0
    %4030 = vmatpush1.msra.mxu0 0.0
    %4031 = vmatprep.subr.mxu0 0.0
    %4032 = vmatpush1.msra.mxu0 0.0
    %4033 = vmatprep.subr.mxu0 0.0
    %4034 = vmatpush1.msra.mxu0 0.0
    %4035 = vmatprep.subr.mxu0 0.0
    %4036 = vmatpush1.msra.mxu0 0.0
    %4037 = vmatprep.subr.mxu0 0.0
    %4038 = vmatpush1.msra.mxu0 0.0
    %4039 = vmatprep.subr.mxu0 0.0
    %4040 = vmatpush1.msra.mxu0 0.0
    %4041 = vmatprep.subr.mxu0 0.0
    %4042 = vmatpush1.msra.mxu0 0.0
    %4043 = vmatprep.subr.mxu0 0.0
    %4044 = vmatpush1.msra.mxu0 0.0
    %4045 = vmatprep.subr.mxu0 0.0
    %4046 = vmatpush1.msra.mxu0 0.0
    %4047 = vmatprep.subr.mxu0 0.0
    %4048 = vmatpush1.msra.mxu0 0.0
    %4049 = vmatprep.subr.mxu0 0.0
    %4050 = vmatpush1.msra.mxu0 0.0
    %4051 = vmatprep.subr.mxu0 0.0
    %4052 = vmatpush1.msra.mxu0 0.0
    %4053 = vmatprep.subr.mxu0 0.0
    %4054 = vmatpush1.msra.mxu0 0.0
    %4055 = vmatprep.subr.mxu0 0.0
    %4056 = vmatpush1.msra.mxu0 0.0
    %4057 = vmatprep.subr.mxu0 0.0
    %4058 = vmatpush1.msra.mxu0 0.0
    %4059 = vmatprep.subr.mxu0 0.0
    %4060 = vmatpush1.msra.mxu0 0.0
    %4061 = vmatprep.subr.mxu0 0.0
    %4062 = vmatpush1.msra.mxu0 0.0
    %4063 = vmatprep.subr.mxu0 0.0
    %4064 = vmatpush1.msra.mxu0 0.0
    %4065 = vmatprep.subr.mxu0 0.0
    %4066 = vmatpush1.msra.mxu0 0.0
    %4067 = vmatprep.subr.mxu0 0.0
    %4068 = vmatpush1.msra.mxu0 0.0
    %4069 = vmatprep.subr.mxu0 0.0
    %4070 = vmatpush1.msra.mxu0 0.0
    %4071 = vmatprep.subr.mxu0 0.0
    %4072 = vmatpush1.msra.mxu0 0.0
    %4073 = vmatprep.subr.mxu0 0.0
    %4074 = vmatpush1.msra.mxu0 0.0
    %4075 = vmatprep.subr.mxu0 0.0
    %4076 = vmatpush1.msra.mxu0 0.0
    %4077 = vmatprep.mubr.f32.mxu0 0.0
    %4078 = vmatmul.mubr.f32.gmra.mrb[0].mxu0 %v3910
    %v4079 = vpop.f32.mrb[0].mxu0
    %v4080 = vadd.f32 0.0, %v4079
    %v4081 = vpop.f32.mrb[0].mxu0
    %4082 = vdwg.mxu0
    %v4083 = vadd.f32 %v4012, %v4080
    %v4084 = vadd.f32 %v4083, %v189
    %v4085 = vtanh.pop %v4084
    %v4086 = vxor.u32 %v4084, 2147483648
    %v4087 = vmul.f32 %v4086, 1.442695
    %v4088 = vpow.pop %v4087
    %v4089 = vadd.f32 %v4088, 1.0
    %v4090 = vrcp.pop %v4089
    %v4091 = vmul.f32 1.0, %v4090
    %v4092 = vsel %vm97, %v4085, %v4091
    %v4093 = vmul.f32 %v4092, %v3825
    %4095 = vrot.lane.b32.xlu0 %v4092, 64
    %v4096 = vpop.permute.xlu0 %4095
    %v4098 = vmul.f32 %v4092, %v4096
    %4100 = vrot.lane.b32.xlu0 %v4098, 32
    %v4101 = vpop.permute.xlu0 %4100
    %v4103 = vadd.f32 %v4093, %v4101
    %v4104 = vtanh.pop %v4103
    %4106 = vrot.lane.b32.xlu0 %v4104, 64
    %v4107 = vpop.permute.xlu0 %4106
    %v4109 = vmul.f32 %v4092, %v4107
    %4111 = vrot.lane.b32.xlu0 %v4007, 32
    %v4112 = vpop.permute.xlu0 %4111
    %v4113 = vsel %vm110, %v4112, 0
    %4115 = vmatprep.subr.mxu0 0.0
    %4116 = vmatpush1.msra.mxu0 %v86
    %4117 = vmatprep.subr.mxu0 0.0
    %4118 = vmatpush1.msra.mxu0 %v87
    %4119 = vmatprep.subr.mxu0 0.0
    %4120 = vmatpush1.msra.mxu0 %v88
    %4121 = vmatprep.subr.mxu0 0.0
    %4122 = vmatpush1.msra.mxu0 %v89
    %4123 = vmatprep.subr.mxu0 0.0
    %4124 = vmatpush1.msra.mxu0 0.0
    %4125 = vmatprep.subr.mxu0 0.0
    %4126 = vmatpush1.msra.mxu0 0.0
    %4127 = vmatprep.subr.mxu0 0.0
    %4128 = vmatpush1.msra.mxu0 0.0
    %4129 = vmatprep.subr.mxu0 0.0
    %4130 = vmatpush1.msra.mxu0 0.0
    %4131 = vmatprep.subr.mxu0 0.0
    %4132 = vmatpush1.msra.mxu0 0.0
    %4133 = vmatprep.subr.mxu0 0.0
    %4134 = vmatpush1.msra.mxu0 0.0
    %4135 = vmatprep.subr.mxu0 0.0
    %4136 = vmatpush1.msra.mxu0 0.0
    %4137 = vmatprep.subr.mxu0 0.0
    %4138 = vmatpush1.msra.mxu0 0.0
    %4139 = vmatprep.subr.mxu0 0.0
    %4140 = vmatpush1.msra.mxu0 0.0
    %4141 = vmatprep.subr.mxu0 0.0
    %4142 = vmatpush1.msra.mxu0 0.0
    %4143 = vmatprep.subr.mxu0 0.0
    %4144 = vmatpush1.msra.mxu0 0.0
    %4145 = vmatprep.subr.mxu0 0.0
    %4146 = vmatpush1.msra.mxu0 0.0
    %4147 = vmatprep.subr.mxu0 0.0
    %4148 = vmatpush1.msra.mxu0 0.0
    %4149 = vmatprep.subr.mxu0 0.0
    %4150 = vmatpush1.msra.mxu0 0.0
    %4151 = vmatprep.subr.mxu0 0.0
    %4152 = vmatpush1.msra.mxu0 0.0
    %4153 = vmatprep.subr.mxu0 0.0
    %4154 = vmatpush1.msra.mxu0 0.0
    %4155 = vmatprep.subr.mxu0 0.0
    %4156 = vmatpush1.msra.mxu0 0.0
    %4157 = vmatprep.subr.mxu0 0.0
    %4158 = vmatpush1.msra.mxu0 0.0
    %4159 = vmatprep.subr.mxu0 0.0
    %4160 = vmatpush1.msra.mxu0 0.0
    %4161 = vmatprep.subr.mxu0 0.0
    %4162 = vmatpush1.msra.mxu0 0.0
    %4163 = vmatprep.subr.mxu0 0.0
    %4164 = vmatpush1.msra.mxu0 0.0
    %4165 = vmatprep.subr.mxu0 0.0
    %4166 = vmatpush1.msra.mxu0 0.0
    %4167 = vmatprep.subr.mxu0 0.0
    %4168 = vmatpush1.msra.mxu0 0.0
    %4169 = vmatprep.subr.mxu0 0.0
    %4170 = vmatpush1.msra.mxu0 0.0
    %4171 = vmatprep.subr.mxu0 0.0
    %4172 = vmatpush1.msra.mxu0 0.0
    %4173 = vmatprep.subr.mxu0 0.0
    %4174 = vmatpush1.msra.mxu0 0.0
    %4175 = vmatprep.subr.mxu0 0.0
    %4176 = vmatpush1.msra.mxu0 0.0
    %4177 = vmatprep.subr.mxu0 0.0
    %4178 = vmatpush1.msra.mxu0 0.0
    %4179 = vmatprep.mubr.f32.mxu0 0.0
    %4180 = vmatmul.mubr.f32.gmra.mrb[0].mxu0 %v4113
    %v4181 = vpop.f32.mrb[0].mxu0
    %v4182 = vadd.f32 0.0, %v4181
    %v4183 = vpop.f32.mrb[0].mxu0
    %4184 = vdwg.mxu0
    %4186 = vrot.lane.b32.xlu0 %v4109, 32
    %v4187 = vpop.permute.xlu0 %4186
    %v4188 = vsel %vm110, %v4187, 0
    %4190 = vmatprep.subr.mxu0 0.0
    %4191 = vmatpush1.msra.mxu0 %v82
    %4192 = vmatprep.subr.mxu0 0.0
    %4193 = vmatpush1.msra.mxu0 %v83
    %4194 = vmatprep.subr.mxu0 0.0
    %4195 = vmatpush1.msra.mxu0 %v84
    %4196 = vmatprep.subr.mxu0 0.0
    %4197 = vmatpush1.msra.mxu0 %v85
    %4198 = vmatprep.subr.mxu0 0.0
    %4199 = vmatpush1.msra.mxu0 0.0
    %4200 = vmatprep.subr.mxu0 0.0
    %4201 = vmatpush1.msra.mxu0 0.0
    %4202 = vmatprep.subr.mxu0 0.0
    %4203 = vmatpush1.msra.mxu0 0.0
    %4204 = vmatprep.subr.mxu0 0.0
    %4205 = vmatpush1.msra.mxu0 0.0
    %4206 = vmatprep.subr.mxu0 0.0
    %4207 = vmatpush1.msra.mxu0 0.0
    %4208 = vmatprep.subr.mxu0 0.0
    %4209 = vmatpush1.msra.mxu0 0.0
    %4210 = vmatprep.subr.mxu0 0.0
    %4211 = vmatpush1.msra.mxu0 0.0
    %4212 = vmatprep.subr.mxu0 0.0
    %4213 = vmatpush1.msra.mxu0 0.0
    %4214 = vmatprep.subr.mxu0 0.0
    %4215 = vmatpush1.msra.mxu0 0.0
    %4216 = vmatprep.subr.mxu0 0.0
    %4217 = vmatpush1.msra.mxu0 0.0
    %4218 = vmatprep.subr.mxu0 0.0
    %4219 = vmatpush1.msra.mxu0 0.0
    %4220 = vmatprep.subr.mxu0 0.0
    %4221 = vmatpush1.msra.mxu0 0.0
    %4222 = vmatprep.subr.mxu0 0.0
    %4223 = vmatpush1.msra.mxu0 0.0
    %4224 = vmatprep.subr.mxu0 0.0
    %4225 = vmatpush1.msra.mxu0 0.0
    %4226 = vmatprep.subr.mxu0 0.0
    %4227 = vmatpush1.msra.mxu0 0.0
    %4228 = vmatprep.subr.mxu0 0.0
    %4229 = vmatpush1.msra.mxu0 0.0
    %4230 = vmatprep.subr.mxu0 0.0
    %4231 = vmatpush1.msra.mxu0 0.0
    %4232 = vmatprep.subr.mxu0 0.0
    %4233 = vmatpush1.msra.mxu0 0.0
    %4234 = vmatprep.subr.mxu0 0.0
    %4235 = vmatpush1.msra.mxu0 0.0
    %4236 = vmatprep.subr.mxu0 0.0
    %4237 = vmatpush1.msra.mxu0 0.0
    %4238 = vmatprep.subr.mxu0 0.0
    %4239 = vmatpush1.msra.mxu0 0.0
    %4240 = vmatprep.subr.mxu0 0.0
    %4241 = vmatpush1.msra.mxu0 0.0
    %4242 = vmatprep.subr.mxu0 0.0
    %4243 = vmatpush1.msra.mxu0 0.0
    %4244 = vmatprep.subr.mxu0 0.0
    %4245 = vmatpush1.msra.mxu0 0.0
    %4246 = vmatprep.subr.mxu0 0.0
    %4247 = vmatpush1.msra.mxu0 0.0
    %4248 = vmatprep.subr.mxu0 0.0
    %4249 = vmatpush1.msra.mxu0 0.0
    %4250 = vmatprep.subr.mxu0 0.0
    %4251 = vmatpush1.msra.mxu0 0.0
    %4252 = vmatprep.subr.mxu0 0.0
    %4253 = vmatpush1.msra.mxu0 0.0
    %4254 = vmatprep.mubr.f32.mxu0 0.0
    %4255 = vmatmul.mubr.f32.gmra.mrb[0].mxu0 %v4188
    %v4256 = vpop.f32.mrb[0].mxu0
    %v4257 = vadd.f32 %v4182, %v4256
    %v4258 = vpop.f32.mrb[0].mxu0
    %4259 = vdwg.mxu0
    %v4260 = vadd.f32 %v4257, %v366
    %v4261 = vtanh.pop %v4260
    %v4262 = vxor.u32 %v4260, 2147483648
    %v4263 = vmul.f32 %v4262, 1.442695
    %v4264 = vpow.pop %v4263
    %v4265 = vadd.f32 %v4264, 1.0
    %v4266 = vrcp.pop %v4265
    %v4267 = vmul.f32 1.0, %v4266
    %v4268 = vsel %vm97, %v4261, %v4267
    %v4269 = vmul.f32 %v4268, %v4001
    %4271 = vrot.lane.b32.xlu0 %v4268, 64
    %v4272 = vpop.permute.xlu0 %4271
    %v4274 = vmul.f32 %v4268, %v4272
    %4276 = vrot.lane.b32.xlu0 %v4274, 32
    %v4277 = vpop.permute.xlu0 %4276
    %v4279 = vadd.f32 %v4269, %v4277
    %v4280 = vtanh.pop %v4279
    %4282 = vrot.lane.b32.xlu0 %v4280, 64
    %v4283 = vpop.permute.xlu0 %4282
    %v4285 = vmul.f32 %v4268, %v4283
    %4286 = vset.pattern.permute.xlu0 15
    %4287 = vperm.xlu0 %4286, %v75
    %v4288 = vpop.permute.xlu0 %4287
    %v4290 = vmul.f32 %v4288, %v107
    %4291 = vmatprep.subr.mxu0 0.0
    %4292 = vmatpush1.msra.mxu0 %v77
    %4293 = vmatprep.subr.mxu0 0.0
    %4294 = vmatpush1.msra.mxu0 %v78
    %4295 = vmatprep.subr.mxu0 0.0
    %4296 = vmatpush1.msra.mxu0 %v79
    %4297 = vmatprep.subr.mxu0 0.0
    %4298 = vmatpush1.msra.mxu0 %v80
    %4299 = vmatprep.subr.mxu0 0.0
    %4300 = vmatpush1.msra.mxu0 0.0
    %4301 = vmatprep.subr.mxu0 0.0
    %4302 = vmatpush1.msra.mxu0 0.0
    %4303 = vmatprep.subr.mxu0 0.0
    %4304 = vmatpush1.msra.mxu0 0.0
    %4305 = vmatprep.subr.mxu0 0.0
    %4306 = vmatpush1.msra.mxu0 0.0
    %4307 = vmatprep.subr.mxu0 0.0
    %4308 = vmatpush1.msra.mxu0 0.0
    %4309 = vmatprep.subr.mxu0 0.0
    %4310 = vmatpush1.msra.mxu0 0.0
    %4311 = vmatprep.subr.mxu0 0.0
    %4312 = vmatpush1.msra.mxu0 0.0
    %4313 = vmatprep.subr.mxu0 0.0
    %4314 = vmatpush1.msra.mxu0 0.0
    %4315 = vmatprep.subr.mxu0 0.0
    %4316 = vmatpush1.msra.mxu0 0.0
    %4317 = vmatprep.subr.mxu0 0.0
    %4318 = vmatpush1.msra.mxu0 0.0
    %4319 = vmatprep.subr.mxu0 0.0
    %4320 = vmatpush1.msra.mxu0 0.0
    %4321 = vmatprep.subr.mxu0 0.0
    %4322 = vmatpush1.msra.mxu0 0.0
    %4323 = vmatprep.subr.mxu0 0.0
    %4324 = vmatpush1.msra.mxu0 0.0
    %4325 = vmatprep.subr.mxu0 0.0
    %4326 = vmatpush1.msra.mxu0 0.0
    %4327 = vmatprep.subr.mxu0 0.0
    %4328 = vmatpush1.msra.mxu0 0.0
    %4329 = vmatprep.subr.mxu0 0.0
    %4330 = vmatpush1.msra.mxu0 0.0
    %4331 = vmatprep.subr.mxu0 0.0
    %4332 = vmatpush1.msra.mxu0 0.0
    %4333 = vmatprep.subr.mxu0 0.0
    %4334 = vmatpush1.msra.mxu0 0.0
    %4335 = vmatprep.subr.mxu0 0.0
    %4336 = vmatpush1.msra.mxu0 0.0
    %4337 = vmatprep.subr.mxu0 0.0
    %4338 = vmatpush1.msra.mxu0 0.0
    %4339 = vmatprep.subr.mxu0 0.0
    %4340 = vmatpush1.msra.mxu0 0.0
    %4341 = vmatprep.subr.mxu0 0.0
    %4342 = vmatpush1.msra.mxu0 0.0
    %4343 = vmatprep.subr.mxu0 0.0
    %4344 = vmatpush1.msra.mxu0 0.0
    %4345 = vmatprep.subr.mxu0 0.0
    %4346 = vmatpush1.msra.mxu0 0.0
    %4347 = vmatprep.subr.mxu0 0.0
    %4348 = vmatpush1.msra.mxu0 0.0
    %4349 = vmatprep.subr.mxu0 0.0
    %4350 = vmatpush1.msra.mxu0 0.0
    %4351 = vmatprep.subr.mxu0 0.0
    %4352 = vmatpush1.msra.mxu0 0.0
    %4353 = vmatprep.subr.mxu0 0.0
    %4354 = vmatpush1.msra.mxu0 0.0
    %4355 = vmatprep.mubr.f32.mxu0 0.0
    %4356 = vmatmul.mubr.f32.gmra.mrb[0].mxu0 %v4188
    %v4357 = vpop.f32.mrb[0].mxu0
    %v4358 = vadd.f32 0.0, %v4357
    %v4359 = vpop.f32.mrb[0].mxu0
    %4360 = vdwg.mxu0
    %v4361 = vadd.f32 %v4290, %v4358
    %v4362 = vadd.f32 %v4361, %v189
    %v4363 = vtanh.pop %v4362
    %v4364 = vxor.u32 %v4362, 2147483648
    %v4365 = vmul.f32 %v4364, 1.442695
    %v4366 = vpow.pop %v4365
    %v4367 = vadd.f32 %v4366, 1.0
    %v4368 = vrcp.pop %v4367
    %v4369 = vmul.f32 1.0, %v4368
    %v4370 = vsel %vm97, %v4363, %v4369
    %v4371 = vmul.f32 %v4370, %v4103
    %4373 = vrot.lane.b32.xlu0 %v4370, 64
    %v4374 = vpop.permute.xlu0 %4373
    %v4376 = vmul.f32 %v4370, %v4374
    %4378 = vrot.lane.b32.xlu0 %v4376, 32
    %v4379 = vpop.permute.xlu0 %4378
    %v4381 = vadd.f32 %v4371, %v4379
    %v4382 = vtanh.pop %v4381
    %4384 = vrot.lane.b32.xlu0 %v4382, 64
    %v4385 = vpop.permute.xlu0 %4384
    %v4387 = vmul.f32 %v4370, %v4385
    %4389 = vrot.lane.b32.xlu0 %v4285, 32
    %v4390 = vpop.permute.xlu0 %4389
    %v4391 = vsel %vm110, %v4390, 0
    %4393 = vmatprep.subr.mxu0 0.0
    %4394 = vmatpush1.msra.mxu0 %v86
    %4395 = vmatprep.subr.mxu0 0.0
    %4396 = vmatpush1.msra.mxu0 %v87
    %4397 = vmatprep.subr.mxu0 0.0
    %4398 = vmatpush1.msra.mxu0 %v88
    %4399 = vmatprep.subr.mxu0 0.0
    %4400 = vmatpush1.msra.mxu0 %v89
    %4401 = vmatprep.subr.mxu0 0.0
    %4402 = vmatpush1.msra.mxu0 0.0
    %4403 = vmatprep.subr.mxu0 0.0
    %4404 = vmatpush1.msra.mxu0 0.0
    %4405 = vmatprep.subr.mxu0 0.0
    %4406 = vmatpush1.msra.mxu0 0.0
    %4407 = vmatprep.subr.mxu0 0.0
    %4408 = vmatpush1.msra.mxu0 0.0
    %4409 = vmatprep.subr.mxu0 0.0
    %4410 = vmatpush1.msra.mxu0 0.0
    %4411 = vmatprep.subr.mxu0 0.0
    %4412 = vmatpush1.msra.mxu0 0.0
    %4413 = vmatprep.subr.mxu0 0.0
    %4414 = vmatpush1.msra.mxu0 0.0
    %4415 = vmatprep.subr.mxu0 0.0
    %4416 = vmatpush1.msra.mxu0 0.0
    %4417 = vmatprep.subr.mxu0 0.0
    %4418 = vmatpush1.msra.mxu0 0.0
    %4419 = vmatprep.subr.mxu0 0.0
    %4420 = vmatpush1.msra.mxu0 0.0
    %4421 = vmatprep.subr.mxu0 0.0
    %4422 = vmatpush1.msra.mxu0 0.0
    %4423 = vmatprep.subr.mxu0 0.0
    %4424 = vmatpush1.msra.mxu0 0.0
    %4425 = vmatprep.subr.mxu0 0.0
    %4426 = vmatpush1.msra.mxu0 0.0
    %4427 = vmatprep.subr.mxu0 0.0
    %4428 = vmatpush1.msra.mxu0 0.0
    %4429 = vmatprep.subr.mxu0 0.0
    %4430 = vmatpush1.msra.mxu0 0.0
    %4431 = vmatprep.subr.mxu0 0.0
    %4432 = vmatpush1.msra.mxu0 0.0
    %4433 = vmatprep.subr.mxu0 0.0
    %4434 = vmatpush1.msra.mxu0 0.0
    %4435 = vmatprep.subr.mxu0 0.0
    %4436 = vmatpush1.msra.mxu0 0.0
    %4437 = vmatprep.subr.mxu0 0.0
    %4438 = vmatpush1.msra.mxu0 0.0
    %4439 = vmatprep.subr.mxu0 0.0
    %4440 = vmatpush1.msra.mxu0 0.0
    %4441 = vmatprep.subr.mxu0 0.0
    %4442 = vmatpush1.msra.mxu0 0.0
    %4443 = vmatprep.subr.mxu0 0.0
    %4444 = vmatpush1.msra.mxu0 0.0
    %4445 = vmatprep.subr.mxu0 0.0
    %4446 = vmatpush1.msra.mxu0 0.0
    %4447 = vmatprep.subr.mxu0 0.0
    %4448 = vmatpush1.msra.mxu0 0.0
    %4449 = vmatprep.subr.mxu0 0.0
    %4450 = vmatpush1.msra.mxu0 0.0
    %4451 = vmatprep.subr.mxu0 0.0
    %4452 = vmatpush1.msra.mxu0 0.0
    %4453 = vmatprep.subr.mxu0 0.0
    %4454 = vmatpush1.msra.mxu0 0.0
    %4455 = vmatprep.subr.mxu0 0.0
    %4456 = vmatpush1.msra.mxu0 0.0
    %4457 = vmatprep.mubr.f32.mxu0 0.0
    %4458 = vmatmul.mubr.f32.gmra.mrb[0].mxu0 %v4391
    %v4459 = vpop.f32.mrb[0].mxu0
    %v4460 = vadd.f32 0.0, %v4459
    %v4461 = vpop.f32.mrb[0].mxu0
    %4462 = vdwg.mxu0
    %4464 = vrot.lane.b32.xlu0 %v4387, 32
    %v4465 = vpop.permute.xlu0 %4464
    %v4466 = vsel %vm110, %v4465, 0
    %4468 = vmatprep.subr.mxu0 0.0
    %4469 = vmatpush1.msra.mxu0 %v82
    %4470 = vmatprep.subr.mxu0 0.0
    %4471 = vmatpush1.msra.mxu0 %v83
    %4472 = vmatprep.subr.mxu0 0.0
    %4473 = vmatpush1.msra.mxu0 %v84
    %4474 = vmatprep.subr.mxu0 0.0
    %4475 = vmatpush1.msra.mxu0 %v85
    %4476 = vmatprep.subr.mxu0 0.0
    %4477 = vmatpush1.msra.mxu0 0.0
    %4478 = vmatprep.subr.mxu0 0.0
    %4479 = vmatpush1.msra.mxu0 0.0
    %4480 = vmatprep.subr.mxu0 0.0
    %4481 = vmatpush1.msra.mxu0 0.0
    %4482 = vmatprep.subr.mxu0 0.0
    %4483 = vmatpush1.msra.mxu0 0.0
    %4484 = vmatprep.subr.mxu0 0.0
    %4485 = vmatpush1.msra.mxu0 0.0
    %4486 = vmatprep.subr.mxu0 0.0
    %4487 = vmatpush1.msra.mxu0 0.0
    %4488 = vmatprep.subr.mxu0 0.0
    %4489 = vmatpush1.msra.mxu0 0.0
    %4490 = vmatprep.subr.mxu0 0.0
    %4491 = vmatpush1.msra.mxu0 0.0
    %4492 = vmatprep.subr.mxu0 0.0
    %4493 = vmatpush1.msra.mxu0 0.0
    %4494 = vmatprep.subr.mxu0 0.0
    %4495 = vmatpush1.msra.mxu0 0.0
    %4496 = vmatprep.subr.mxu0 0.0
    %4497 = vmatpush1.msra.mxu0 0.0
    %4498 = vmatprep.subr.mxu0 0.0
    %4499 = vmatpush1.msra.mxu0 0.0
    %4500 = vmatprep.subr.mxu0 0.0
    %4501 = vmatpush1.msra.mxu0 0.0
    %4502 = vmatprep.subr.mxu0 0.0
    %4503 = vmatpush1.msra.mxu0 0.0
    %4504 = vmatprep.subr.mxu0 0.0
    %4505 = vmatpush1.msra.mxu0 0.0
    %4506 = vmatprep.subr.mxu0 0.0
    %4507 = vmatpush1.msra.mxu0 0.0
    %4508 = vmatprep.subr.mxu0 0.0
    %4509 = vmatpush1.msra.mxu0 0.0
    %4510 = vmatprep.subr.mxu0 0.0
    %4511 = vmatpush1.msra.mxu0 0.0
    %4512 = vmatprep.subr.mxu0 0.0
    %4513 = vmatpush1.msra.mxu0 0.0
    %4514 = vmatprep.subr.mxu0 0.0
    %4515 = vmatpush1.msra.mxu0 0.0
    %4516 = vmatprep.subr.mxu0 0.0
    %4517 = vmatpush1.msra.mxu0 0.0
    %4518 = vmatprep.subr.mxu0 0.0
    %4519 = vmatpush1.msra.mxu0 0.0
    %4520 = vmatprep.subr.mxu0 0.0
    %4521 = vmatpush1.msra.mxu0 0.0
    %4522 = vmatprep.subr.mxu0 0.0
    %4523 = vmatpush1.msra.mxu0 0.0
    %4524 = vmatprep.subr.mxu0 0.0
    %4525 = vmatpush1.msra.mxu0 0.0
    %4526 = vmatprep.subr.mxu0 0.0
    %4527 = vmatpush1.msra.mxu0 0.0
    %4528 = vmatprep.subr.mxu0 0.0
    %4529 = vmatpush1.msra.mxu0 0.0
    %4530 = vmatprep.subr.mxu0 0.0
    %4531 = vmatpush1.msra.mxu0 0.0
    %4532 = vmatprep.mubr.f32.mxu0 0.0
    %4533 = vmatmul.mubr.f32.gmra.mrb[0].mxu0 %v4466
    %v4534 = vpop.f32.mrb[0].mxu0
    %v4535 = vadd.f32 %v4460, %v4534
    %v4536 = vpop.f32.mrb[0].mxu0
    %4537 = vdwg.mxu0
    %v4538 = vadd.f32 %v4535, %v366
    %v4539 = vtanh.pop %v4538
    %v4540 = vxor.u32 %v4538, 2147483648
    %v4541 = vmul.f32 %v4540, 1.442695
    %v4542 = vpow.pop %v4541
    %v4543 = vadd.f32 %v4542, 1.0
    %v4544 = vrcp.pop %v4543
    %v4545 = vmul.f32 1.0, %v4544
    %v4546 = vsel %vm97, %v4539, %v4545
    %v4547 = vmul.f32 %v4546, %v4279
    %4549 = vrot.lane.b32.xlu0 %v4546, 64
    %v4550 = vpop.permute.xlu0 %4549
    %v4552 = vmul.f32 %v4546, %v4550
    %4554 = vrot.lane.b32.xlu0 %v4552, 32
    %v4555 = vpop.permute.xlu0 %4554
    %v4557 = vadd.f32 %v4547, %v4555
    %v4558 = vtanh.pop %v4557
    %4560 = vrot.lane.b32.xlu0 %v4558, 64
    %v4561 = vpop.permute.xlu0 %4560
    %v4563 = vmul.f32 %v4546, %v4561
    %v4565 = vlaneseq
    %v4566 = vshrl.u32 %v4565, 7
    %v4567 = vsub.s32 0, %v4566
    %v4568 = vrot.slane %v91, %v4567
    %4569 = vrot.lane.b32.xlu0 %v4568, 96
    %v4570 = vpop.permute.xlu0 %4569
    %v4572 = vmul.f32 %v4563, %v4570
    %4574 = vrot.lane.b32.xlu0 %v4572, 32
    %v4575 = vpop.permute.xlu0 %4574
    %vm4577 = vcmask 254976
    %v4578 = vsel %vm4577, %v4575, 0.0
    %4579 = vadd.xlane.f32.xlu0 %v4578
    %v4580 = vpop.xlane.xlu0 %4579
    %v4582 = vlaneseq
    %v4583 = vshrl.u32 %v4582, 7
    %v4584 = vsub.s32 0, %v4583
    %v4585 = vrot.slane %v92, %v4584
    %v4587 = vadd.f32 %v4580, %v4585
    %v4588 = vxor.u32 %v4587, 2147483648
    %v4589 = vmul.f32 %v4588, 1.442695
    %v4590 = vpow.pop %v4589
    %v4591 = vadd.f32 %v4590, 1.0
    %v4592 = vrcp.pop %v4591
    %v4593 = vmul.f32 1.0, %v4592
    %vm4594 = vcmask 1024
    %4595 = vst.msk [vmem:[%s9] sm:$0x3] %vm4594, %v4593
    // Predicated region
    $region50: #{tpu_custom_call.1} parent=1 // pred_check
      _
    $region51: #{tpu_custom_call.1} parent=1 // pred_check_branch
      %4597 = sbr.rel (0) target = $region53
    $region52: #{tpu_custom_call.1} parent=1 // pred_region
      _
    $region53: #{tpu_custom_call.1} parent=1 // pred_fallthru
      _
    // Predicated region
    $region54: #{tpu_custom_call.1} parent=1 // pred_check
      _
    $region55: #{tpu_custom_call.1} parent=1 // pred_check_branch
      %4599 = sbr.rel (0) target = $region57
    $region56: #{tpu_custom_call.1} parent=1 // pred_region
      _
    $region57: #{tpu_custom_call.1} parent=1 // pred_fallthru
      _
    %4600 = vsyncpa [#allocation4], 1
    %4601 = vsyncpa [#allocation6], 1

</llo_original>
